<compile_context>
chip_gen: v6e
topology: v6e:2x2x1
jax: 0.10.0
libtpu: 0.0.40
codegen_flags: <defaults>
</compile_context>

<pallas_src>
import numpy as np
import jax
import jax.numpy as jnp
from jax import lax
from jax.experimental import pallas as pl
from jax.experimental.pallas import tpu as pltpu

# ---------------- configuration (synthetic, deterministic) ----------------
CONF = dict(
    num_labels=32,          # L
    rnn_hidden_size=32,     # H
    num_label_list=[8, 8, 8, 8],
    lbp_alpha=0.6,
    lbp_beta=0.3,
    lbp_iters=2,
    use_which="pred",
    use_lbp=True,
    rnn_dropout=0.0,
)
L = CONF["num_labels"]
H = CONF["rnn_hidden_size"]
SUM_LABELS = int(sum(CONF["num_label_list"]))
NUM_SLOTS = len(CONF["num_label_list"])
assert len(set(CONF["num_label_list"])) == 1   # vectorized in-kernel CE assumes equal slot sizes
SLOT_LN = CONF["num_label_list"][0]

# ---------------- packed slab layouts ---------------------------------------
PACK_COLS = 128
assert L + 3 * H == PACK_COLS                   # fused [adj | W_ih] fills 128 lanes
assert 4 * H <= PACK_COLS                       # [b_lin | b_hh] bias row
assert 2 * L + NUM_SLOTS <= PACK_COLS           # input slab [turn | last | targets]
assert H + SUM_LABELS + NUM_SLOTS <= PACK_COLS  # output slab [hidden | logits | loss]
assert SUM_LABELS <= L                          # E^T shares the Wab/Wa row group

# weight-slab rows ([PACK_ROWS, 128] f32)
R_P1 = 0                    # rows 0:L      [adj | W_ih]                  lanes 0:128
R_WAB = L                   # rows L:2L     [Wab | Wa | E^T]              lanes 0:H | H:2H | 2H:2H+S
R_WHH = 2 * L               # rows 2L:2L+H  W_hh                          lanes 0:3H
R_WOUT = 2 * L + H          # rows ..:..+H  [I_H | w_cls | 0]             lanes 0:128
R_BIH = 2 * L + 2 * H       # 1 row         [0_L | b_ih]                  lanes 0:128
R_BLIN = R_BIH + 1          # 1 row         [b_lin | b_hh]                lanes 0:H | H:4H
R_BOUT = R_BLIN + 1         # 1 row         [0_H | b_cls | 0]             lanes 0:128
R_WITHIN = R_BOUT + 1       # 1 row         within-slot index 0..7 tiled  lanes 0:SUM
R_E = R_WITHIN + 1          # rows ..:..+S  E (slot-expansion matrix)     lanes 0:SUM
PACK_ROWS = ((R_E + NUM_SLOTS + 7) // 8) * 8    # 136 rows (sublane multiple)

# input-slab lanes ([B, 128] f32)
X_TURN = 0
X_LAST = L
X_TGT = 2 * L

# output-slab lanes ([B, 128] f32): [hidden 0:H | logits H:H+SUM | loss | 0]
LOSS_OFF = H + SUM_LABELS


def _dot(a, b):
    # Full-f32 MXU path (matches PyTorch fp32 numerics); the MXU is idle on this
    # kernel so the extra passes are free, and it keeps kernel vs. reference tight.
    return jnp.dot(a, b, precision=jax.lax.Precision.HIGHEST,
                   preferred_element_type=jnp.float32)


# ------------------------------- kernel ------------------------------------
def rnndst_kernel(x_ref, wpk_ref, out_ref):
    f32 = jnp.float32
    B = x_ref.shape[0]

    x = x_ref[...]                                    # [B,128] one unmasked load
    turn = x[:, X_TURN:X_TURN + L]                    # turn_belief_pred
    last = x[:, X_LAST:X_LAST + L]                    # last_belief_pred (unscaled; alpha folded into Wab)
    tgt = x[:, X_TGT:X_TGT + NUM_SLOTS]               # slot targets as f32

    # static views into the packed weight slab (all VMEM-resident)
    p1 = wpk_ref[R_P1:R_P1 + L, :]                    # [L,128] = [adj | W_ih]
    adj = wpk_ref[R_P1:R_P1 + L, 0:L]                 # [L,L]
    w_ab = wpk_ref[R_WAB:R_WAB + L, 0:H]              # alpha*(W_lin[:L]+W_lin[L:])
    w_a = wpk_ref[R_WAB:R_WAB + L, H:2 * H]           # beta*W_lin[:L]
    e_t = wpk_ref[R_WAB:R_WAB + SUM_LABELS, 2 * H:2 * H + NUM_SLOTS]   # [SUM,S] segment sum
    w_hh = wpk_ref[R_WHH:R_WHH + H, 0:3 * H]          # [H,3H]
    w_out = wpk_ref[R_WOUT:R_WOUT + H, :]             # [H,128] = [I_H | w_cls | 0]
    b_fused = wpk_ref[R_BIH:R_BIH + 1, :]             # [1,128] = [0 | b_ih]
    b_lin = wpk_ref[R_BLIN:R_BLIN + 1, 0:H]           # [1,H]
    b_hh = wpk_ref[R_BLIN:R_BLIN + 1, H:4 * H]        # [1,3H]
    b_out = wpk_ref[R_BOUT:R_BOUT + 1, :]             # [1,128] = [0 | b_cls | 0]
    within = wpk_ref[R_WITHIN:R_WITHIN + 1, 0:SUM_LABELS]   # [1,SUM] 0..7 tiled
    e_mat = wpk_ref[R_E:R_E + NUM_SLOTS, 0:SUM_LABELS]      # [S,SUM] slot expansion

    # F.normalize(v, p=2, dim=1) on [1,B,L] -> L2 normalize over the BATCH axis.
    # rsqrt(max(ss, 1e-24)) == v / max(||v||, 1e-12)  (sqrt is monotone).
    def l2norm_over_batch(v):
        ss = jnp.sum(v * v, axis=0, keepdims=True)
        return v * lax.rsqrt(jnp.maximum(ss, 1e-24))

    # --- fused MXU push: turn @ [adj | W_ih] + [0 | b_ih] --------------------
    fused = _dot(turn, p1) + b_fused                  # [B,128]
    first = l2norm_over_batch(fused[:, 0:L])          # turn @ adj, normalized
    gi = fused[:, L:]                                 # GRU input gates (r,z,n)

    # --- label belief propagation (use_lbp, lbp_iters == 2) ------------------
    second = l2norm_over_batch(_dot(first, adj))
    prop = turn + first + second

    # h0 = cat([alpha*last + beta*prop, alpha*last]) @ W_lin + b_lin, concat
    # eliminated algebraically (alpha/beta pre-folded into Wab/Wa host-side).
    h0 = _dot(last, w_ab) + _dot(prop, w_a) + b_lin   # [B,H]

    # --- single-step GRU (seq_len=1), PyTorch gate order (r,z,n) -------------
    gh = _dot(h0, w_hh) + b_hh                        # [B,3H]
    rz = jax.nn.sigmoid(gi[:, 0:2 * H] + gh[:, 0:2 * H])   # fused r/z EUP push
    r = rz[:, 0:H]
    z = rz[:, H:2 * H]
    n = jnp.tanh(gi[:, 2 * H:3 * H] + r * gh[:, 2 * H:3 * H])
    h_new = (1.0 - z) * n + z * h0                    # [B,H]

    # final fused push: [hidden | logits | 0] straight off the MXU into the slab
    slab = _dot(h_new, w_out) + b_out                 # [B,128]
    out_ref[...] = slab                               # one unmasked full-width store

    # --- in-kernel per-slot cross-entropy (replaces post-kernel XLA glue) ----
    logits = slab[:, H:H + SUM_LABELS]                # [B,SUM]
    tgt_exp = _dot(tgt, e_mat)                        # [B,SUM]: target id per lane
    onehot = (jnp.abs(within - tgt_exp) < 0.5).astype(f32)
    m = jnp.max(logits, axis=-1, keepdims=True)       # global row max (stable lse)
    sum_e = _dot(jnp.exp(logits - m), e_t)            # [B,S] per-slot sum of exp
    lse = m + jnp.log(sum_e)                          # [B,S] per-slot logsumexp
    picked = _dot(logits * onehot, e_t)               # [B,S] gathered target logit
    loss = jnp.mean(lse - picked, axis=0, keepdims=True)     # [1,S] mean over batch
    out_ref[:, LOSS_OFF:LOSS_OFF + NUM_SLOTS] = jnp.broadcast_to(loss, (B, NUM_SLOTS))


# --------------------------- host-side packing ------------------------------
def pack_params(adj, params):
    """One-time host-side packing of all parameters into one lane-dense slab."""
    alpha = CONF["lbp_alpha"]
    beta = CONF["lbp_beta"]
    w_lin = params["w_lin"]                      # [2L, H]
    wl_a, wl_b = w_lin[:L], w_lin[L:]

    lane = np.arange(SUM_LABELS)
    e_np = (lane[None, :] // SLOT_LN == np.arange(NUM_SLOTS)[:, None]).astype(np.float32)
    within_np = (lane % SLOT_LN).astype(np.float32)

    W = jnp.zeros((PACK_ROWS, PACK_COLS), jnp.float32)
    W = W.at[R_P1:R_P1 + L, 0:L].set(adj)
    W = W.at[R_P1:R_P1 + L, L:L + 3 * H].set(params["w_ih"])
    W = W.at[R_WAB:R_WAB + L, 0:H].set(alpha * (wl_a + wl_b))          # Wab
    W = W.at[R_WAB:R_WAB + L, H:2 * H].set(beta * wl_a)                # Wa
    W = W.at[R_WAB:R_WAB + SUM_LABELS, 2 * H:2 * H + NUM_SLOTS].set(jnp.asarray(e_np.T))
    W = W.at[R_WHH:R_WHH + H, 0:3 * H].set(params["w_hh"])
    W = W.at[R_WOUT:R_WOUT + H, 0:H].set(jnp.eye(H, dtype=jnp.float32))
    W = W.at[R_WOUT:R_WOUT + H, H:H + SUM_LABELS].set(params["w_cls"])
    W = W.at[R_BIH, L:L + 3 * H].set(params["b_ih"][0])                # pre-shifted b_ih
    W = W.at[R_BLIN, 0:H].set(params["b_lin"][0])
    W = W.at[R_BLIN, H:4 * H].set(params["b_hh"][0])
    W = W.at[R_BOUT, H:H + SUM_LABELS].set(params["b_cls"][0])
    W = W.at[R_WITHIN, 0:SUM_LABELS].set(jnp.asarray(within_np))
    W = W.at[R_E:R_E + NUM_SLOTS, 0:SUM_LABELS].set(jnp.asarray(e_np))
    return W


# ------------------------------ forward -------------------------------------
@jax.jit
def _rnndst_core(turn_belief_pred, last_belief_pred, current_belief, w_pack):
    B = turn_belief_pred.shape[0]
    # lane-dense input slab: [turn | last | targets(f32) | 0] -> single input DMA
    pad = jnp.zeros((B, PACK_COLS - 2 * L - NUM_SLOTS), jnp.float32)
    x_pack = jnp.concatenate(
        [turn_belief_pred.astype(jnp.float32),
         last_belief_pred.astype(jnp.float32),
         current_belief.astype(jnp.float32),
         pad], axis=-1)

    flops = 2 * B * (L * PACK_COLS + L * L + 2 * L * H + 3 * H * H
                     + H * PACK_COLS + NUM_SLOTS * SUM_LABELS
                     + 2 * SUM_LABELS * NUM_SLOTS)
    transcendentals = 2 * L + B * (3 * H + SUM_LABELS + NUM_SLOTS)
    bytes_accessed = 4 * PACK_COLS * (2 * B + PACK_ROWS)

    out = pl.pallas_call(
        rnndst_kernel,
        out_shape=jax.ShapeDtypeStruct((B, PACK_COLS), jnp.float32),
        in_specs=[pl.BlockSpec(memory_space=pltpu.MemorySpace.VMEM),
                  pl.BlockSpec(memory_space=pltpu.MemorySpace.VMEM)],
        out_specs=pl.BlockSpec(memory_space=pltpu.MemorySpace.VMEM),
        cost_estimate=pl.CostEstimate(flops=flops,
                                      transcendentals=transcendentals,
                                      bytes_accessed=bytes_accessed),
    )(x_pack, w_pack)

    hidden = out[:, 0:H]
    logits = out[:, H:H + SUM_LABELS]
    loss_vec = out[0, LOSS_OFF:LOSS_OFF + NUM_SLOTS]
    return loss_vec, hidden, logits


def rnndst_forward(turn_belief_pred, last_belief_pred, w_pack, current_belief):
    loss_vec, hidden, logits = _rnndst_core(
        turn_belief_pred, last_belief_pred, current_belief, w_pack
    )
    # presentational split to mirror the torch module's (losses, outputs) lists
    losses = [loss_vec[i] for i in range(NUM_SLOTS)]
    outputs, start = [], 0
    for ln in CONF["num_label_list"]:
        outputs.append(logits[:, start:start + ln])
        start += ln
    return losses, outputs, hidden, logits


# ----------------------- pure-JAX reference (for check) ---------------------
def rnndst_reference(turn, last_pred, adj, params):
    alpha, beta = CONF["lbp_alpha"], CONF["lbp_beta"]
    last = alpha * last_pred

    def norm_b(x):
        return x / jnp.maximum(jnp.linalg.norm(x, axis=0, keepdims=True), 1e-12)

    first = norm_b(_dot(turn, adj))
    second = norm_b(_dot(first, adj))
    prop = turn + first + second
    lb = last + beta * prop
    lb_cat = jnp.concatenate([lb, last], axis=-1)
    h0 = _dot(lb_cat, params["w_lin"]) + params["b_lin"]
    gi = _dot(turn, params["w_ih"]) + params["b_ih"]
    gh = _dot(h0, params["w_hh"]) + params["b_hh"]
    r = jax.nn.sigmoid(gi[:, :H] + gh[:, :H])
    z = jax.nn.sigmoid(gi[:, H:2 * H] + gh[:, H:2 * H])
    n = jnp.tanh(gi[:, 2 * H:] + r * gh[:, 2 * H:])
    h_new = (1.0 - z) * n + z * h0
    logits = _dot(h_new, params["w_cls"]) + params["b_cls"]
    return h_new, logits


# -------------------------------- main --------------------------------------
if __name__ == "__main__":
    B = 8
    key = jax.random.PRNGKey(0)
    keys = jax.random.split(key, 16)

    # deterministic "beliefs" and adjacency
    turn_belief_pred = jax.random.uniform(keys[0], (B, L), jnp.float32)
    last_belief_pred = jax.random.uniform(keys[1], (B, L), jnp.float32)
    adj = (jax.random.uniform(keys[2], (L, L), jnp.float32) < 0.2).astype(jnp.float32)
    current_belief = jnp.stack(
        [jax.random.randint(keys[3 + i], (B,), 0, ln)
         for i, ln in enumerate(CONF["num_label_list"])],
        axis=1,
    )  # [B, num_slots] int32 targets

    # deterministic parameters (shapes from module __init__; uniform +/- 1/sqrt(fan_in))
    def uinit(k, shape, fan_in):
        bound = 1.0 / np.sqrt(fan_in)
        return jax.random.uniform(k, shape, jnp.float32, -bound, bound)

    pk = jax.random.split(keys[10], 8)
    params = dict(
        w_lin=uinit(pk[0], (2 * L, H), 2 * L),        # input_hidden_w.weight.T
        b_lin=uinit(pk[1], (1, H), 2 * L),
        w_ih=uinit(pk[2], (L, 3 * H), H),             # GRU weight_ih_l0.T (gates r,z,n)
        w_hh=uinit(pk[3], (H, 3 * H), H),             # GRU weight_hh_l0.T
        b_ih=uinit(pk[4], (1, 3 * H), H),
        b_hh=uinit(pk[5], (1, 3 * H), H),
        w_cls=uinit(pk[6], (H, SUM_LABELS), H),       # stacked slot classifier weights
        b_cls=uinit(pk[7], (1, SUM_LABELS), H),
    )

    # one-time host-side packing (outside the hot path)
    w_pack = pack_params(adj, params)

    losses, outputs, hidden_state, logits = rnndst_forward(
        turn_belief_pred, last_belief_pred, w_pack, current_belief
    )
    jax.block_until_ready(logits)
    for l in losses:
        jax.block_until_ready(l)

    # correctness check vs. pure-JAX reference (hidden, logits, per-slot CE)
    h_ref, logits_ref = rnndst_reference(turn_belief_pred, last_belief_pred, adj, params)
    assert np.allclose(np.asarray(hidden_state), np.asarray(h_ref), atol=1e-3, rtol=1e-3)
    assert np.allclose(np.asarray(logits), np.asarray(logits_ref), atol=1e-3, rtol=1e-3)

    start = 0
    for i, ln in enumerate(CONF["num_label_list"]):
        lg = logits_ref[:, start:start + ln]
        start += ln
        tgt = current_belief[:, i]
        lse = jax.scipy.special.logsumexp(lg, axis=-1)
        picked = jnp.take_along_axis(lg, tgt[:, None], axis=-1)[:, 0]
        loss_ref = float(jnp.mean(lse - picked))
        assert np.isfinite(float(losses[i]))
        assert np.allclose(float(losses[i]), loss_ref, atol=1e-3, rtol=1e-3)
        assert np.allclose(np.asarray(outputs[i]), np.asarray(lg), atol=1e-3, rtol=1e-3)

    print("KERNEL_OK")
</pallas_src>

<mosaic_0001>
module attributes {stable_mosaic.version = 11 : i64} {
  func.func @rnndst_kernel(%arg0: memref<8x128xf32, #tpu.memory_space<vmem>>, %arg1: memref<136x128xf32, #tpu.memory_space<vmem>>, %arg2: memref<8x128xf32, #tpu.memory_space<vmem>>) attributes {dimension_semantics = [], scalar_prefetch = 0 : i64, scratch_operands = 0 : i64, tpu.core_type = #tpu.core_type<tc>} {
    %c0 = arith.constant 0 : index
    %c0_0 = arith.constant 0 : index
    %0 = vector.load %arg0[%c0, %c0_0] : memref<8x128xf32, #tpu.memory_space<vmem>>, vector<8x128xf32>
    %1 = vector.extract_strided_slice %0 {offsets = [0, 0], sizes = [8, 32], strides = [1, 1]} : vector<8x128xf32> to vector<8x32xf32>
    %2 = vector.extract_strided_slice %0 {offsets = [0, 32], sizes = [8, 32], strides = [1, 1]} : vector<8x128xf32> to vector<8x32xf32>
    %3 = vector.extract_strided_slice %0 {offsets = [0, 64], sizes = [8, 4], strides = [1, 1]} : vector<8x128xf32> to vector<8x4xf32>
    %c0_1 = arith.constant 0 : index
    %c0_2 = arith.constant 0 : index
    %4 = vector.load %arg1[%c0_1, %c0_2] : memref<136x128xf32, #tpu.memory_space<vmem>>, vector<32x128xf32>
    %c0_3 = arith.constant 0 : index
    %c0_4 = arith.constant 0 : index
    %5 = vector.load %arg1[%c0_3, %c0_4] : memref<136x128xf32, #tpu.memory_space<vmem>>, vector<32x32xf32>
    %c32 = arith.constant 32 : index
    %c0_5 = arith.constant 0 : index
    %6 = vector.load %arg1[%c32, %c0_5] : memref<136x128xf32, #tpu.memory_space<vmem>>, vector<32x32xf32>
    %c32_6 = arith.constant 32 : index
    %c32_7 = arith.constant 32 : index
    %7 = vector.load %arg1[%c32_6, %c32_7] : memref<136x128xf32, #tpu.memory_space<vmem>>, vector<32x32xf32>
    %c32_8 = arith.constant 32 : index
    %c64 = arith.constant 64 : index
    %8 = vector.load %arg1[%c32_8, %c64] : memref<136x128xf32, #tpu.memory_space<vmem>>, vector<32x4xf32>
    %c64_9 = arith.constant 64 : index
    %c0_10 = arith.constant 0 : index
    %9 = vector.load %arg1[%c64_9, %c0_10] : memref<136x128xf32, #tpu.memory_space<vmem>>, vector<32x96xf32>
    %c96 = arith.constant 96 : index
    %c0_11 = arith.constant 0 : index
    %10 = vector.load %arg1[%c96, %c0_11] : memref<136x128xf32, #tpu.memory_space<vmem>>, vector<32x128xf32>
    %c128 = arith.constant 128 : index
    %c0_12 = arith.constant 0 : index
    %11 = vector.load %arg1[%c128, %c0_12] : memref<136x128xf32, #tpu.memory_space<vmem>>, vector<1x128xf32>
    %c129 = arith.constant 129 : index
    %c0_13 = arith.constant 0 : index
    %12 = vector.load %arg1[%c129, %c0_13] : memref<136x128xf32, #tpu.memory_space<vmem>>, vector<1x32xf32>
    %c129_14 = arith.constant 129 : index
    %c32_15 = arith.constant 32 : index
    %13 = vector.load %arg1[%c129_14, %c32_15] : memref<136x128xf32, #tpu.memory_space<vmem>>, vector<1x96xf32>
    %c130 = arith.constant 130 : index
    %c0_16 = arith.constant 0 : index
    %14 = vector.load %arg1[%c130, %c0_16] : memref<136x128xf32, #tpu.memory_space<vmem>>, vector<1x128xf32>
    %c131 = arith.constant 131 : index
    %c0_17 = arith.constant 0 : index
    %15 = vector.load %arg1[%c131, %c0_17] : memref<136x128xf32, #tpu.memory_space<vmem>>, vector<1x32xf32>
    %c132 = arith.constant 132 : index
    %c0_18 = arith.constant 0 : index
    %16 = vector.load %arg1[%c132, %c0_18] : memref<136x128xf32, #tpu.memory_space<vmem>>, vector<4x32xf32>
    %cst = arith.constant dense<0.000000e+00> : vector<8x128xf32>
    %17 = tpu.matmul %1, %4, %cst {dimension_numbers = #tpu.dot_dimension_numbers<[1], [0], [0], [1], [0, 0, 1, 1], [], []>, precision = #tpu.contract_precision<fp32>} : vector<8x32xf32>, vector<32x128xf32>, vector<8x128xf32> -> vector<8x128xf32>
    %18 = vector.broadcast %11 : vector<1x128xf32> to vector<8x128xf32>
    %19 = arith.addf %17, %18 : vector<8x128xf32>
    %20 = vector.extract_strided_slice %19 {offsets = [0, 0], sizes = [8, 32], strides = [1, 1]} : vector<8x128xf32> to vector<8x32xf32>
    %21 = arith.mulf %20, %20 : vector<8x32xf32>
    %cst_19 = arith.constant dense<0.000000e+00> : vector<32xf32>
    %22 = vector.multi_reduction <add>, %21, %cst_19 [0] : vector<8x32xf32> to vector<32xf32>
    %23 = vector.shape_cast %22 : vector<32xf32> to vector<1x32xf32>
    %cst_20 = arith.constant 1.000000e-24 : f32
    %24 = vector.broadcast %cst_20 : f32 to vector<1x32xf32>
    %25 = arith.maximumf %23, %24 : vector<1x32xf32>
    %26 = math.rsqrt %25 : vector<1x32xf32>
    %27 = vector.broadcast %26 : vector<1x32xf32> to vector<8x32xf32>
    %28 = arith.mulf %20, %27 : vector<8x32xf32>
    %29 = vector.extract_strided_slice %19 {offsets = [0, 32], sizes = [8, 96], strides = [1, 1]} : vector<8x128xf32> to vector<8x96xf32>
    %cst_21 = arith.constant dense<0.000000e+00> : vector<8x32xf32>
    %30 = tpu.matmul %28, %5, %cst_21 {dimension_numbers = #tpu.dot_dimension_numbers<[1], [0], [0], [1], [0, 0, 1, 1], [], []>, precision = #tpu.contract_precision<fp32>} : vector<8x32xf32>, vector<32x32xf32>, vector<8x32xf32> -> vector<8x32xf32>
    %31 = arith.mulf %30, %30 : vector<8x32xf32>
    %cst_22 = arith.constant dense<0.000000e+00> : vector<32xf32>
    %32 = vector.multi_reduction <add>, %31, %cst_22 [0] : vector<8x32xf32> to vector<32xf32>
    %33 = vector.shape_cast %32 : vector<32xf32> to vector<1x32xf32>
    %cst_23 = arith.constant 1.000000e-24 : f32
    %34 = vector.broadcast %cst_23 : f32 to vector<1x32xf32>
    %35 = arith.maximumf %33, %34 : vector<1x32xf32>
    %36 = math.rsqrt %35 : vector<1x32xf32>
    %37 = vector.broadcast %36 : vector<1x32xf32> to vector<8x32xf32>
    %38 = arith.mulf %30, %37 : vector<8x32xf32>
    %39 = arith.addf %1, %28 : vector<8x32xf32>
    %40 = arith.addf %39, %38 : vector<8x32xf32>
    %cst_24 = arith.constant dense<0.000000e+00> : vector<8x32xf32>
    %41 = tpu.matmul %2, %6, %cst_24 {dimension_numbers = #tpu.dot_dimension_numbers<[1], [0], [0], [1], [0, 0, 1, 1], [], []>, precision = #tpu.contract_precision<fp32>} : vector<8x32xf32>, vector<32x32xf32>, vector<8x32xf32> -> vector<8x32xf32>
    %cst_25 = arith.constant dense<0.000000e+00> : vector<8x32xf32>
    %42 = tpu.matmul %40, %7, %cst_25 {dimension_numbers = #tpu.dot_dimension_numbers<[1], [0], [0], [1], [0, 0, 1, 1], [], []>, precision = #tpu.contract_precision<fp32>} : vector<8x32xf32>, vector<32x32xf32>, vector<8x32xf32> -> vector<8x32xf32>
    %43 = arith.addf %41, %42 : vector<8x32xf32>
    %44 = vector.broadcast %12 : vector<1x32xf32> to vector<8x32xf32>
    %45 = arith.addf %43, %44 : vector<8x32xf32>
    %cst_26 = arith.constant dense<0.000000e+00> : vector<8x96xf32>
    %46 = tpu.matmul %45, %9, %cst_26 {dimension_numbers = #tpu.dot_dimension_numbers<[1], [0], [0], [1], [0, 0, 1, 1], [], []>, precision = #tpu.contract_precision<fp32>} : vector<8x32xf32>, vector<32x96xf32>, vector<8x96xf32> -> vector<8x96xf32>
    %47 = vector.broadcast %13 : vector<1x96xf32> to vector<8x96xf32>
    %48 = arith.addf %46, %47 : vector<8x96xf32>
    %49 = vector.extract_strided_slice %29 {offsets = [0, 0], sizes = [8, 64], strides = [1, 1]} : vector<8x96xf32> to vector<8x64xf32>
    %50 = vector.extract_strided_slice %48 {offsets = [0, 0], sizes = [8, 64], strides = [1, 1]} : vector<8x96xf32> to vector<8x64xf32>
    %51 = arith.addf %49, %50 : vector<8x64xf32>
    %52 = arith.negf %51 : vector<8x64xf32>
    %53 = math.exp %52 : vector<8x64xf32>
    %cst_27 = arith.constant 1.000000e+00 : f32
    %54 = vector.broadcast %cst_27 : f32 to vector<8x64xf32>
    %55 = arith.addf %54, %53 : vector<8x64xf32>
    %56 = arith.divf %54, %55 : vector<8x64xf32>
    %57 = vector.extract_strided_slice %56 {offsets = [0, 0], sizes = [8, 32], strides = [1, 1]} : vector<8x64xf32> to vector<8x32xf32>
    %58 = vector.extract_strided_slice %56 {offsets = [0, 32], sizes = [8, 32], strides = [1, 1]} : vector<8x64xf32> to vector<8x32xf32>
    %59 = vector.extract_strided_slice %29 {offsets = [0, 64], sizes = [8, 32], strides = [1, 1]} : vector<8x96xf32> to vector<8x32xf32>
    %60 = vector.extract_strided_slice %48 {offsets = [0, 64], sizes = [8, 32], strides = [1, 1]} : vector<8x96xf32> to vector<8x32xf32>
    %61 = arith.mulf %57, %60 : vector<8x32xf32>
    %62 = arith.addf %59, %61 : vector<8x32xf32>
    %63 = math.tanh %62 : vector<8x32xf32>
    %cst_28 = arith.constant 1.000000e+00 : f32
    %64 = vector.broadcast %cst_28 : f32 to vector<8x32xf32>
    %65 = arith.subf %64, %58 : vector<8x32xf32>
    %66 = arith.mulf %65, %63 : vector<8x32xf32>
    %67 = arith.mulf %58, %45 : vector<8x32xf32>
    %68 = arith.addf %66, %67 : vector<8x32xf32>
    %cst_29 = arith.constant dense<0.000000e+00> : vector<8x128xf32>
    %69 = tpu.matmul %68, %10, %cst_29 {dimension_numbers = #tpu.dot_dimension_numbers<[1], [0], [0], [1], [0, 0, 1, 1], [], []>, precision = #tpu.contract_precision<fp32>} : vector<8x32xf32>, vector<32x128xf32>, vector<8x128xf32> -> vector<8x128xf32>
    %70 = vector.broadcast %14 : vector<1x128xf32> to vector<8x128xf32>
    %71 = arith.addf %69, %70 : vector<8x128xf32>
    %c0_30 = arith.constant 0 : index
    %c0_31 = arith.constant 0 : index
    %72 = vector.load %arg2[%c0_30, %c0_31] : memref<8x128xf32, #tpu.memory_space<vmem>>, vector<8x128xf32>
    tpu.vector_store %arg2[%c0_30, %c0_31], %71 {strides = array<i32>} : memref<8x128xf32, #tpu.memory_space<vmem>>, vector<8x128xf32>,
    %73 = vector.extract_strided_slice %71 {offsets = [0, 32], sizes = [8, 32], strides = [1, 1]} : vector<8x128xf32> to vector<8x32xf32>
    %cst_32 = arith.constant dense<0.000000e+00> : vector<8x32xf32>
    %74 = tpu.matmul %3, %16, %cst_32 {dimension_numbers = #tpu.dot_dimension_numbers<[1], [0], [0], [1], [0, 0, 1, 1], [], []>, precision = #tpu.contract_precision<fp32>} : vector<8x4xf32>, vector<4x32xf32>, vector<8x32xf32> -> vector<8x32xf32>
    %75 = vector.broadcast %15 : vector<1x32xf32> to vector<8x32xf32>
    %76 = arith.subf %75, %74 : vector<8x32xf32>
    %77 = math.absf %76 : vector<8x32xf32>
    %cst_33 = arith.constant 5.000000e-01 : f32
    %78 = vector.broadcast %cst_33 : f32 to vector<8x32xf32>
    %79 = arith.cmpf olt, %77, %78 : vector<8x32xf32>
    %80 = arith.extui %79 : vector<8x32xi1> to vector<8x32xi32>
    %81 = arith.sitofp %80 : vector<8x32xi32> to vector<8x32xf32>
    %cst_34 = arith.constant dense<0xFF800000> : vector<8xf32>
    %82 = vector.multi_reduction <maximumf>, %73, %cst_34 [1] : vector<8x32xf32> to vector<8xf32>
    %83 = vector.shape_cast %82 : vector<8xf32> to vector<8x1xf32>
    %84 = vector.broadcast %83 : vector<8x1xf32> to vector<8x32xf32>
    %85 = arith.subf %73, %84 : vector<8x32xf32>
    %86 = math.exp %85 : vector<8x32xf32>
    %cst_35 = arith.constant dense<0.000000e+00> : vector<8x4xf32>
    %87 = tpu.matmul %86, %8, %cst_35 {dimension_numbers = #tpu.dot_dimension_numbers<[1], [0], [0], [1], [0, 0, 1, 1], [], []>, precision = #tpu.contract_precision<fp32>} : vector<8x32xf32>, vector<32x4xf32>, vector<8x4xf32> -> vector<8x4xf32>
    %88 = math.log %87 : vector<8x4xf32>
    %89 = vector.broadcast %83 : vector<8x1xf32> to vector<8x4xf32>
    %90 = arith.addf %89, %88 : vector<8x4xf32>
    %91 = arith.mulf %73, %81 : vector<8x32xf32>
    %cst_36 = arith.constant dense<0.000000e+00> : vector<8x4xf32>
    %92 = tpu.matmul %91, %8, %cst_36 {dimension_numbers = #tpu.dot_dimension_numbers<[1], [0], [0], [1], [0, 0, 1, 1], [], []>, precision = #tpu.contract_precision<fp32>} : vector<8x32xf32>, vector<32x4xf32>, vector<8x4xf32> -> vector<8x4xf32>
    %93 = arith.subf %90, %92 : vector<8x4xf32>
    %cst_37 = arith.constant dense<0.000000e+00> : vector<4xf32>
    %94 = vector.multi_reduction <add>, %93, %cst_37 [0] : vector<8x4xf32> to vector<4xf32>
    %95 = vector.shape_cast %94 : vector<4xf32> to vector<1x4xf32>
    %cst_38 = arith.constant 8.000000e+00 : f32
    %96 = vector.broadcast %cst_38 : f32 to vector<1x4xf32>
    %97 = arith.divf %95, %96 : vector<1x4xf32>
    %98 = vector.shape_cast %97 : vector<1x4xf32> to vector<1x4xf32>
    %99 = vector.broadcast %98 : vector<1x4xf32> to vector<8x4xf32>
    %c0_39 = arith.constant 0 : index
    %c64_40 = arith.constant 64 : index
    %100 = vector.load %arg2[%c0_39, %c64_40] : memref<8x128xf32, #tpu.memory_space<vmem>>, vector<8x4xf32>
    tpu.vector_store %arg2[%c0_39, %c64_40], %99 {strides = array<i32>} : memref<8x128xf32, #tpu.memory_space<vmem>>, vector<8x4xf32>,
    return
  }
}

</mosaic_0001>

<llo_original>
// kernel: _rnndst_core.1
$region0: #{_rnndst_core.1}
  #allocation0 [shape = 'u32[]', space=smem, size = 0x4, offset = 0x4, fixed_abs, tag = 'smem constant byte address 0x4 - core index']
  #allocation1 [shape = 'u32[144,128]{1,0:T(1,128)}', space=vmem, size = 0x12000, scoped, tag = 'internal scratch']
  %s0 = inlined_call_operand.vmem [shape: f32[8,128], index: 0, kind: input, shape index: {}]
  %s1 = inlined_call_operand.hbm [shape: f32[136,128], index: 1, kind: input, shape index: {}]
  %s2 = inlined_call_operand.vmem [shape: f32[8,128], index: 2, kind: output, shape index: {}]
  %s3 = sld [smem:[#allocation0]]
  $region22: #{_rnndst_core.1} parent=0
    _
  %s5 = ssub.s32 1, %s3
  %s6 = scalar_select 0, %s5, %s3
  $region1: #{_rnndst_core.1} parent=0
    #allocation2 [shape = 'u8[69632]{0}', space=vmem, size = 0x11000, scoped, tag = 'input window, operand 1, single buffered']
    #allocation3 [shape = 's32[1]{0}', space=sflag, size = 0x4, scoped, tag = 'scoped memory for _rnndst_core.1']
    %7 = vsyncpa [#allocation3], 0
    // Predicated region
    $region2: #{_rnndst_core.1} parent=1 // pred_check
      _
    $region3: #{_rnndst_core.1} parent=1 // pred_check_branch
      %9 = sbr.rel (0) target = $region5
    $region4: #{_rnndst_core.1} parent=1 // pred_region
      _
    $region5: #{_rnndst_core.1} parent=1 // pred_fallthru
      _
    // Predicated region
    $region6: #{_rnndst_core.1} parent=1 // pred_check
      _
    $region7: #{_rnndst_core.1} parent=1 // pred_check_branch
      %11 = sbr.rel (0) target = $region9
    $region8: #{_rnndst_core.1} parent=1 // pred_region
      %s13 = ssub.s32 2176, 2176
      %14 = vsyncadd [#allocation3], %s13
      %s15 = sshll.u32 [#allocation2], 4
      %s16 = int_to_ptr.vmem [resolvable:$true] %s15
      %21 = dma.hbm_to_vmem [thread:$0]  %s1, 2176, %s16, [#allocation3], 128, 128, 8
    $region9: #{_rnndst_core.1} parent=1 // pred_fallthru
      _
    // Predicated region
    $region10: #{_rnndst_core.1} parent=1 // pred_check
      _
    $region11: #{_rnndst_core.1} parent=1 // pred_check_branch
      %23 = sbr.rel (0) target = $region13
    $region12: #{_rnndst_core.1} parent=1 // pred_region
      %24 = dma.done [#allocation3], 2176
    $region13: #{_rnndst_core.1} parent=1 // pred_fallthru
      _
    %v25 = vld [vmem:[%s0] sm:$0xff]
    %v26 = vld [vmem:[#allocation2] sm:$0xff]
    %v27 = vld [vmem:[#allocation2 + $0x8] sm:$0xff]
    %v28 = vld [vmem:[#allocation2 + $0x10] sm:$0xff]
    %v29 = vld [vmem:[#allocation2 + $0x18] sm:$0xff]
    %v30 = vld [vmem:[#allocation2 + $0x20] sm:$0xff]
    %v31 = vld [vmem:[#allocation2 + $0x28] sm:$0xff]
    %v32 = vld [vmem:[#allocation2 + $0x30] sm:$0xff]
    %v33 = vld [vmem:[#allocation2 + $0x38] sm:$0xff]
    %v34 = vld [vmem:[#allocation2 + $0x40] sm:$0xff]
    %v35 = vld [vmem:[#allocation2 + $0x48] sm:$0xff]
    %v36 = vld [vmem:[#allocation2 + $0x50] sm:$0xff]
    %v37 = vld [vmem:[#allocation2 + $0x58] sm:$0xff]
    %v38 = vld [vmem:[#allocation2 + $0x60] sm:$0xff]
    %v39 = vld [vmem:[#allocation2 + $0x68] sm:$0xff]
    %v40 = vld [vmem:[#allocation2 + $0x70] sm:$0xff]
    %v41 = vld [vmem:[#allocation2 + $0x78] sm:$0xff]
    %v42 = vld [vmem:[#allocation2 + $0x80] sm:$0x1]
    %v43 = vld [vmem:[#allocation2 + $0x81] sm:$0x1]
    %v44 = vld [vmem:[#allocation2 + $0x82] sm:$0x1]
    %v45 = vld [vmem:[#allocation2 + $0x83] sm:$0x1]
    %v46 = vld [vmem:[#allocation2 + $0x84] sm:$0xf]
    %v47 = vlaneseq
    %v48 = vshrl.u32 %v47, 7
    %v49 = vsub.s32 0, %v48
    %v50 = vrot.slane %v42, %v49
    %vm51 = vcmask 261120
    %v53 = vsel %vm51, %v25, 0
    %55 = vmatprep.subr.mxu0 0.0
    %56 = vmatpush1.msra.mxu0 0.0
    %57 = vmatprep.subr.mxu0 0.0
    %58 = vmatpush1.msra.mxu0 0.0
    %59 = vmatprep.subr.mxu0 0.0
    %60 = vmatpush1.msra.mxu0 0.0
    %61 = vmatprep.subr.mxu0 0.0
    %62 = vmatpush1.msra.mxu0 0.0
    %63 = vmatprep.subr.mxu0 0.0
    %64 = vmatpush1.msra.mxu0 0.0
    %65 = vmatprep.subr.mxu0 0.0
    %66 = vmatpush1.msra.mxu0 0.0
    %67 = vmatprep.subr.mxu0 0.0
    %68 = vmatpush1.msra.mxu0 0.0
    %69 = vmatprep.subr.mxu0 0.0
    %70 = vmatpush1.msra.mxu0 0.0
    %71 = vmatprep.subr.mxu0 0.0
    %72 = vmatpush1.msra.mxu0 0.0
    %73 = vmatprep.subr.mxu0 0.0
    %74 = vmatpush1.msra.mxu0 0.0
    %75 = vmatprep.subr.mxu0 0.0
    %76 = vmatpush1.msra.mxu0 0.0
    %77 = vmatprep.subr.mxu0 0.0
    %78 = vmatpush1.msra.mxu0 0.0
    %79 = vmatprep.subr.mxu0 0.0
    %v80 = vand.u32 %v29, 4294901760
    %81 = vmatpush1.msra.mxu0 %v80
    %82 = vmatprep.subr.mxu0 0.0
    %v83 = vand.u32 %v28, 4294901760
    %84 = vmatpush1.msra.mxu0 %v83
    %85 = vmatprep.subr.mxu0 0.0
    %v86 = vand.u32 %v27, 4294901760
    %87 = vmatpush1.msra.mxu0 %v86
    %88 = vmatprep.subr.mxu0 0.0
    %v89 = vand.u32 %v26, 4294901760
    %90 = vmatpush1.msra.mxu0 %v89
    %91 = vmatprep.subr.mxu0 0.0
    %92 = vmatpush2.msra.mxu0 0.0
    %93 = vmatprep.subr.mxu0 0.0
    %94 = vmatpush2.msra.mxu0 0.0
    %95 = vmatprep.subr.mxu0 0.0
    %96 = vmatpush2.msra.mxu0 0.0
    %97 = vmatprep.subr.mxu0 0.0
    %98 = vmatpush2.msra.mxu0 0.0
    %99 = vmatprep.subr.mxu0 0.0
    %100 = vmatpush2.msra.mxu0 0.0
    %101 = vmatprep.subr.mxu0 0.0
    %102 = vmatpush2.msra.mxu0 0.0
    %103 = vmatprep.subr.mxu0 0.0
    %104 = vmatpush2.msra.mxu0 0.0
    %105 = vmatprep.subr.mxu0 0.0
    %106 = vmatpush2.msra.mxu0 0.0
    %107 = vmatprep.subr.mxu0 0.0
    %108 = vmatpush2.msra.mxu0 0.0
    %109 = vmatprep.subr.mxu0 0.0
    %110 = vmatpush2.msra.mxu0 0.0
    %111 = vmatprep.subr.mxu0 0.0
    %112 = vmatpush2.msra.mxu0 0.0
    %113 = vmatprep.subr.mxu0 0.0
    %114 = vmatpush2.msra.mxu0 0.0
    %115 = vmatprep.subr.mxu0 0.0
    %116 = vmatpush2.msra.mxu0 0.0
    %117 = vmatprep.subr.mxu0 0.0
    %118 = vmatpush2.msra.mxu0 0.0
    %119 = vmatprep.subr.mxu0 0.0
    %120 = vmatpush2.msra.mxu0 0.0
    %121 = vmatprep.subr.mxu0 0.0
    %122 = vmatpush2.msra.mxu0 0.0
    %123 = vmatprep.mubr.f32.mxu0 0.0
    %v124 = vand.u32 %v53, 4294901760
    %v125 = vsub.f32 %v53, %v124
    %v126 = vand.u32 %v125, 4294901760
    %v127 = vsub.f32 %v125, %v126
    %v128 = vand.u32 %v127, 4294901760
    %129 = vmatmul.mubr.f32.gmra.mxu0 %v128
    %v130 = vpop.f32.mrf.mxu0
    %v131 = vadd.f32 %v50, %v130
    %v132 = vpop.f32.mrf.mxu0
    %133 = vdwg.mxu0
    %134 = vmatprep.subr.mxu0 0.0
    %135 = vmatpush1.msra.mxu0 0.0
    %136 = vmatprep.subr.mxu0 0.0
    %137 = vmatpush1.msra.mxu0 0.0
    %138 = vmatprep.subr.mxu0 0.0
    %139 = vmatpush1.msra.mxu0 0.0
    %140 = vmatprep.subr.mxu0 0.0
    %141 = vmatpush1.msra.mxu0 0.0
    %142 = vmatprep.subr.mxu0 0.0
    %143 = vmatpush1.msra.mxu0 0.0
    %144 = vmatprep.subr.mxu0 0.0
    %145 = vmatpush1.msra.mxu0 0.0
    %146 = vmatprep.subr.mxu0 0.0
    %147 = vmatpush1.msra.mxu0 0.0
    %148 = vmatprep.subr.mxu0 0.0
    %149 = vmatpush1.msra.mxu0 0.0
    %150 = vmatprep.subr.mxu0 0.0
    %151 = vmatpush1.msra.mxu0 0.0
    %152 = vmatprep.subr.mxu0 0.0
    %153 = vmatpush1.msra.mxu0 0.0
    %154 = vmatprep.subr.mxu0 0.0
    %155 = vmatpush1.msra.mxu0 0.0
    %156 = vmatprep.subr.mxu0 0.0
    %157 = vmatpush1.msra.mxu0 0.0
    %158 = vmatprep.subr.mxu0 0.0
    %v159 = vand.u32 %v29, 4294901760
    %v160 = vsub.f32 %v29, %v159
    %v161 = vand.u32 %v160, 4294901760
    %v162 = vsub.f32 %v160, %v161
    %v163 = vand.u32 %v162, 4294901760
    %164 = vmatpush1.msra.mxu0 %v163
    %165 = vmatprep.subr.mxu0 0.0
    %v166 = vand.u32 %v28, 4294901760
    %v167 = vsub.f32 %v28, %v166
    %v168 = vand.u32 %v167, 4294901760
    %v169 = vsub.f32 %v167, %v168
    %v170 = vand.u32 %v169, 4294901760
    %171 = vmatpush1.msra.mxu0 %v170
    %172 = vmatprep.subr.mxu0 0.0
    %v173 = vand.u32 %v27, 4294901760
    %v174 = vsub.f32 %v27, %v173
    %v175 = vand.u32 %v174, 4294901760
    %v176 = vsub.f32 %v174, %v175
    %v177 = vand.u32 %v176, 4294901760
    %178 = vmatpush1.msra.mxu0 %v177
    %179 = vmatprep.subr.mxu0 0.0
    %v180 = vand.u32 %v26, 4294901760
    %v181 = vsub.f32 %v26, %v180
    %v182 = vand.u32 %v181, 4294901760
    %v183 = vsub.f32 %v181, %v182
    %v184 = vand.u32 %v183, 4294901760
    %185 = vmatpush1.msra.mxu0 %v184
    %186 = vmatprep.subr.mxu0 0.0
    %187 = vmatpush2.msra.mxu0 0.0
    %188 = vmatprep.subr.mxu0 0.0
    %189 = vmatpush2.msra.mxu0 0.0
    %190 = vmatprep.subr.mxu0 0.0
    %191 = vmatpush2.msra.mxu0 0.0
    %192 = vmatprep.subr.mxu0 0.0
    %193 = vmatpush2.msra.mxu0 0.0
    %194 = vmatprep.subr.mxu0 0.0
    %195 = vmatpush2.msra.mxu0 0.0
    %196 = vmatprep.subr.mxu0 0.0
    %197 = vmatpush2.msra.mxu0 0.0
    %198 = vmatprep.subr.mxu0 0.0
    %199 = vmatpush2.msra.mxu0 0.0
    %200 = vmatprep.subr.mxu0 0.0
    %201 = vmatpush2.msra.mxu0 0.0
    %202 = vmatprep.subr.mxu0 0.0
    %203 = vmatpush2.msra.mxu0 0.0
    %204 = vmatprep.subr.mxu0 0.0
    %205 = vmatpush2.msra.mxu0 0.0
    %206 = vmatprep.subr.mxu0 0.0
    %207 = vmatpush2.msra.mxu0 0.0
    %208 = vmatprep.subr.mxu0 0.0
    %209 = vmatpush2.msra.mxu0 0.0
    %210 = vmatprep.subr.mxu0 0.0
    %211 = vmatpush2.msra.mxu0 0.0
    %212 = vmatprep.subr.mxu0 0.0
    %213 = vmatpush2.msra.mxu0 0.0
    %214 = vmatprep.subr.mxu0 0.0
    %215 = vmatpush2.msra.mxu0 0.0
    %216 = vmatprep.subr.mxu0 0.0
    %217 = vmatpush2.msra.mxu0 0.0
    %218 = vmatprep.mubr.f32.mxu0 0.0
    %v219 = vand.u32 %v53, 4294901760
    %220 = vmatmul.mubr.f32.gmra.mxu0 %v219
    %v221 = vpop.f32.mrf.mxu0
    %v222 = vadd.f32 %v131, %v221
    %v223 = vpop.f32.mrf.mxu0
    %224 = vdwg.mxu0
    %225 = vmatprep.subr.mxu0 0.0
    %226 = vmatpush1.msra.mxu0 0.0
    %227 = vmatprep.subr.mxu0 0.0
    %228 = vmatpush1.msra.mxu0 0.0
    %229 = vmatprep.subr.mxu0 0.0
    %230 = vmatpush1.msra.mxu0 0.0
    %231 = vmatprep.subr.mxu0 0.0
    %232 = vmatpush1.msra.mxu0 0.0
    %233 = vmatprep.subr.mxu0 0.0
    %234 = vmatpush1.msra.mxu0 0.0
    %235 = vmatprep.subr.mxu0 0.0
    %236 = vmatpush1.msra.mxu0 0.0
    %237 = vmatprep.subr.mxu0 0.0
    %238 = vmatpush1.msra.mxu0 0.0
    %239 = vmatprep.subr.mxu0 0.0
    %240 = vmatpush1.msra.mxu0 0.0
    %241 = vmatprep.subr.mxu0 0.0
    %242 = vmatpush1.msra.mxu0 0.0
    %243 = vmatprep.subr.mxu0 0.0
    %244 = vmatpush1.msra.mxu0 0.0
    %245 = vmatprep.subr.mxu0 0.0
    %246 = vmatpush1.msra.mxu0 0.0
    %247 = vmatprep.subr.mxu0 0.0
    %248 = vmatpush1.msra.mxu0 0.0
    %249 = vmatprep.subr.mxu0 0.0
    %v250 = vand.u32 %v29, 4294901760
    %v251 = vsub.f32 %v29, %v250
    %252 = vmatpush1.msra.mxu0 %v251
    %253 = vmatprep.subr.mxu0 0.0
    %v254 = vand.u32 %v28, 4294901760
    %v255 = vsub.f32 %v28, %v254
    %256 = vmatpush1.msra.mxu0 %v255
    %257 = vmatprep.subr.mxu0 0.0
    %v258 = vand.u32 %v27, 4294901760
    %v259 = vsub.f32 %v27, %v258
    %260 = vmatpush1.msra.mxu0 %v259
    %261 = vmatprep.subr.mxu0 0.0
    %v262 = vand.u32 %v26, 4294901760
    %v263 = vsub.f32 %v26, %v262
    %264 = vmatpush1.msra.mxu0 %v263
    %265 = vmatprep.subr.mxu0 0.0
    %266 = vmatpush2.msra.mxu0 0.0
    %267 = vmatprep.subr.mxu0 0.0
    %268 = vmatpush2.msra.mxu0 0.0
    %269 = vmatprep.subr.mxu0 0.0
    %270 = vmatpush2.msra.mxu0 0.0
    %271 = vmatprep.subr.mxu0 0.0
    %272 = vmatpush2.msra.mxu0 0.0
    %273 = vmatprep.subr.mxu0 0.0
    %274 = vmatpush2.msra.mxu0 0.0
    %275 = vmatprep.subr.mxu0 0.0
    %276 = vmatpush2.msra.mxu0 0.0
    %277 = vmatprep.subr.mxu0 0.0
    %278 = vmatpush2.msra.mxu0 0.0
    %279 = vmatprep.subr.mxu0 0.0
    %280 = vmatpush2.msra.mxu0 0.0
    %281 = vmatprep.subr.mxu0 0.0
    %282 = vmatpush2.msra.mxu0 0.0
    %283 = vmatprep.subr.mxu0 0.0
    %284 = vmatpush2.msra.mxu0 0.0
    %285 = vmatprep.subr.mxu0 0.0
    %286 = vmatpush2.msra.mxu0 0.0
    %287 = vmatprep.subr.mxu0 0.0
    %288 = vmatpush2.msra.mxu0 0.0
    %289 = vmatprep.subr.mxu0 0.0
    %290 = vmatpush2.msra.mxu0 0.0
    %291 = vmatprep.subr.mxu0 0.0
    %292 = vmatpush2.msra.mxu0 0.0
    %293 = vmatprep.subr.mxu0 0.0
    %294 = vmatpush2.msra.mxu0 0.0
    %295 = vmatprep.subr.mxu0 0.0
    %296 = vmatpush2.msra.mxu0 0.0
    %297 = vmatprep.mubr.f32.mxu0 0.0
    %v298 = vand.u32 %v53, 4294901760
    %v299 = vsub.f32 %v53, %v298
    %300 = vmatmul.mubr.f32.gmra.mxu0 %v299
    %v301 = vpop.f32.mrf.mxu0
    %v302 = vadd.f32 %v222, %v301
    %v303 = vpop.f32.mrf.mxu0
    %304 = vdwg.mxu0
    %305 = vmatprep.subr.mxu0 0.0
    %306 = vmatpush1.msra.mxu0 0.0
    %307 = vmatprep.subr.mxu0 0.0
    %308 = vmatpush1.msra.mxu0 0.0
    %309 = vmatprep.subr.mxu0 0.0
    %310 = vmatpush1.msra.mxu0 0.0
    %311 = vmatprep.subr.mxu0 0.0
    %312 = vmatpush1.msra.mxu0 0.0
    %313 = vmatprep.subr.mxu0 0.0
    %314 = vmatpush1.msra.mxu0 0.0
    %315 = vmatprep.subr.mxu0 0.0
    %316 = vmatpush1.msra.mxu0 0.0
    %317 = vmatprep.subr.mxu0 0.0
    %318 = vmatpush1.msra.mxu0 0.0
    %319 = vmatprep.subr.mxu0 0.0
    %320 = vmatpush1.msra.mxu0 0.0
    %321 = vmatprep.subr.mxu0 0.0
    %322 = vmatpush1.msra.mxu0 0.0
    %323 = vmatprep.subr.mxu0 0.0
    %324 = vmatpush1.msra.mxu0 0.0
    %325 = vmatprep.subr.mxu0 0.0
    %326 = vmatpush1.msra.mxu0 0.0
    %327 = vmatprep.subr.mxu0 0.0
    %328 = vmatpush1.msra.mxu0 0.0
    %329 = vmatprep.subr.mxu0 0.0
    %v330 = vand.u32 %v29, 4294901760
    %331 = vmatpush1.msra.mxu0 %v330
    %332 = vmatprep.subr.mxu0 0.0
    %v333 = vand.u32 %v28, 4294901760
    %334 = vmatpush1.msra.mxu0 %v333
    %335 = vmatprep.subr.mxu0 0.0
    %v336 = vand.u32 %v27, 4294901760
    %337 = vmatpush1.msra.mxu0 %v336
    %338 = vmatprep.subr.mxu0 0.0
    %v339 = vand.u32 %v26, 4294901760
    %340 = vmatpush1.msra.mxu0 %v339
    %341 = vmatprep.subr.mxu0 0.0
    %342 = vmatpush2.msra.mxu0 0.0
    %343 = vmatprep.subr.mxu0 0.0
    %344 = vmatpush2.msra.mxu0 0.0
    %345 = vmatprep.subr.mxu0 0.0
    %346 = vmatpush2.msra.mxu0 0.0
    %347 = vmatprep.subr.mxu0 0.0
    %348 = vmatpush2.msra.mxu0 0.0
    %349 = vmatprep.subr.mxu0 0.0
    %350 = vmatpush2.msra.mxu0 0.0
    %351 = vmatprep.subr.mxu0 0.0
    %352 = vmatpush2.msra.mxu0 0.0
    %353 = vmatprep.subr.mxu0 0.0
    %354 = vmatpush2.msra.mxu0 0.0
    %355 = vmatprep.subr.mxu0 0.0
    %356 = vmatpush2.msra.mxu0 0.0
    %357 = vmatprep.subr.mxu0 0.0
    %358 = vmatpush2.msra.mxu0 0.0
    %359 = vmatprep.subr.mxu0 0.0
    %360 = vmatpush2.msra.mxu0 0.0
    %361 = vmatprep.subr.mxu0 0.0
    %362 = vmatpush2.msra.mxu0 0.0
    %363 = vmatprep.subr.mxu0 0.0
    %364 = vmatpush2.msra.mxu0 0.0
    %365 = vmatprep.subr.mxu0 0.0
    %366 = vmatpush2.msra.mxu0 0.0
    %367 = vmatprep.subr.mxu0 0.0
    %368 = vmatpush2.msra.mxu0 0.0
    %369 = vmatprep.subr.mxu0 0.0
    %370 = vmatpush2.msra.mxu0 0.0
    %371 = vmatprep.subr.mxu0 0.0
    %372 = vmatpush2.msra.mxu0 0.0
    %373 = vmatprep.mubr.f32.mxu0 0.0
    %v374 = vand.u32 %v53, 4294901760
    %v375 = vsub.f32 %v53, %v374
    %v376 = vand.u32 %v375, 4294901760
    %377 = vmatmul.mubr.f32.gmra.mxu0 %v376
    %v378 = vpop.f32.mrf.mxu0
    %v379 = vadd.f32 %v302, %v378
    %v380 = vpop.f32.mrf.mxu0
    %381 = vdwg.mxu0
    %382 = vmatprep.subr.mxu0 0.0
    %383 = vmatpush1.msra.mxu0 0.0
    %384 = vmatprep.subr.mxu0 0.0
    %385 = vmatpush1.msra.mxu0 0.0
    %386 = vmatprep.subr.mxu0 0.0
    %387 = vmatpush1.msra.mxu0 0.0
    %388 = vmatprep.subr.mxu0 0.0
    %389 = vmatpush1.msra.mxu0 0.0
    %390 = vmatprep.subr.mxu0 0.0
    %391 = vmatpush1.msra.mxu0 0.0
    %392 = vmatprep.subr.mxu0 0.0
    %393 = vmatpush1.msra.mxu0 0.0
    %394 = vmatprep.subr.mxu0 0.0
    %395 = vmatpush1.msra.mxu0 0.0
    %396 = vmatprep.subr.mxu0 0.0
    %397 = vmatpush1.msra.mxu0 0.0
    %398 = vmatprep.subr.mxu0 0.0
    %399 = vmatpush1.msra.mxu0 0.0
    %400 = vmatprep.subr.mxu0 0.0
    %401 = vmatpush1.msra.mxu0 0.0
    %402 = vmatprep.subr.mxu0 0.0
    %403 = vmatpush1.msra.mxu0 0.0
    %404 = vmatprep.subr.mxu0 0.0
    %405 = vmatpush1.msra.mxu0 0.0
    %406 = vmatprep.subr.mxu0 0.0
    %v407 = vand.u32 %v29, 4294901760
    %v408 = vsub.f32 %v29, %v407
    %v409 = vand.u32 %v408, 4294901760
    %410 = vmatpush1.msra.mxu0 %v409
    %411 = vmatprep.subr.mxu0 0.0
    %v412 = vand.u32 %v28, 4294901760
    %v413 = vsub.f32 %v28, %v412
    %v414 = vand.u32 %v413, 4294901760
    %415 = vmatpush1.msra.mxu0 %v414
    %416 = vmatprep.subr.mxu0 0.0
    %v417 = vand.u32 %v27, 4294901760
    %v418 = vsub.f32 %v27, %v417
    %v419 = vand.u32 %v418, 4294901760
    %420 = vmatpush1.msra.mxu0 %v419
    %421 = vmatprep.subr.mxu0 0.0
    %v422 = vand.u32 %v26, 4294901760
    %v423 = vsub.f32 %v26, %v422
    %v424 = vand.u32 %v423, 4294901760
    %425 = vmatpush1.msra.mxu0 %v424
    %426 = vmatprep.subr.mxu0 0.0
    %427 = vmatpush2.msra.mxu0 0.0
    %428 = vmatprep.subr.mxu0 0.0
    %429 = vmatpush2.msra.mxu0 0.0
    %430 = vmatprep.subr.mxu0 0.0
    %431 = vmatpush2.msra.mxu0 0.0
    %432 = vmatprep.subr.mxu0 0.0
    %433 = vmatpush2.msra.mxu0 0.0
    %434 = vmatprep.subr.mxu0 0.0
    %435 = vmatpush2.msra.mxu0 0.0
    %436 = vmatprep.subr.mxu0 0.0
    %437 = vmatpush2.msra.mxu0 0.0
    %438 = vmatprep.subr.mxu0 0.0
    %439 = vmatpush2.msra.mxu0 0.0
    %440 = vmatprep.subr.mxu0 0.0
    %441 = vmatpush2.msra.mxu0 0.0
    %442 = vmatprep.subr.mxu0 0.0
    %443 = vmatpush2.msra.mxu0 0.0
    %444 = vmatprep.subr.mxu0 0.0
    %445 = vmatpush2.msra.mxu0 0.0
    %446 = vmatprep.subr.mxu0 0.0
    %447 = vmatpush2.msra.mxu0 0.0
    %448 = vmatprep.subr.mxu0 0.0
    %449 = vmatpush2.msra.mxu0 0.0
    %450 = vmatprep.subr.mxu0 0.0
    %451 = vmatpush2.msra.mxu0 0.0
    %452 = vmatprep.subr.mxu0 0.0
    %453 = vmatpush2.msra.mxu0 0.0
    %454 = vmatprep.subr.mxu0 0.0
    %455 = vmatpush2.msra.mxu0 0.0
    %456 = vmatprep.subr.mxu0 0.0
    %457 = vmatpush2.msra.mxu0 0.0
    %458 = vmatprep.mubr.f32.mxu0 0.0
    %v459 = vand.u32 %v53, 4294901760
    %460 = vmatmul.mubr.f32.gmra.mxu0 %v459
    %v461 = vpop.f32.mrf.mxu0
    %v462 = vadd.f32 %v379, %v461
    %v463 = vpop.f32.mrf.mxu0
    %464 = vdwg.mxu0
    %465 = vmatprep.subr.mxu0 0.0
    %466 = vmatpush1.msra.mxu0 0.0
    %467 = vmatprep.subr.mxu0 0.0
    %468 = vmatpush1.msra.mxu0 0.0
    %469 = vmatprep.subr.mxu0 0.0
    %470 = vmatpush1.msra.mxu0 0.0
    %471 = vmatprep.subr.mxu0 0.0
    %472 = vmatpush1.msra.mxu0 0.0
    %473 = vmatprep.subr.mxu0 0.0
    %474 = vmatpush1.msra.mxu0 0.0
    %475 = vmatprep.subr.mxu0 0.0
    %476 = vmatpush1.msra.mxu0 0.0
    %477 = vmatprep.subr.mxu0 0.0
    %478 = vmatpush1.msra.mxu0 0.0
    %479 = vmatprep.subr.mxu0 0.0
    %480 = vmatpush1.msra.mxu0 0.0
    %481 = vmatprep.subr.mxu0 0.0
    %482 = vmatpush1.msra.mxu0 0.0
    %483 = vmatprep.subr.mxu0 0.0
    %484 = vmatpush1.msra.mxu0 0.0
    %485 = vmatprep.subr.mxu0 0.0
    %486 = vmatpush1.msra.mxu0 0.0
    %487 = vmatprep.subr.mxu0 0.0
    %488 = vmatpush1.msra.mxu0 0.0
    %489 = vmatprep.subr.mxu0 0.0
    %v490 = vand.u32 %v29, 4294901760
    %491 = vmatpush1.msra.mxu0 %v490
    %492 = vmatprep.subr.mxu0 0.0
    %v493 = vand.u32 %v28, 4294901760
    %494 = vmatpush1.msra.mxu0 %v493
    %495 = vmatprep.subr.mxu0 0.0
    %v496 = vand.u32 %v27, 4294901760
    %497 = vmatpush1.msra.mxu0 %v496
    %498 = vmatprep.subr.mxu0 0.0
    %v499 = vand.u32 %v26, 4294901760
    %500 = vmatpush1.msra.mxu0 %v499
    %501 = vmatprep.subr.mxu0 0.0
    %502 = vmatpush2.msra.mxu0 0.0
    %503 = vmatprep.subr.mxu0 0.0
    %504 = vmatpush2.msra.mxu0 0.0
    %505 = vmatprep.subr.mxu0 0.0
    %506 = vmatpush2.msra.mxu0 0.0
    %507 = vmatprep.subr.mxu0 0.0
    %508 = vmatpush2.msra.mxu0 0.0
    %509 = vmatprep.subr.mxu0 0.0
    %510 = vmatpush2.msra.mxu0 0.0
    %511 = vmatprep.subr.mxu0 0.0
    %512 = vmatpush2.msra.mxu0 0.0
    %513 = vmatprep.subr.mxu0 0.0
    %514 = vmatpush2.msra.mxu0 0.0
    %515 = vmatprep.subr.mxu0 0.0
    %516 = vmatpush2.msra.mxu0 0.0
    %517 = vmatprep.subr.mxu0 0.0
    %518 = vmatpush2.msra.mxu0 0.0
    %519 = vmatprep.subr.mxu0 0.0
    %520 = vmatpush2.msra.mxu0 0.0
    %521 = vmatprep.subr.mxu0 0.0
    %522 = vmatpush2.msra.mxu0 0.0
    %523 = vmatprep.subr.mxu0 0.0
    %524 = vmatpush2.msra.mxu0 0.0
    %525 = vmatprep.subr.mxu0 0.0
    %526 = vmatpush2.msra.mxu0 0.0
    %527 = vmatprep.subr.mxu0 0.0
    %528 = vmatpush2.msra.mxu0 0.0
    %529 = vmatprep.subr.mxu0 0.0
    %530 = vmatpush2.msra.mxu0 0.0
    %531 = vmatprep.subr.mxu0 0.0
    %532 = vmatpush2.msra.mxu0 0.0
    %533 = vmatprep.mubr.f32.mxu0 0.0
    %v534 = vand.u32 %v53, 4294901760
    %535 = vmatmul.mubr.f32.gmra.mxu0 %v534
    %v536 = vpop.f32.mrf.mxu0
    %v537 = vadd.f32 %v462, %v536
    %v538 = vpop.f32.mrf.mxu0
    %539 = vdwg.mxu0
    %v540 = vmul.f32 %v537, %v537
    %v541 = vsel %vm51, %v540, 0.0
    %v542 = vrot.slane %v541, 4
    %v543 = vadd.f32 %v541, %v542
    %v544 = vrot.slane %v543, 2
    %v545 = vadd.f32 %v543, %v544
    %v546 = vrot.slane %v545, 1
    %v547 = vadd.f32 %v545, %v546
    %v548 = vmax.f32 %v547, 1e-24
    %v549 = vrsqrt.pop %v548
    %v550 = vmul.f32 %v537, %v549
    %v552 = vsel %vm51, %v550, 0
    %554 = vmatprep.subr.mxu0 0.0
    %555 = vmatpush1.msra.mxu0 0.0
    %556 = vmatprep.subr.mxu0 0.0
    %557 = vmatpush1.msra.mxu0 0.0
    %558 = vmatprep.subr.mxu0 0.0
    %559 = vmatpush1.msra.mxu0 0.0
    %560 = vmatprep.subr.mxu0 0.0
    %561 = vmatpush1.msra.mxu0 0.0
    %562 = vmatprep.subr.mxu0 0.0
    %563 = vmatpush1.msra.mxu0 0.0
    %564 = vmatprep.subr.mxu0 0.0
    %565 = vmatpush1.msra.mxu0 0.0
    %566 = vmatprep.subr.mxu0 0.0
    %567 = vmatpush1.msra.mxu0 0.0
    %568 = vmatprep.subr.mxu0 0.0
    %569 = vmatpush1.msra.mxu0 0.0
    %570 = vmatprep.subr.mxu0 0.0
    %571 = vmatpush1.msra.mxu0 0.0
    %572 = vmatprep.subr.mxu0 0.0
    %573 = vmatpush1.msra.mxu0 0.0
    %574 = vmatprep.subr.mxu0 0.0
    %575 = vmatpush1.msra.mxu0 0.0
    %576 = vmatprep.subr.mxu0 0.0
    %577 = vmatpush1.msra.mxu0 0.0
    %578 = vmatprep.subr.mxu0 0.0
    %v579 = vand.u32 %v29, 4294901760
    %580 = vmatpush1.msra.mxu0 %v579
    %581 = vmatprep.subr.mxu0 0.0
    %v582 = vand.u32 %v28, 4294901760
    %583 = vmatpush1.msra.mxu0 %v582
    %584 = vmatprep.subr.mxu0 0.0
    %v585 = vand.u32 %v27, 4294901760
    %586 = vmatpush1.msra.mxu0 %v585
    %587 = vmatprep.subr.mxu0 0.0
    %v588 = vand.u32 %v26, 4294901760
    %589 = vmatpush1.msra.mxu0 %v588
    %590 = vmatprep.subr.mxu0 0.0
    %591 = vmatpush2.msra.mxu0 0.0
    %592 = vmatprep.subr.mxu0 0.0
    %593 = vmatpush2.msra.mxu0 0.0
    %594 = vmatprep.subr.mxu0 0.0
    %595 = vmatpush2.msra.mxu0 0.0
    %596 = vmatprep.subr.mxu0 0.0
    %597 = vmatpush2.msra.mxu0 0.0
    %598 = vmatprep.subr.mxu0 0.0
    %599 = vmatpush2.msra.mxu0 0.0
    %600 = vmatprep.subr.mxu0 0.0
    %601 = vmatpush2.msra.mxu0 0.0
    %602 = vmatprep.subr.mxu0 0.0
    %603 = vmatpush2.msra.mxu0 0.0
    %604 = vmatprep.subr.mxu0 0.0
    %605 = vmatpush2.msra.mxu0 0.0
    %606 = vmatprep.subr.mxu0 0.0
    %607 = vmatpush2.msra.mxu0 0.0
    %608 = vmatprep.subr.mxu0 0.0
    %609 = vmatpush2.msra.mxu0 0.0
    %610 = vmatprep.subr.mxu0 0.0
    %611 = vmatpush2.msra.mxu0 0.0
    %612 = vmatprep.subr.mxu0 0.0
    %613 = vmatpush2.msra.mxu0 0.0
    %614 = vmatprep.subr.mxu0 0.0
    %615 = vmatpush2.msra.mxu0 0.0
    %616 = vmatprep.subr.mxu0 0.0
    %617 = vmatpush2.msra.mxu0 0.0
    %618 = vmatprep.subr.mxu0 0.0
    %619 = vmatpush2.msra.mxu0 0.0
    %620 = vmatprep.subr.mxu0 0.0
    %621 = vmatpush2.msra.mxu0 0.0
    %622 = vmatprep.mubr.f32.mxu0 0.0
    %v623 = vand.u32 %v552, 4294901760
    %v624 = vsub.f32 %v552, %v623
    %v625 = vand.u32 %v624, 4294901760
    %v626 = vsub.f32 %v624, %v625
    %v627 = vand.u32 %v626, 4294901760
    %628 = vmatmul.mubr.f32.gmra.mxu0 %v627
    %v629 = vpop.f32.mrf.mxu0
    %v630 = vadd.f32 0.0, %v629
    %v631 = vpop.f32.mrf.mxu0
    %632 = vdwg.mxu0
    %633 = vmatprep.subr.mxu0 0.0
    %634 = vmatpush1.msra.mxu0 0.0
    %635 = vmatprep.subr.mxu0 0.0
    %636 = vmatpush1.msra.mxu0 0.0
    %637 = vmatprep.subr.mxu0 0.0
    %638 = vmatpush1.msra.mxu0 0.0
    %639 = vmatprep.subr.mxu0 0.0
    %640 = vmatpush1.msra.mxu0 0.0
    %641 = vmatprep.subr.mxu0 0.0
    %642 = vmatpush1.msra.mxu0 0.0
    %643 = vmatprep.subr.mxu0 0.0
    %644 = vmatpush1.msra.mxu0 0.0
    %645 = vmatprep.subr.mxu0 0.0
    %646 = vmatpush1.msra.mxu0 0.0
    %647 = vmatprep.subr.mxu0 0.0
    %648 = vmatpush1.msra.mxu0 0.0
    %649 = vmatprep.subr.mxu0 0.0
    %650 = vmatpush1.msra.mxu0 0.0
    %651 = vmatprep.subr.mxu0 0.0
    %652 = vmatpush1.msra.mxu0 0.0
    %653 = vmatprep.subr.mxu0 0.0
    %654 = vmatpush1.msra.mxu0 0.0
    %655 = vmatprep.subr.mxu0 0.0
    %656 = vmatpush1.msra.mxu0 0.0
    %657 = vmatprep.subr.mxu0 0.0
    %v658 = vand.u32 %v29, 4294901760
    %v659 = vsub.f32 %v29, %v658
    %v660 = vand.u32 %v659, 4294901760
    %v661 = vsub.f32 %v659, %v660
    %v662 = vand.u32 %v661, 4294901760
    %663 = vmatpush1.msra.mxu0 %v662
    %664 = vmatprep.subr.mxu0 0.0
    %v665 = vand.u32 %v28, 4294901760
    %v666 = vsub.f32 %v28, %v665
    %v667 = vand.u32 %v666, 4294901760
    %v668 = vsub.f32 %v666, %v667
    %v669 = vand.u32 %v668, 4294901760
    %670 = vmatpush1.msra.mxu0 %v669
    %671 = vmatprep.subr.mxu0 0.0
    %v672 = vand.u32 %v27, 4294901760
    %v673 = vsub.f32 %v27, %v672
    %v674 = vand.u32 %v673, 4294901760
    %v675 = vsub.f32 %v673, %v674
    %v676 = vand.u32 %v675, 4294901760
    %677 = vmatpush1.msra.mxu0 %v676
    %678 = vmatprep.subr.mxu0 0.0
    %v679 = vand.u32 %v26, 4294901760
    %v680 = vsub.f32 %v26, %v679
    %v681 = vand.u32 %v680, 4294901760
    %v682 = vsub.f32 %v680, %v681
    %v683 = vand.u32 %v682, 4294901760
    %684 = vmatpush1.msra.mxu0 %v683
    %685 = vmatprep.subr.mxu0 0.0
    %686 = vmatpush2.msra.mxu0 0.0
    %687 = vmatprep.subr.mxu0 0.0
    %688 = vmatpush2.msra.mxu0 0.0
    %689 = vmatprep.subr.mxu0 0.0
    %690 = vmatpush2.msra.mxu0 0.0
    %691 = vmatprep.subr.mxu0 0.0
    %692 = vmatpush2.msra.mxu0 0.0
    %693 = vmatprep.subr.mxu0 0.0
    %694 = vmatpush2.msra.mxu0 0.0
    %695 = vmatprep.subr.mxu0 0.0
    %696 = vmatpush2.msra.mxu0 0.0
    %697 = vmatprep.subr.mxu0 0.0
    %698 = vmatpush2.msra.mxu0 0.0
    %699 = vmatprep.subr.mxu0 0.0
    %700 = vmatpush2.msra.mxu0 0.0
    %701 = vmatprep.subr.mxu0 0.0
    %702 = vmatpush2.msra.mxu0 0.0
    %703 = vmatprep.subr.mxu0 0.0
    %704 = vmatpush2.msra.mxu0 0.0
    %705 = vmatprep.subr.mxu0 0.0
    %706 = vmatpush2.msra.mxu0 0.0
    %707 = vmatprep.subr.mxu0 0.0
    %708 = vmatpush2.msra.mxu0 0.0
    %709 = vmatprep.subr.mxu0 0.0
    %710 = vmatpush2.msra.mxu0 0.0
    %711 = vmatprep.subr.mxu0 0.0
    %712 = vmatpush2.msra.mxu0 0.0
    %713 = vmatprep.subr.mxu0 0.0
    %714 = vmatpush2.msra.mxu0 0.0
    %715 = vmatprep.subr.mxu0 0.0
    %716 = vmatpush2.msra.mxu0 0.0
    %717 = vmatprep.mubr.f32.mxu0 0.0
    %v718 = vand.u32 %v552, 4294901760
    %719 = vmatmul.mubr.f32.gmra.mxu0 %v718
    %v720 = vpop.f32.mrf.mxu0
    %v721 = vadd.f32 %v630, %v720
    %v722 = vpop.f32.mrf.mxu0
    %723 = vdwg.mxu0
    %724 = vmatprep.subr.mxu0 0.0
    %725 = vmatpush1.msra.mxu0 0.0
    %726 = vmatprep.subr.mxu0 0.0
    %727 = vmatpush1.msra.mxu0 0.0
    %728 = vmatprep.subr.mxu0 0.0
    %729 = vmatpush1.msra.mxu0 0.0
    %730 = vmatprep.subr.mxu0 0.0
    %731 = vmatpush1.msra.mxu0 0.0
    %732 = vmatprep.subr.mxu0 0.0
    %733 = vmatpush1.msra.mxu0 0.0
    %734 = vmatprep.subr.mxu0 0.0
    %735 = vmatpush1.msra.mxu0 0.0
    %736 = vmatprep.subr.mxu0 0.0
    %737 = vmatpush1.msra.mxu0 0.0
    %738 = vmatprep.subr.mxu0 0.0
    %739 = vmatpush1.msra.mxu0 0.0
    %740 = vmatprep.subr.mxu0 0.0
    %741 = vmatpush1.msra.mxu0 0.0
    %742 = vmatprep.subr.mxu0 0.0
    %743 = vmatpush1.msra.mxu0 0.0
    %744 = vmatprep.subr.mxu0 0.0
    %745 = vmatpush1.msra.mxu0 0.0
    %746 = vmatprep.subr.mxu0 0.0
    %747 = vmatpush1.msra.mxu0 0.0
    %748 = vmatprep.subr.mxu0 0.0
    %v749 = vand.u32 %v29, 4294901760
    %v750 = vsub.f32 %v29, %v749
    %751 = vmatpush1.msra.mxu0 %v750
    %752 = vmatprep.subr.mxu0 0.0
    %v753 = vand.u32 %v28, 4294901760
    %v754 = vsub.f32 %v28, %v753
    %755 = vmatpush1.msra.mxu0 %v754
    %756 = vmatprep.subr.mxu0 0.0
    %v757 = vand.u32 %v27, 4294901760
    %v758 = vsub.f32 %v27, %v757
    %759 = vmatpush1.msra.mxu0 %v758
    %760 = vmatprep.subr.mxu0 0.0
    %v761 = vand.u32 %v26, 4294901760
    %v762 = vsub.f32 %v26, %v761
    %763 = vmatpush1.msra.mxu0 %v762
    %764 = vmatprep.subr.mxu0 0.0
    %765 = vmatpush2.msra.mxu0 0.0
    %766 = vmatprep.subr.mxu0 0.0
    %767 = vmatpush2.msra.mxu0 0.0
    %768 = vmatprep.subr.mxu0 0.0
    %769 = vmatpush2.msra.mxu0 0.0
    %770 = vmatprep.subr.mxu0 0.0
    %771 = vmatpush2.msra.mxu0 0.0
    %772 = vmatprep.subr.mxu0 0.0
    %773 = vmatpush2.msra.mxu0 0.0
    %774 = vmatprep.subr.mxu0 0.0
    %775 = vmatpush2.msra.mxu0 0.0
    %776 = vmatprep.subr.mxu0 0.0
    %777 = vmatpush2.msra.mxu0 0.0
    %778 = vmatprep.subr.mxu0 0.0
    %779 = vmatpush2.msra.mxu0 0.0
    %780 = vmatprep.subr.mxu0 0.0
    %781 = vmatpush2.msra.mxu0 0.0
    %782 = vmatprep.subr.mxu0 0.0
    %783 = vmatpush2.msra.mxu0 0.0
    %784 = vmatprep.subr.mxu0 0.0
    %785 = vmatpush2.msra.mxu0 0.0
    %786 = vmatprep.subr.mxu0 0.0
    %787 = vmatpush2.msra.mxu0 0.0
    %788 = vmatprep.subr.mxu0 0.0
    %789 = vmatpush2.msra.mxu0 0.0
    %790 = vmatprep.subr.mxu0 0.0
    %791 = vmatpush2.msra.mxu0 0.0
    %792 = vmatprep.subr.mxu0 0.0
    %793 = vmatpush2.msra.mxu0 0.0
    %794 = vmatprep.subr.mxu0 0.0
    %795 = vmatpush2.msra.mxu0 0.0
    %796 = vmatprep.mubr.f32.mxu0 0.0
    %v797 = vand.u32 %v552, 4294901760
    %v798 = vsub.f32 %v552, %v797
    %799 = vmatmul.mubr.f32.gmra.mxu0 %v798
    %v800 = vpop.f32.mrf.mxu0
    %v801 = vadd.f32 %v721, %v800
    %v802 = vpop.f32.mrf.mxu0
    %803 = vdwg.mxu0
    %804 = vmatprep.subr.mxu0 0.0
    %805 = vmatpush1.msra.mxu0 0.0
    %806 = vmatprep.subr.mxu0 0.0
    %807 = vmatpush1.msra.mxu0 0.0
    %808 = vmatprep.subr.mxu0 0.0
    %809 = vmatpush1.msra.mxu0 0.0
    %810 = vmatprep.subr.mxu0 0.0
    %811 = vmatpush1.msra.mxu0 0.0
    %812 = vmatprep.subr.mxu0 0.0
    %813 = vmatpush1.msra.mxu0 0.0
    %814 = vmatprep.subr.mxu0 0.0
    %815 = vmatpush1.msra.mxu0 0.0
    %816 = vmatprep.subr.mxu0 0.0
    %817 = vmatpush1.msra.mxu0 0.0
    %818 = vmatprep.subr.mxu0 0.0
    %819 = vmatpush1.msra.mxu0 0.0
    %820 = vmatprep.subr.mxu0 0.0
    %821 = vmatpush1.msra.mxu0 0.0
    %822 = vmatprep.subr.mxu0 0.0
    %823 = vmatpush1.msra.mxu0 0.0
    %824 = vmatprep.subr.mxu0 0.0
    %825 = vmatpush1.msra.mxu0 0.0
    %826 = vmatprep.subr.mxu0 0.0
    %827 = vmatpush1.msra.mxu0 0.0
    %828 = vmatprep.subr.mxu0 0.0
    %v829 = vand.u32 %v29, 4294901760
    %830 = vmatpush1.msra.mxu0 %v829
    %831 = vmatprep.subr.mxu0 0.0
    %v832 = vand.u32 %v28, 4294901760
    %833 = vmatpush1.msra.mxu0 %v832
    %834 = vmatprep.subr.mxu0 0.0
    %v835 = vand.u32 %v27, 4294901760
    %836 = vmatpush1.msra.mxu0 %v835
    %837 = vmatprep.subr.mxu0 0.0
    %v838 = vand.u32 %v26, 4294901760
    %839 = vmatpush1.msra.mxu0 %v838
    %840 = vmatprep.subr.mxu0 0.0
    %841 = vmatpush2.msra.mxu0 0.0
    %842 = vmatprep.subr.mxu0 0.0
    %843 = vmatpush2.msra.mxu0 0.0
    %844 = vmatprep.subr.mxu0 0.0
    %845 = vmatpush2.msra.mxu0 0.0
    %846 = vmatprep.subr.mxu0 0.0
    %847 = vmatpush2.msra.mxu0 0.0
    %848 = vmatprep.subr.mxu0 0.0
    %849 = vmatpush2.msra.mxu0 0.0
    %850 = vmatprep.subr.mxu0 0.0
    %851 = vmatpush2.msra.mxu0 0.0
    %852 = vmatprep.subr.mxu0 0.0
    %853 = vmatpush2.msra.mxu0 0.0
    %854 = vmatprep.subr.mxu0 0.0
    %855 = vmatpush2.msra.mxu0 0.0
    %856 = vmatprep.subr.mxu0 0.0
    %857 = vmatpush2.msra.mxu0 0.0
    %858 = vmatprep.subr.mxu0 0.0
    %859 = vmatpush2.msra.mxu0 0.0
    %860 = vmatprep.subr.mxu0 0.0
    %861 = vmatpush2.msra.mxu0 0.0
    %862 = vmatprep.subr.mxu0 0.0
    %863 = vmatpush2.msra.mxu0 0.0
    %864 = vmatprep.subr.mxu0 0.0
    %865 = vmatpush2.msra.mxu0 0.0
    %866 = vmatprep.subr.mxu0 0.0
    %867 = vmatpush2.msra.mxu0 0.0
    %868 = vmatprep.subr.mxu0 0.0
    %869 = vmatpush2.msra.mxu0 0.0
    %870 = vmatprep.subr.mxu0 0.0
    %871 = vmatpush2.msra.mxu0 0.0
    %872 = vmatprep.mubr.f32.mxu0 0.0
    %v873 = vand.u32 %v552, 4294901760
    %v874 = vsub.f32 %v552, %v873
    %v875 = vand.u32 %v874, 4294901760
    %876 = vmatmul.mubr.f32.gmra.mxu0 %v875
    %v877 = vpop.f32.mrf.mxu0
    %v878 = vadd.f32 %v801, %v877
    %v879 = vpop.f32.mrf.mxu0
    %880 = vdwg.mxu0
    %881 = vmatprep.subr.mxu0 0.0
    %882 = vmatpush1.msra.mxu0 0.0
    %883 = vmatprep.subr.mxu0 0.0
    %884 = vmatpush1.msra.mxu0 0.0
    %885 = vmatprep.subr.mxu0 0.0
    %886 = vmatpush1.msra.mxu0 0.0
    %887 = vmatprep.subr.mxu0 0.0
    %888 = vmatpush1.msra.mxu0 0.0
    %889 = vmatprep.subr.mxu0 0.0
    %890 = vmatpush1.msra.mxu0 0.0
    %891 = vmatprep.subr.mxu0 0.0
    %892 = vmatpush1.msra.mxu0 0.0
    %893 = vmatprep.subr.mxu0 0.0
    %894 = vmatpush1.msra.mxu0 0.0
    %895 = vmatprep.subr.mxu0 0.0
    %896 = vmatpush1.msra.mxu0 0.0
    %897 = vmatprep.subr.mxu0 0.0
    %898 = vmatpush1.msra.mxu0 0.0
    %899 = vmatprep.subr.mxu0 0.0
    %900 = vmatpush1.msra.mxu0 0.0
    %901 = vmatprep.subr.mxu0 0.0
    %902 = vmatpush1.msra.mxu0 0.0
    %903 = vmatprep.subr.mxu0 0.0
    %904 = vmatpush1.msra.mxu0 0.0
    %905 = vmatprep.subr.mxu0 0.0
    %v906 = vand.u32 %v29, 4294901760
    %v907 = vsub.f32 %v29, %v906
    %v908 = vand.u32 %v907, 4294901760
    %909 = vmatpush1.msra.mxu0 %v908
    %910 = vmatprep.subr.mxu0 0.0
    %v911 = vand.u32 %v28, 4294901760
    %v912 = vsub.f32 %v28, %v911
    %v913 = vand.u32 %v912, 4294901760
    %914 = vmatpush1.msra.mxu0 %v913
    %915 = vmatprep.subr.mxu0 0.0
    %v916 = vand.u32 %v27, 4294901760
    %v917 = vsub.f32 %v27, %v916
    %v918 = vand.u32 %v917, 4294901760
    %919 = vmatpush1.msra.mxu0 %v918
    %920 = vmatprep.subr.mxu0 0.0
    %v921 = vand.u32 %v26, 4294901760
    %v922 = vsub.f32 %v26, %v921
    %v923 = vand.u32 %v922, 4294901760
    %924 = vmatpush1.msra.mxu0 %v923
    %925 = vmatprep.subr.mxu0 0.0
    %926 = vmatpush2.msra.mxu0 0.0
    %927 = vmatprep.subr.mxu0 0.0
    %928 = vmatpush2.msra.mxu0 0.0
    %929 = vmatprep.subr.mxu0 0.0
    %930 = vmatpush2.msra.mxu0 0.0
    %931 = vmatprep.subr.mxu0 0.0
    %932 = vmatpush2.msra.mxu0 0.0
    %933 = vmatprep.subr.mxu0 0.0
    %934 = vmatpush2.msra.mxu0 0.0
    %935 = vmatprep.subr.mxu0 0.0
    %936 = vmatpush2.msra.mxu0 0.0
    %937 = vmatprep.subr.mxu0 0.0
    %938 = vmatpush2.msra.mxu0 0.0
    %939 = vmatprep.subr.mxu0 0.0
    %940 = vmatpush2.msra.mxu0 0.0
    %941 = vmatprep.subr.mxu0 0.0
    %942 = vmatpush2.msra.mxu0 0.0
    %943 = vmatprep.subr.mxu0 0.0
    %944 = vmatpush2.msra.mxu0 0.0
    %945 = vmatprep.subr.mxu0 0.0
    %946 = vmatpush2.msra.mxu0 0.0
    %947 = vmatprep.subr.mxu0 0.0
    %948 = vmatpush2.msra.mxu0 0.0
    %949 = vmatprep.subr.mxu0 0.0
    %950 = vmatpush2.msra.mxu0 0.0
    %951 = vmatprep.subr.mxu0 0.0
    %952 = vmatpush2.msra.mxu0 0.0
    %953 = vmatprep.subr.mxu0 0.0
    %954 = vmatpush2.msra.mxu0 0.0
    %955 = vmatprep.subr.mxu0 0.0
    %956 = vmatpush2.msra.mxu0 0.0
    %957 = vmatprep.mubr.f32.mxu0 0.0
    %v958 = vand.u32 %v552, 4294901760
    %959 = vmatmul.mubr.f32.gmra.mxu0 %v958
    %v960 = vpop.f32.mrf.mxu0
    %v961 = vadd.f32 %v878, %v960
    %v962 = vpop.f32.mrf.mxu0
    %963 = vdwg.mxu0
    %964 = vmatprep.subr.mxu0 0.0
    %965 = vmatpush1.msra.mxu0 0.0
    %966 = vmatprep.subr.mxu0 0.0
    %967 = vmatpush1.msra.mxu0 0.0
    %968 = vmatprep.subr.mxu0 0.0
    %969 = vmatpush1.msra.mxu0 0.0
    %970 = vmatprep.subr.mxu0 0.0
    %971 = vmatpush1.msra.mxu0 0.0
    %972 = vmatprep.subr.mxu0 0.0
    %973 = vmatpush1.msra.mxu0 0.0
    %974 = vmatprep.subr.mxu0 0.0
    %975 = vmatpush1.msra.mxu0 0.0
    %976 = vmatprep.subr.mxu0 0.0
    %977 = vmatpush1.msra.mxu0 0.0
    %978 = vmatprep.subr.mxu0 0.0
    %979 = vmatpush1.msra.mxu0 0.0
    %980 = vmatprep.subr.mxu0 0.0
    %981 = vmatpush1.msra.mxu0 0.0
    %982 = vmatprep.subr.mxu0 0.0
    %983 = vmatpush1.msra.mxu0 0.0
    %984 = vmatprep.subr.mxu0 0.0
    %985 = vmatpush1.msra.mxu0 0.0
    %986 = vmatprep.subr.mxu0 0.0
    %987 = vmatpush1.msra.mxu0 0.0
    %988 = vmatprep.subr.mxu0 0.0
    %v989 = vand.u32 %v29, 4294901760
    %990 = vmatpush1.msra.mxu0 %v989
    %991 = vmatprep.subr.mxu0 0.0
    %v992 = vand.u32 %v28, 4294901760
    %993 = vmatpush1.msra.mxu0 %v992
    %994 = vmatprep.subr.mxu0 0.0
    %v995 = vand.u32 %v27, 4294901760
    %996 = vmatpush1.msra.mxu0 %v995
    %997 = vmatprep.subr.mxu0 0.0
    %v998 = vand.u32 %v26, 4294901760
    %999 = vmatpush1.msra.mxu0 %v998
    %1000 = vmatprep.subr.mxu0 0.0
    %1001 = vmatpush2.msra.mxu0 0.0
    %1002 = vmatprep.subr.mxu0 0.0
    %1003 = vmatpush2.msra.mxu0 0.0
    %1004 = vmatprep.subr.mxu0 0.0
    %1005 = vmatpush2.msra.mxu0 0.0
    %1006 = vmatprep.subr.mxu0 0.0
    %1007 = vmatpush2.msra.mxu0 0.0
    %1008 = vmatprep.subr.mxu0 0.0
    %1009 = vmatpush2.msra.mxu0 0.0
    %1010 = vmatprep.subr.mxu0 0.0
    %1011 = vmatpush2.msra.mxu0 0.0
    %1012 = vmatprep.subr.mxu0 0.0
    %1013 = vmatpush2.msra.mxu0 0.0
    %1014 = vmatprep.subr.mxu0 0.0
    %1015 = vmatpush2.msra.mxu0 0.0
    %1016 = vmatprep.subr.mxu0 0.0
    %1017 = vmatpush2.msra.mxu0 0.0
    %1018 = vmatprep.subr.mxu0 0.0
    %1019 = vmatpush2.msra.mxu0 0.0
    %1020 = vmatprep.subr.mxu0 0.0
    %1021 = vmatpush2.msra.mxu0 0.0
    %1022 = vmatprep.subr.mxu0 0.0
    %1023 = vmatpush2.msra.mxu0 0.0
    %1024 = vmatprep.subr.mxu0 0.0
    %1025 = vmatpush2.msra.mxu0 0.0
    %1026 = vmatprep.subr.mxu0 0.0
    %1027 = vmatpush2.msra.mxu0 0.0
    %1028 = vmatprep.subr.mxu0 0.0
    %1029 = vmatpush2.msra.mxu0 0.0
    %1030 = vmatprep.subr.mxu0 0.0
    %1031 = vmatpush2.msra.mxu0 0.0
    %1032 = vmatprep.mubr.f32.mxu0 0.0
    %v1033 = vand.u32 %v552, 4294901760
    %1034 = vmatmul.mubr.f32.gmra.mxu0 %v1033
    %v1035 = vpop.f32.mrf.mxu0
    %v1036 = vadd.f32 %v961, %v1035
    %v1037 = vpop.f32.mrf.mxu0
    %1038 = vdwg.mxu0
    %v1039 = vmul.f32 %v1036, %v1036
    %v1040 = vsel %vm51, %v1039, 0.0
    %v1041 = vrot.slane %v1040, 4
    %v1042 = vadd.f32 %v1040, %v1041
    %v1043 = vrot.slane %v1042, 2
    %v1044 = vadd.f32 %v1042, %v1043
    %v1045 = vrot.slane %v1044, 1
    %v1046 = vadd.f32 %v1044, %v1045
    %v1047 = vmax.f32 %v1046, 1e-24
    %v1048 = vrsqrt.pop %v1047
    %v1049 = vmul.f32 %v1036, %v1048
    %v1050 = vadd.f32 %v25, %v550
    %v1051 = vadd.f32 %v1050, %v1049
    %1056 = vrot.lane.b32.xlu0 %v30, 96
    %v1057 = vpop.permute.xlu0 %1056
    %1058 = vrot.lane.b32.xlu0 %v31, 96
    %v1059 = vpop.permute.xlu0 %1058
    %1060 = vrot.lane.b32.xlu0 %v32, 96
    %v1061 = vpop.permute.xlu0 %1060
    %1062 = vrot.lane.b32.xlu0 %v33, 96
    %v1063 = vpop.permute.xlu0 %1062
    %v1069 = vsel %vm51, %v1051, 0
    %1071 = vmatprep.subr.mxu0 0.0
    %1072 = vmatpush1.msra.mxu0 0.0
    %1073 = vmatprep.subr.mxu0 0.0
    %1074 = vmatpush1.msra.mxu0 0.0
    %1075 = vmatprep.subr.mxu0 0.0
    %1076 = vmatpush1.msra.mxu0 0.0
    %1077 = vmatprep.subr.mxu0 0.0
    %1078 = vmatpush1.msra.mxu0 0.0
    %1079 = vmatprep.subr.mxu0 0.0
    %1080 = vmatpush1.msra.mxu0 0.0
    %1081 = vmatprep.subr.mxu0 0.0
    %1082 = vmatpush1.msra.mxu0 0.0
    %1083 = vmatprep.subr.mxu0 0.0
    %1084 = vmatpush1.msra.mxu0 0.0
    %1085 = vmatprep.subr.mxu0 0.0
    %1086 = vmatpush1.msra.mxu0 0.0
    %1087 = vmatprep.subr.mxu0 0.0
    %1088 = vmatpush1.msra.mxu0 0.0
    %1089 = vmatprep.subr.mxu0 0.0
    %1090 = vmatpush1.msra.mxu0 0.0
    %1091 = vmatprep.subr.mxu0 0.0
    %1092 = vmatpush1.msra.mxu0 0.0
    %1093 = vmatprep.subr.mxu0 0.0
    %1094 = vmatpush1.msra.mxu0 0.0
    %1095 = vmatprep.subr.mxu0 0.0
    %v1096 = vand.u32 %v1063, 4294901760
    %1097 = vmatpush1.msra.mxu0 %v1096
    %1098 = vmatprep.subr.mxu0 0.0
    %v1099 = vand.u32 %v1061, 4294901760
    %1100 = vmatpush1.msra.mxu0 %v1099
    %1101 = vmatprep.subr.mxu0 0.0
    %v1102 = vand.u32 %v1059, 4294901760
    %1103 = vmatpush1.msra.mxu0 %v1102
    %1104 = vmatprep.subr.mxu0 0.0
    %v1105 = vand.u32 %v1057, 4294901760
    %1106 = vmatpush1.msra.mxu0 %v1105
    %1107 = vmatprep.subr.mxu0 0.0
    %1108 = vmatpush2.msra.mxu0 0.0
    %1109 = vmatprep.subr.mxu0 0.0
    %1110 = vmatpush2.msra.mxu0 0.0
    %1111 = vmatprep.subr.mxu0 0.0
    %1112 = vmatpush2.msra.mxu0 0.0
    %1113 = vmatprep.subr.mxu0 0.0
    %1114 = vmatpush2.msra.mxu0 0.0
    %1115 = vmatprep.subr.mxu0 0.0
    %1116 = vmatpush2.msra.mxu0 0.0
    %1117 = vmatprep.subr.mxu0 0.0
    %1118 = vmatpush2.msra.mxu0 0.0
    %1119 = vmatprep.subr.mxu0 0.0
    %1120 = vmatpush2.msra.mxu0 0.0
    %1121 = vmatprep.subr.mxu0 0.0
    %1122 = vmatpush2.msra.mxu0 0.0
    %1123 = vmatprep.subr.mxu0 0.0
    %1124 = vmatpush2.msra.mxu0 0.0
    %1125 = vmatprep.subr.mxu0 0.0
    %1126 = vmatpush2.msra.mxu0 0.0
    %1127 = vmatprep.subr.mxu0 0.0
    %1128 = vmatpush2.msra.mxu0 0.0
    %1129 = vmatprep.subr.mxu0 0.0
    %1130 = vmatpush2.msra.mxu0 0.0
    %1131 = vmatprep.subr.mxu0 0.0
    %1132 = vmatpush2.msra.mxu0 0.0
    %1133 = vmatprep.subr.mxu0 0.0
    %1134 = vmatpush2.msra.mxu0 0.0
    %1135 = vmatprep.subr.mxu0 0.0
    %1136 = vmatpush2.msra.mxu0 0.0
    %1137 = vmatprep.subr.mxu0 0.0
    %1138 = vmatpush2.msra.mxu0 0.0
    %1139 = vmatprep.mubr.f32.mxu0 0.0
    %v1140 = vand.u32 %v1069, 4294901760
    %v1141 = vsub.f32 %v1069, %v1140
    %v1142 = vand.u32 %v1141, 4294901760
    %v1143 = vsub.f32 %v1141, %v1142
    %v1144 = vand.u32 %v1143, 4294901760
    %1145 = vmatmul.mubr.f32.gmra.mxu0 %v1144
    %v1146 = vpop.f32.mrf.mxu0
    %v1147 = vadd.f32 0.0, %v1146
    %v1148 = vpop.f32.mrf.mxu0
    %1149 = vdwg.mxu0
    %1150 = vmatprep.subr.mxu0 0.0
    %1151 = vmatpush1.msra.mxu0 0.0
    %1152 = vmatprep.subr.mxu0 0.0
    %1153 = vmatpush1.msra.mxu0 0.0
    %1154 = vmatprep.subr.mxu0 0.0
    %1155 = vmatpush1.msra.mxu0 0.0
    %1156 = vmatprep.subr.mxu0 0.0
    %1157 = vmatpush1.msra.mxu0 0.0
    %1158 = vmatprep.subr.mxu0 0.0
    %1159 = vmatpush1.msra.mxu0 0.0
    %1160 = vmatprep.subr.mxu0 0.0
    %1161 = vmatpush1.msra.mxu0 0.0
    %1162 = vmatprep.subr.mxu0 0.0
    %1163 = vmatpush1.msra.mxu0 0.0
    %1164 = vmatprep.subr.mxu0 0.0
    %1165 = vmatpush1.msra.mxu0 0.0
    %1166 = vmatprep.subr.mxu0 0.0
    %1167 = vmatpush1.msra.mxu0 0.0
    %1168 = vmatprep.subr.mxu0 0.0
    %1169 = vmatpush1.msra.mxu0 0.0
    %1170 = vmatprep.subr.mxu0 0.0
    %1171 = vmatpush1.msra.mxu0 0.0
    %1172 = vmatprep.subr.mxu0 0.0
    %1173 = vmatpush1.msra.mxu0 0.0
    %1174 = vmatprep.subr.mxu0 0.0
    %v1175 = vand.u32 %v1063, 4294901760
    %v1176 = vsub.f32 %v1063, %v1175
    %v1177 = vand.u32 %v1176, 4294901760
    %v1178 = vsub.f32 %v1176, %v1177
    %v1179 = vand.u32 %v1178, 4294901760
    %1180 = vmatpush1.msra.mxu0 %v1179
    %1181 = vmatprep.subr.mxu0 0.0
    %v1182 = vand.u32 %v1061, 4294901760
    %v1183 = vsub.f32 %v1061, %v1182
    %v1184 = vand.u32 %v1183, 4294901760
    %v1185 = vsub.f32 %v1183, %v1184
    %v1186 = vand.u32 %v1185, 4294901760
    %1187 = vmatpush1.msra.mxu0 %v1186
    %1188 = vmatprep.subr.mxu0 0.0
    %v1189 = vand.u32 %v1059, 4294901760
    %v1190 = vsub.f32 %v1059, %v1189
    %v1191 = vand.u32 %v1190, 4294901760
    %v1192 = vsub.f32 %v1190, %v1191
    %v1193 = vand.u32 %v1192, 4294901760
    %1194 = vmatpush1.msra.mxu0 %v1193
    %1195 = vmatprep.subr.mxu0 0.0
    %v1196 = vand.u32 %v1057, 4294901760
    %v1197 = vsub.f32 %v1057, %v1196
    %v1198 = vand.u32 %v1197, 4294901760
    %v1199 = vsub.f32 %v1197, %v1198
    %v1200 = vand.u32 %v1199, 4294901760
    %1201 = vmatpush1.msra.mxu0 %v1200
    %1202 = vmatprep.subr.mxu0 0.0
    %1203 = vmatpush2.msra.mxu0 0.0
    %1204 = vmatprep.subr.mxu0 0.0
    %1205 = vmatpush2.msra.mxu0 0.0
    %1206 = vmatprep.subr.mxu0 0.0
    %1207 = vmatpush2.msra.mxu0 0.0
    %1208 = vmatprep.subr.mxu0 0.0
    %1209 = vmatpush2.msra.mxu0 0.0
    %1210 = vmatprep.subr.mxu0 0.0
    %1211 = vmatpush2.msra.mxu0 0.0
    %1212 = vmatprep.subr.mxu0 0.0
    %1213 = vmatpush2.msra.mxu0 0.0
    %1214 = vmatprep.subr.mxu0 0.0
    %1215 = vmatpush2.msra.mxu0 0.0
    %1216 = vmatprep.subr.mxu0 0.0
    %1217 = vmatpush2.msra.mxu0 0.0
    %1218 = vmatprep.subr.mxu0 0.0
    %1219 = vmatpush2.msra.mxu0 0.0
    %1220 = vmatprep.subr.mxu0 0.0
    %1221 = vmatpush2.msra.mxu0 0.0
    %1222 = vmatprep.subr.mxu0 0.0
    %1223 = vmatpush2.msra.mxu0 0.0
    %1224 = vmatprep.subr.mxu0 0.0
    %1225 = vmatpush2.msra.mxu0 0.0
    %1226 = vmatprep.subr.mxu0 0.0
    %1227 = vmatpush2.msra.mxu0 0.0
    %1228 = vmatprep.subr.mxu0 0.0
    %1229 = vmatpush2.msra.mxu0 0.0
    %1230 = vmatprep.subr.mxu0 0.0
    %1231 = vmatpush2.msra.mxu0 0.0
    %1232 = vmatprep.subr.mxu0 0.0
    %1233 = vmatpush2.msra.mxu0 0.0
    %1234 = vmatprep.mubr.f32.mxu0 0.0
    %v1235 = vand.u32 %v1069, 4294901760
    %1236 = vmatmul.mubr.f32.gmra.mxu0 %v1235
    %v1237 = vpop.f32.mrf.mxu0
    %v1238 = vadd.f32 %v1147, %v1237
    %v1239 = vpop.f32.mrf.mxu0
    %1240 = vdwg.mxu0
    %1241 = vmatprep.subr.mxu0 0.0
    %1242 = vmatpush1.msra.mxu0 0.0
    %1243 = vmatprep.subr.mxu0 0.0
    %1244 = vmatpush1.msra.mxu0 0.0
    %1245 = vmatprep.subr.mxu0 0.0
    %1246 = vmatpush1.msra.mxu0 0.0
    %1247 = vmatprep.subr.mxu0 0.0
    %1248 = vmatpush1.msra.mxu0 0.0
    %1249 = vmatprep.subr.mxu0 0.0
    %1250 = vmatpush1.msra.mxu0 0.0
    %1251 = vmatprep.subr.mxu0 0.0
    %1252 = vmatpush1.msra.mxu0 0.0
    %1253 = vmatprep.subr.mxu0 0.0
    %1254 = vmatpush1.msra.mxu0 0.0
    %1255 = vmatprep.subr.mxu0 0.0
    %1256 = vmatpush1.msra.mxu0 0.0
    %1257 = vmatprep.subr.mxu0 0.0
    %1258 = vmatpush1.msra.mxu0 0.0
    %1259 = vmatprep.subr.mxu0 0.0
    %1260 = vmatpush1.msra.mxu0 0.0
    %1261 = vmatprep.subr.mxu0 0.0
    %1262 = vmatpush1.msra.mxu0 0.0
    %1263 = vmatprep.subr.mxu0 0.0
    %1264 = vmatpush1.msra.mxu0 0.0
    %1265 = vmatprep.subr.mxu0 0.0
    %v1266 = vand.u32 %v1063, 4294901760
    %v1267 = vsub.f32 %v1063, %v1266
    %1268 = vmatpush1.msra.mxu0 %v1267
    %1269 = vmatprep.subr.mxu0 0.0
    %v1270 = vand.u32 %v1061, 4294901760
    %v1271 = vsub.f32 %v1061, %v1270
    %1272 = vmatpush1.msra.mxu0 %v1271
    %1273 = vmatprep.subr.mxu0 0.0
    %v1274 = vand.u32 %v1059, 4294901760
    %v1275 = vsub.f32 %v1059, %v1274
    %1276 = vmatpush1.msra.mxu0 %v1275
    %1277 = vmatprep.subr.mxu0 0.0
    %v1278 = vand.u32 %v1057, 4294901760
    %v1279 = vsub.f32 %v1057, %v1278
    %1280 = vmatpush1.msra.mxu0 %v1279
    %1281 = vmatprep.subr.mxu0 0.0
    %1282 = vmatpush2.msra.mxu0 0.0
    %1283 = vmatprep.subr.mxu0 0.0
    %1284 = vmatpush2.msra.mxu0 0.0
    %1285 = vmatprep.subr.mxu0 0.0
    %1286 = vmatpush2.msra.mxu0 0.0
    %1287 = vmatprep.subr.mxu0 0.0
    %1288 = vmatpush2.msra.mxu0 0.0
    %1289 = vmatprep.subr.mxu0 0.0
    %1290 = vmatpush2.msra.mxu0 0.0
    %1291 = vmatprep.subr.mxu0 0.0
    %1292 = vmatpush2.msra.mxu0 0.0
    %1293 = vmatprep.subr.mxu0 0.0
    %1294 = vmatpush2.msra.mxu0 0.0
    %1295 = vmatprep.subr.mxu0 0.0
    %1296 = vmatpush2.msra.mxu0 0.0
    %1297 = vmatprep.subr.mxu0 0.0
    %1298 = vmatpush2.msra.mxu0 0.0
    %1299 = vmatprep.subr.mxu0 0.0
    %1300 = vmatpush2.msra.mxu0 0.0
    %1301 = vmatprep.subr.mxu0 0.0
    %1302 = vmatpush2.msra.mxu0 0.0
    %1303 = vmatprep.subr.mxu0 0.0
    %1304 = vmatpush2.msra.mxu0 0.0
    %1305 = vmatprep.subr.mxu0 0.0
    %1306 = vmatpush2.msra.mxu0 0.0
    %1307 = vmatprep.subr.mxu0 0.0
    %1308 = vmatpush2.msra.mxu0 0.0
    %1309 = vmatprep.subr.mxu0 0.0
    %1310 = vmatpush2.msra.mxu0 0.0
    %1311 = vmatprep.subr.mxu0 0.0
    %1312 = vmatpush2.msra.mxu0 0.0
    %1313 = vmatprep.mubr.f32.mxu0 0.0
    %v1314 = vand.u32 %v1069, 4294901760
    %v1315 = vsub.f32 %v1069, %v1314
    %1316 = vmatmul.mubr.f32.gmra.mxu0 %v1315
    %v1317 = vpop.f32.mrf.mxu0
    %v1318 = vadd.f32 %v1238, %v1317
    %v1319 = vpop.f32.mrf.mxu0
    %1320 = vdwg.mxu0
    %1321 = vmatprep.subr.mxu0 0.0
    %1322 = vmatpush1.msra.mxu0 0.0
    %1323 = vmatprep.subr.mxu0 0.0
    %1324 = vmatpush1.msra.mxu0 0.0
    %1325 = vmatprep.subr.mxu0 0.0
    %1326 = vmatpush1.msra.mxu0 0.0
    %1327 = vmatprep.subr.mxu0 0.0
    %1328 = vmatpush1.msra.mxu0 0.0
    %1329 = vmatprep.subr.mxu0 0.0
    %1330 = vmatpush1.msra.mxu0 0.0
    %1331 = vmatprep.subr.mxu0 0.0
    %1332 = vmatpush1.msra.mxu0 0.0
    %1333 = vmatprep.subr.mxu0 0.0
    %1334 = vmatpush1.msra.mxu0 0.0
    %1335 = vmatprep.subr.mxu0 0.0
    %1336 = vmatpush1.msra.mxu0 0.0
    %1337 = vmatprep.subr.mxu0 0.0
    %1338 = vmatpush1.msra.mxu0 0.0
    %1339 = vmatprep.subr.mxu0 0.0
    %1340 = vmatpush1.msra.mxu0 0.0
    %1341 = vmatprep.subr.mxu0 0.0
    %1342 = vmatpush1.msra.mxu0 0.0
    %1343 = vmatprep.subr.mxu0 0.0
    %1344 = vmatpush1.msra.mxu0 0.0
    %1345 = vmatprep.subr.mxu0 0.0
    %v1346 = vand.u32 %v1063, 4294901760
    %1347 = vmatpush1.msra.mxu0 %v1346
    %1348 = vmatprep.subr.mxu0 0.0
    %v1349 = vand.u32 %v1061, 4294901760
    %1350 = vmatpush1.msra.mxu0 %v1349
    %1351 = vmatprep.subr.mxu0 0.0
    %v1352 = vand.u32 %v1059, 4294901760
    %1353 = vmatpush1.msra.mxu0 %v1352
    %1354 = vmatprep.subr.mxu0 0.0
    %v1355 = vand.u32 %v1057, 4294901760
    %1356 = vmatpush1.msra.mxu0 %v1355
    %1357 = vmatprep.subr.mxu0 0.0
    %1358 = vmatpush2.msra.mxu0 0.0
    %1359 = vmatprep.subr.mxu0 0.0
    %1360 = vmatpush2.msra.mxu0 0.0
    %1361 = vmatprep.subr.mxu0 0.0
    %1362 = vmatpush2.msra.mxu0 0.0
    %1363 = vmatprep.subr.mxu0 0.0
    %1364 = vmatpush2.msra.mxu0 0.0
    %1365 = vmatprep.subr.mxu0 0.0
    %1366 = vmatpush2.msra.mxu0 0.0
    %1367 = vmatprep.subr.mxu0 0.0
    %1368 = vmatpush2.msra.mxu0 0.0
    %1369 = vmatprep.subr.mxu0 0.0
    %1370 = vmatpush2.msra.mxu0 0.0
    %1371 = vmatprep.subr.mxu0 0.0
    %1372 = vmatpush2.msra.mxu0 0.0
    %1373 = vmatprep.subr.mxu0 0.0
    %1374 = vmatpush2.msra.mxu0 0.0
    %1375 = vmatprep.subr.mxu0 0.0
    %1376 = vmatpush2.msra.mxu0 0.0
    %1377 = vmatprep.subr.mxu0 0.0
    %1378 = vmatpush2.msra.mxu0 0.0
    %1379 = vmatprep.subr.mxu0 0.0
    %1380 = vmatpush2.msra.mxu0 0.0
    %1381 = vmatprep.subr.mxu0 0.0
    %1382 = vmatpush2.msra.mxu0 0.0
    %1383 = vmatprep.subr.mxu0 0.0
    %1384 = vmatpush2.msra.mxu0 0.0
    %1385 = vmatprep.subr.mxu0 0.0
    %1386 = vmatpush2.msra.mxu0 0.0
    %1387 = vmatprep.subr.mxu0 0.0
    %1388 = vmatpush2.msra.mxu0 0.0
    %1389 = vmatprep.mubr.f32.mxu0 0.0
    %v1390 = vand.u32 %v1069, 4294901760
    %v1391 = vsub.f32 %v1069, %v1390
    %v1392 = vand.u32 %v1391, 4294901760
    %1393 = vmatmul.mubr.f32.gmra.mxu0 %v1392
    %v1394 = vpop.f32.mrf.mxu0
    %v1395 = vadd.f32 %v1318, %v1394
    %v1396 = vpop.f32.mrf.mxu0
    %1397 = vdwg.mxu0
    %1398 = vmatprep.subr.mxu0 0.0
    %1399 = vmatpush1.msra.mxu0 0.0
    %1400 = vmatprep.subr.mxu0 0.0
    %1401 = vmatpush1.msra.mxu0 0.0
    %1402 = vmatprep.subr.mxu0 0.0
    %1403 = vmatpush1.msra.mxu0 0.0
    %1404 = vmatprep.subr.mxu0 0.0
    %1405 = vmatpush1.msra.mxu0 0.0
    %1406 = vmatprep.subr.mxu0 0.0
    %1407 = vmatpush1.msra.mxu0 0.0
    %1408 = vmatprep.subr.mxu0 0.0
    %1409 = vmatpush1.msra.mxu0 0.0
    %1410 = vmatprep.subr.mxu0 0.0
    %1411 = vmatpush1.msra.mxu0 0.0
    %1412 = vmatprep.subr.mxu0 0.0
    %1413 = vmatpush1.msra.mxu0 0.0
    %1414 = vmatprep.subr.mxu0 0.0
    %1415 = vmatpush1.msra.mxu0 0.0
    %1416 = vmatprep.subr.mxu0 0.0
    %1417 = vmatpush1.msra.mxu0 0.0
    %1418 = vmatprep.subr.mxu0 0.0
    %1419 = vmatpush1.msra.mxu0 0.0
    %1420 = vmatprep.subr.mxu0 0.0
    %1421 = vmatpush1.msra.mxu0 0.0
    %1422 = vmatprep.subr.mxu0 0.0
    %v1423 = vand.u32 %v1063, 4294901760
    %v1424 = vsub.f32 %v1063, %v1423
    %v1425 = vand.u32 %v1424, 4294901760
    %1426 = vmatpush1.msra.mxu0 %v1425
    %1427 = vmatprep.subr.mxu0 0.0
    %v1428 = vand.u32 %v1061, 4294901760
    %v1429 = vsub.f32 %v1061, %v1428
    %v1430 = vand.u32 %v1429, 4294901760
    %1431 = vmatpush1.msra.mxu0 %v1430
    %1432 = vmatprep.subr.mxu0 0.0
    %v1433 = vand.u32 %v1059, 4294901760
    %v1434 = vsub.f32 %v1059, %v1433
    %v1435 = vand.u32 %v1434, 4294901760
    %1436 = vmatpush1.msra.mxu0 %v1435
    %1437 = vmatprep.subr.mxu0 0.0
    %v1438 = vand.u32 %v1057, 4294901760
    %v1439 = vsub.f32 %v1057, %v1438
    %v1440 = vand.u32 %v1439, 4294901760
    %1441 = vmatpush1.msra.mxu0 %v1440
    %1442 = vmatprep.subr.mxu0 0.0
    %1443 = vmatpush2.msra.mxu0 0.0
    %1444 = vmatprep.subr.mxu0 0.0
    %1445 = vmatpush2.msra.mxu0 0.0
    %1446 = vmatprep.subr.mxu0 0.0
    %1447 = vmatpush2.msra.mxu0 0.0
    %1448 = vmatprep.subr.mxu0 0.0
    %1449 = vmatpush2.msra.mxu0 0.0
    %1450 = vmatprep.subr.mxu0 0.0
    %1451 = vmatpush2.msra.mxu0 0.0
    %1452 = vmatprep.subr.mxu0 0.0
    %1453 = vmatpush2.msra.mxu0 0.0
    %1454 = vmatprep.subr.mxu0 0.0
    %1455 = vmatpush2.msra.mxu0 0.0
    %1456 = vmatprep.subr.mxu0 0.0
    %1457 = vmatpush2.msra.mxu0 0.0
    %1458 = vmatprep.subr.mxu0 0.0
    %1459 = vmatpush2.msra.mxu0 0.0
    %1460 = vmatprep.subr.mxu0 0.0
    %1461 = vmatpush2.msra.mxu0 0.0
    %1462 = vmatprep.subr.mxu0 0.0
    %1463 = vmatpush2.msra.mxu0 0.0
    %1464 = vmatprep.subr.mxu0 0.0
    %1465 = vmatpush2.msra.mxu0 0.0
    %1466 = vmatprep.subr.mxu0 0.0
    %1467 = vmatpush2.msra.mxu0 0.0
    %1468 = vmatprep.subr.mxu0 0.0
    %1469 = vmatpush2.msra.mxu0 0.0
    %1470 = vmatprep.subr.mxu0 0.0
    %1471 = vmatpush2.msra.mxu0 0.0
    %1472 = vmatprep.subr.mxu0 0.0
    %1473 = vmatpush2.msra.mxu0 0.0
    %1474 = vmatprep.mubr.f32.mxu0 0.0
    %v1475 = vand.u32 %v1069, 4294901760
    %1476 = vmatmul.mubr.f32.gmra.mxu0 %v1475
    %v1477 = vpop.f32.mrf.mxu0
    %v1478 = vadd.f32 %v1395, %v1477
    %v1479 = vpop.f32.mrf.mxu0
    %1480 = vdwg.mxu0
    %1481 = vmatprep.subr.mxu0 0.0
    %1482 = vmatpush1.msra.mxu0 0.0
    %1483 = vmatprep.subr.mxu0 0.0
    %1484 = vmatpush1.msra.mxu0 0.0
    %1485 = vmatprep.subr.mxu0 0.0
    %1486 = vmatpush1.msra.mxu0 0.0
    %1487 = vmatprep.subr.mxu0 0.0
    %1488 = vmatpush1.msra.mxu0 0.0
    %1489 = vmatprep.subr.mxu0 0.0
    %1490 = vmatpush1.msra.mxu0 0.0
    %1491 = vmatprep.subr.mxu0 0.0
    %1492 = vmatpush1.msra.mxu0 0.0
    %1493 = vmatprep.subr.mxu0 0.0
    %1494 = vmatpush1.msra.mxu0 0.0
    %1495 = vmatprep.subr.mxu0 0.0
    %1496 = vmatpush1.msra.mxu0 0.0
    %1497 = vmatprep.subr.mxu0 0.0
    %1498 = vmatpush1.msra.mxu0 0.0
    %1499 = vmatprep.subr.mxu0 0.0
    %1500 = vmatpush1.msra.mxu0 0.0
    %1501 = vmatprep.subr.mxu0 0.0
    %1502 = vmatpush1.msra.mxu0 0.0
    %1503 = vmatprep.subr.mxu0 0.0
    %1504 = vmatpush1.msra.mxu0 0.0
    %1505 = vmatprep.subr.mxu0 0.0
    %v1506 = vand.u32 %v1063, 4294901760
    %1507 = vmatpush1.msra.mxu0 %v1506
    %1508 = vmatprep.subr.mxu0 0.0
    %v1509 = vand.u32 %v1061, 4294901760
    %1510 = vmatpush1.msra.mxu0 %v1509
    %1511 = vmatprep.subr.mxu0 0.0
    %v1512 = vand.u32 %v1059, 4294901760
    %1513 = vmatpush1.msra.mxu0 %v1512
    %1514 = vmatprep.subr.mxu0 0.0
    %v1515 = vand.u32 %v1057, 4294901760
    %1516 = vmatpush1.msra.mxu0 %v1515
    %1517 = vmatprep.subr.mxu0 0.0
    %1518 = vmatpush2.msra.mxu0 0.0
    %1519 = vmatprep.subr.mxu0 0.0
    %1520 = vmatpush2.msra.mxu0 0.0
    %1521 = vmatprep.subr.mxu0 0.0
    %1522 = vmatpush2.msra.mxu0 0.0
    %1523 = vmatprep.subr.mxu0 0.0
    %1524 = vmatpush2.msra.mxu0 0.0
    %1525 = vmatprep.subr.mxu0 0.0
    %1526 = vmatpush2.msra.mxu0 0.0
    %1527 = vmatprep.subr.mxu0 0.0
    %1528 = vmatpush2.msra.mxu0 0.0
    %1529 = vmatprep.subr.mxu0 0.0
    %1530 = vmatpush2.msra.mxu0 0.0
    %1531 = vmatprep.subr.mxu0 0.0
    %1532 = vmatpush2.msra.mxu0 0.0
    %1533 = vmatprep.subr.mxu0 0.0
    %1534 = vmatpush2.msra.mxu0 0.0
    %1535 = vmatprep.subr.mxu0 0.0
    %1536 = vmatpush2.msra.mxu0 0.0
    %1537 = vmatprep.subr.mxu0 0.0
    %1538 = vmatpush2.msra.mxu0 0.0
    %1539 = vmatprep.subr.mxu0 0.0
    %1540 = vmatpush2.msra.mxu0 0.0
    %1541 = vmatprep.subr.mxu0 0.0
    %1542 = vmatpush2.msra.mxu0 0.0
    %1543 = vmatprep.subr.mxu0 0.0
    %1544 = vmatpush2.msra.mxu0 0.0
    %1545 = vmatprep.subr.mxu0 0.0
    %1546 = vmatpush2.msra.mxu0 0.0
    %1547 = vmatprep.subr.mxu0 0.0
    %1548 = vmatpush2.msra.mxu0 0.0
    %1549 = vmatprep.mubr.f32.mxu0 0.0
    %v1550 = vand.u32 %v1069, 4294901760
    %1551 = vmatmul.mubr.f32.gmra.mxu0 %v1550
    %v1552 = vpop.f32.mrf.mxu0
    %v1553 = vadd.f32 %v1478, %v1552
    %v1554 = vpop.f32.mrf.mxu0
    %1555 = vdwg.mxu0
    %1556 = vrot.lane.b32.xlu0 %v25, 96
    %v1557 = vpop.permute.xlu0 %1556
    %v1558 = vsel %vm51, %v1557, 0
    %1560 = vmatprep.subr.mxu0 0.0
    %1561 = vmatpush1.msra.mxu0 0.0
    %1562 = vmatprep.subr.mxu0 0.0
    %1563 = vmatpush1.msra.mxu0 0.0
    %1564 = vmatprep.subr.mxu0 0.0
    %1565 = vmatpush1.msra.mxu0 0.0
    %1566 = vmatprep.subr.mxu0 0.0
    %1567 = vmatpush1.msra.mxu0 0.0
    %1568 = vmatprep.subr.mxu0 0.0
    %1569 = vmatpush1.msra.mxu0 0.0
    %1570 = vmatprep.subr.mxu0 0.0
    %1571 = vmatpush1.msra.mxu0 0.0
    %1572 = vmatprep.subr.mxu0 0.0
    %1573 = vmatpush1.msra.mxu0 0.0
    %1574 = vmatprep.subr.mxu0 0.0
    %1575 = vmatpush1.msra.mxu0 0.0
    %1576 = vmatprep.subr.mxu0 0.0
    %1577 = vmatpush1.msra.mxu0 0.0
    %1578 = vmatprep.subr.mxu0 0.0
    %1579 = vmatpush1.msra.mxu0 0.0
    %1580 = vmatprep.subr.mxu0 0.0
    %1581 = vmatpush1.msra.mxu0 0.0
    %1582 = vmatprep.subr.mxu0 0.0
    %1583 = vmatpush1.msra.mxu0 0.0
    %1584 = vmatprep.subr.mxu0 0.0
    %v1585 = vand.u32 %v33, 4294901760
    %1586 = vmatpush1.msra.mxu0 %v1585
    %1587 = vmatprep.subr.mxu0 0.0
    %v1588 = vand.u32 %v32, 4294901760
    %1589 = vmatpush1.msra.mxu0 %v1588
    %1590 = vmatprep.subr.mxu0 0.0
    %v1591 = vand.u32 %v31, 4294901760
    %1592 = vmatpush1.msra.mxu0 %v1591
    %1593 = vmatprep.subr.mxu0 0.0
    %v1594 = vand.u32 %v30, 4294901760
    %1595 = vmatpush1.msra.mxu0 %v1594
    %1596 = vmatprep.subr.mxu0 0.0
    %1597 = vmatpush2.msra.mxu0 0.0
    %1598 = vmatprep.subr.mxu0 0.0
    %1599 = vmatpush2.msra.mxu0 0.0
    %1600 = vmatprep.subr.mxu0 0.0
    %1601 = vmatpush2.msra.mxu0 0.0
    %1602 = vmatprep.subr.mxu0 0.0
    %1603 = vmatpush2.msra.mxu0 0.0
    %1604 = vmatprep.subr.mxu0 0.0
    %1605 = vmatpush2.msra.mxu0 0.0
    %1606 = vmatprep.subr.mxu0 0.0
    %1607 = vmatpush2.msra.mxu0 0.0
    %1608 = vmatprep.subr.mxu0 0.0
    %1609 = vmatpush2.msra.mxu0 0.0
    %1610 = vmatprep.subr.mxu0 0.0
    %1611 = vmatpush2.msra.mxu0 0.0
    %1612 = vmatprep.subr.mxu0 0.0
    %1613 = vmatpush2.msra.mxu0 0.0
    %1614 = vmatprep.subr.mxu0 0.0
    %1615 = vmatpush2.msra.mxu0 0.0
    %1616 = vmatprep.subr.mxu0 0.0
    %1617 = vmatpush2.msra.mxu0 0.0
    %1618 = vmatprep.subr.mxu0 0.0
    %1619 = vmatpush2.msra.mxu0 0.0
    %1620 = vmatprep.subr.mxu0 0.0
    %1621 = vmatpush2.msra.mxu0 0.0
    %1622 = vmatprep.subr.mxu0 0.0
    %1623 = vmatpush2.msra.mxu0 0.0
    %1624 = vmatprep.subr.mxu0 0.0
    %1625 = vmatpush2.msra.mxu0 0.0
    %1626 = vmatprep.subr.mxu0 0.0
    %1627 = vmatpush2.msra.mxu0 0.0
    %1628 = vmatprep.mubr.f32.mxu0 0.0
    %v1629 = vand.u32 %v1558, 4294901760
    %v1630 = vsub.f32 %v1558, %v1629
    %v1631 = vand.u32 %v1630, 4294901760
    %v1632 = vsub.f32 %v1630, %v1631
    %v1633 = vand.u32 %v1632, 4294901760
    %1634 = vmatmul.mubr.f32.gmra.mxu0 %v1633
    %v1635 = vpop.f32.mrf.mxu0
    %v1636 = vadd.f32 %v1553, %v1635
    %v1637 = vpop.f32.mrf.mxu0
    %1638 = vdwg.mxu0
    %1639 = vmatprep.subr.mxu0 0.0
    %1640 = vmatpush1.msra.mxu0 0.0
    %1641 = vmatprep.subr.mxu0 0.0
    %1642 = vmatpush1.msra.mxu0 0.0
    %1643 = vmatprep.subr.mxu0 0.0
    %1644 = vmatpush1.msra.mxu0 0.0
    %1645 = vmatprep.subr.mxu0 0.0
    %1646 = vmatpush1.msra.mxu0 0.0
    %1647 = vmatprep.subr.mxu0 0.0
    %1648 = vmatpush1.msra.mxu0 0.0
    %1649 = vmatprep.subr.mxu0 0.0
    %1650 = vmatpush1.msra.mxu0 0.0
    %1651 = vmatprep.subr.mxu0 0.0
    %1652 = vmatpush1.msra.mxu0 0.0
    %1653 = vmatprep.subr.mxu0 0.0
    %1654 = vmatpush1.msra.mxu0 0.0
    %1655 = vmatprep.subr.mxu0 0.0
    %1656 = vmatpush1.msra.mxu0 0.0
    %1657 = vmatprep.subr.mxu0 0.0
    %1658 = vmatpush1.msra.mxu0 0.0
    %1659 = vmatprep.subr.mxu0 0.0
    %1660 = vmatpush1.msra.mxu0 0.0
    %1661 = vmatprep.subr.mxu0 0.0
    %1662 = vmatpush1.msra.mxu0 0.0
    %1663 = vmatprep.subr.mxu0 0.0
    %v1664 = vand.u32 %v33, 4294901760
    %v1665 = vsub.f32 %v33, %v1664
    %v1666 = vand.u32 %v1665, 4294901760
    %v1667 = vsub.f32 %v1665, %v1666
    %v1668 = vand.u32 %v1667, 4294901760
    %1669 = vmatpush1.msra.mxu0 %v1668
    %1670 = vmatprep.subr.mxu0 0.0
    %v1671 = vand.u32 %v32, 4294901760
    %v1672 = vsub.f32 %v32, %v1671
    %v1673 = vand.u32 %v1672, 4294901760
    %v1674 = vsub.f32 %v1672, %v1673
    %v1675 = vand.u32 %v1674, 4294901760
    %1676 = vmatpush1.msra.mxu0 %v1675
    %1677 = vmatprep.subr.mxu0 0.0
    %v1678 = vand.u32 %v31, 4294901760
    %v1679 = vsub.f32 %v31, %v1678
    %v1680 = vand.u32 %v1679, 4294901760
    %v1681 = vsub.f32 %v1679, %v1680
    %v1682 = vand.u32 %v1681, 4294901760
    %1683 = vmatpush1.msra.mxu0 %v1682
    %1684 = vmatprep.subr.mxu0 0.0
    %v1685 = vand.u32 %v30, 4294901760
    %v1686 = vsub.f32 %v30, %v1685
    %v1687 = vand.u32 %v1686, 4294901760
    %v1688 = vsub.f32 %v1686, %v1687
    %v1689 = vand.u32 %v1688, 4294901760
    %1690 = vmatpush1.msra.mxu0 %v1689
    %1691 = vmatprep.subr.mxu0 0.0
    %1692 = vmatpush2.msra.mxu0 0.0
    %1693 = vmatprep.subr.mxu0 0.0
    %1694 = vmatpush2.msra.mxu0 0.0
    %1695 = vmatprep.subr.mxu0 0.0
    %1696 = vmatpush2.msra.mxu0 0.0
    %1697 = vmatprep.subr.mxu0 0.0
    %1698 = vmatpush2.msra.mxu0 0.0
    %1699 = vmatprep.subr.mxu0 0.0
    %1700 = vmatpush2.msra.mxu0 0.0
    %1701 = vmatprep.subr.mxu0 0.0
    %1702 = vmatpush2.msra.mxu0 0.0
    %1703 = vmatprep.subr.mxu0 0.0
    %1704 = vmatpush2.msra.mxu0 0.0
    %1705 = vmatprep.subr.mxu0 0.0
    %1706 = vmatpush2.msra.mxu0 0.0
    %1707 = vmatprep.subr.mxu0 0.0
    %1708 = vmatpush2.msra.mxu0 0.0
    %1709 = vmatprep.subr.mxu0 0.0
    %1710 = vmatpush2.msra.mxu0 0.0
    %1711 = vmatprep.subr.mxu0 0.0
    %1712 = vmatpush2.msra.mxu0 0.0
    %1713 = vmatprep.subr.mxu0 0.0
    %1714 = vmatpush2.msra.mxu0 0.0
    %1715 = vmatprep.subr.mxu0 0.0
    %1716 = vmatpush2.msra.mxu0 0.0
    %1717 = vmatprep.subr.mxu0 0.0
    %1718 = vmatpush2.msra.mxu0 0.0
    %1719 = vmatprep.subr.mxu0 0.0
    %1720 = vmatpush2.msra.mxu0 0.0
    %1721 = vmatprep.subr.mxu0 0.0
    %1722 = vmatpush2.msra.mxu0 0.0
    %1723 = vmatprep.mubr.f32.mxu0 0.0
    %v1724 = vand.u32 %v1558, 4294901760
    %1725 = vmatmul.mubr.f32.gmra.mxu0 %v1724
    %v1726 = vpop.f32.mrf.mxu0
    %v1727 = vadd.f32 %v1636, %v1726
    %v1728 = vpop.f32.mrf.mxu0
    %1729 = vdwg.mxu0
    %1730 = vmatprep.subr.mxu0 0.0
    %1731 = vmatpush1.msra.mxu0 0.0
    %1732 = vmatprep.subr.mxu0 0.0
    %1733 = vmatpush1.msra.mxu0 0.0
    %1734 = vmatprep.subr.mxu0 0.0
    %1735 = vmatpush1.msra.mxu0 0.0
    %1736 = vmatprep.subr.mxu0 0.0
    %1737 = vmatpush1.msra.mxu0 0.0
    %1738 = vmatprep.subr.mxu0 0.0
    %1739 = vmatpush1.msra.mxu0 0.0
    %1740 = vmatprep.subr.mxu0 0.0
    %1741 = vmatpush1.msra.mxu0 0.0
    %1742 = vmatprep.subr.mxu0 0.0
    %1743 = vmatpush1.msra.mxu0 0.0
    %1744 = vmatprep.subr.mxu0 0.0
    %1745 = vmatpush1.msra.mxu0 0.0
    %1746 = vmatprep.subr.mxu0 0.0
    %1747 = vmatpush1.msra.mxu0 0.0
    %1748 = vmatprep.subr.mxu0 0.0
    %1749 = vmatpush1.msra.mxu0 0.0
    %1750 = vmatprep.subr.mxu0 0.0
    %1751 = vmatpush1.msra.mxu0 0.0
    %1752 = vmatprep.subr.mxu0 0.0
    %1753 = vmatpush1.msra.mxu0 0.0
    %1754 = vmatprep.subr.mxu0 0.0
    %v1755 = vand.u32 %v33, 4294901760
    %v1756 = vsub.f32 %v33, %v1755
    %1757 = vmatpush1.msra.mxu0 %v1756
    %1758 = vmatprep.subr.mxu0 0.0
    %v1759 = vand.u32 %v32, 4294901760
    %v1760 = vsub.f32 %v32, %v1759
    %1761 = vmatpush1.msra.mxu0 %v1760
    %1762 = vmatprep.subr.mxu0 0.0
    %v1763 = vand.u32 %v31, 4294901760
    %v1764 = vsub.f32 %v31, %v1763
    %1765 = vmatpush1.msra.mxu0 %v1764
    %1766 = vmatprep.subr.mxu0 0.0
    %v1767 = vand.u32 %v30, 4294901760
    %v1768 = vsub.f32 %v30, %v1767
    %1769 = vmatpush1.msra.mxu0 %v1768
    %1770 = vmatprep.subr.mxu0 0.0
    %1771 = vmatpush2.msra.mxu0 0.0
    %1772 = vmatprep.subr.mxu0 0.0
    %1773 = vmatpush2.msra.mxu0 0.0
    %1774 = vmatprep.subr.mxu0 0.0
    %1775 = vmatpush2.msra.mxu0 0.0
    %1776 = vmatprep.subr.mxu0 0.0
    %1777 = vmatpush2.msra.mxu0 0.0
    %1778 = vmatprep.subr.mxu0 0.0
    %1779 = vmatpush2.msra.mxu0 0.0
    %1780 = vmatprep.subr.mxu0 0.0
    %1781 = vmatpush2.msra.mxu0 0.0
    %1782 = vmatprep.subr.mxu0 0.0
    %1783 = vmatpush2.msra.mxu0 0.0
    %1784 = vmatprep.subr.mxu0 0.0
    %1785 = vmatpush2.msra.mxu0 0.0
    %1786 = vmatprep.subr.mxu0 0.0
    %1787 = vmatpush2.msra.mxu0 0.0
    %1788 = vmatprep.subr.mxu0 0.0
    %1789 = vmatpush2.msra.mxu0 0.0
    %1790 = vmatprep.subr.mxu0 0.0
    %1791 = vmatpush2.msra.mxu0 0.0
    %1792 = vmatprep.subr.mxu0 0.0
    %1793 = vmatpush2.msra.mxu0 0.0
    %1794 = vmatprep.subr.mxu0 0.0
    %1795 = vmatpush2.msra.mxu0 0.0
    %1796 = vmatprep.subr.mxu0 0.0
    %1797 = vmatpush2.msra.mxu0 0.0
    %1798 = vmatprep.subr.mxu0 0.0
    %1799 = vmatpush2.msra.mxu0 0.0
    %1800 = vmatprep.subr.mxu0 0.0
    %1801 = vmatpush2.msra.mxu0 0.0
    %1802 = vmatprep.mubr.f32.mxu0 0.0
    %v1803 = vand.u32 %v1558, 4294901760
    %v1804 = vsub.f32 %v1558, %v1803
    %1805 = vmatmul.mubr.f32.gmra.mxu0 %v1804
    %v1806 = vpop.f32.mrf.mxu0
    %v1807 = vadd.f32 %v1727, %v1806
    %v1808 = vpop.f32.mrf.mxu0
    %1809 = vdwg.mxu0
    %1810 = vmatprep.subr.mxu0 0.0
    %1811 = vmatpush1.msra.mxu0 0.0
    %1812 = vmatprep.subr.mxu0 0.0
    %1813 = vmatpush1.msra.mxu0 0.0
    %1814 = vmatprep.subr.mxu0 0.0
    %1815 = vmatpush1.msra.mxu0 0.0
    %1816 = vmatprep.subr.mxu0 0.0
    %1817 = vmatpush1.msra.mxu0 0.0
    %1818 = vmatprep.subr.mxu0 0.0
    %1819 = vmatpush1.msra.mxu0 0.0
    %1820 = vmatprep.subr.mxu0 0.0
    %1821 = vmatpush1.msra.mxu0 0.0
    %1822 = vmatprep.subr.mxu0 0.0
    %1823 = vmatpush1.msra.mxu0 0.0
    %1824 = vmatprep.subr.mxu0 0.0
    %1825 = vmatpush1.msra.mxu0 0.0
    %1826 = vmatprep.subr.mxu0 0.0
    %1827 = vmatpush1.msra.mxu0 0.0
    %1828 = vmatprep.subr.mxu0 0.0
    %1829 = vmatpush1.msra.mxu0 0.0
    %1830 = vmatprep.subr.mxu0 0.0
    %1831 = vmatpush1.msra.mxu0 0.0
    %1832 = vmatprep.subr.mxu0 0.0
    %1833 = vmatpush1.msra.mxu0 0.0
    %1834 = vmatprep.subr.mxu0 0.0
    %v1835 = vand.u32 %v33, 4294901760
    %1836 = vmatpush1.msra.mxu0 %v1835
    %1837 = vmatprep.subr.mxu0 0.0
    %v1838 = vand.u32 %v32, 4294901760
    %1839 = vmatpush1.msra.mxu0 %v1838
    %1840 = vmatprep.subr.mxu0 0.0
    %v1841 = vand.u32 %v31, 4294901760
    %1842 = vmatpush1.msra.mxu0 %v1841
    %1843 = vmatprep.subr.mxu0 0.0
    %v1844 = vand.u32 %v30, 4294901760
    %1845 = vmatpush1.msra.mxu0 %v1844
    %1846 = vmatprep.subr.mxu0 0.0
    %1847 = vmatpush2.msra.mxu0 0.0
    %1848 = vmatprep.subr.mxu0 0.0
    %1849 = vmatpush2.msra.mxu0 0.0
    %1850 = vmatprep.subr.mxu0 0.0
    %1851 = vmatpush2.msra.mxu0 0.0
    %1852 = vmatprep.subr.mxu0 0.0
    %1853 = vmatpush2.msra.mxu0 0.0
    %1854 = vmatprep.subr.mxu0 0.0
    %1855 = vmatpush2.msra.mxu0 0.0
    %1856 = vmatprep.subr.mxu0 0.0
    %1857 = vmatpush2.msra.mxu0 0.0
    %1858 = vmatprep.subr.mxu0 0.0
    %1859 = vmatpush2.msra.mxu0 0.0
    %1860 = vmatprep.subr.mxu0 0.0
    %1861 = vmatpush2.msra.mxu0 0.0
    %1862 = vmatprep.subr.mxu0 0.0
    %1863 = vmatpush2.msra.mxu0 0.0
    %1864 = vmatprep.subr.mxu0 0.0
    %1865 = vmatpush2.msra.mxu0 0.0
    %1866 = vmatprep.subr.mxu0 0.0
    %1867 = vmatpush2.msra.mxu0 0.0
    %1868 = vmatprep.subr.mxu0 0.0
    %1869 = vmatpush2.msra.mxu0 0.0
    %1870 = vmatprep.subr.mxu0 0.0
    %1871 = vmatpush2.msra.mxu0 0.0
    %1872 = vmatprep.subr.mxu0 0.0
    %1873 = vmatpush2.msra.mxu0 0.0
    %1874 = vmatprep.subr.mxu0 0.0
    %1875 = vmatpush2.msra.mxu0 0.0
    %1876 = vmatprep.subr.mxu0 0.0
    %1877 = vmatpush2.msra.mxu0 0.0
    %1878 = vmatprep.mubr.f32.mxu0 0.0
    %v1879 = vand.u32 %v1558, 4294901760
    %v1880 = vsub.f32 %v1558, %v1879
    %v1881 = vand.u32 %v1880, 4294901760
    %1882 = vmatmul.mubr.f32.gmra.mxu0 %v1881
    %v1883 = vpop.f32.mrf.mxu0
    %v1884 = vadd.f32 %v1807, %v1883
    %v1885 = vpop.f32.mrf.mxu0
    %1886 = vdwg.mxu0
    %1887 = vmatprep.subr.mxu0 0.0
    %1888 = vmatpush1.msra.mxu0 0.0
    %1889 = vmatprep.subr.mxu0 0.0
    %1890 = vmatpush1.msra.mxu0 0.0
    %1891 = vmatprep.subr.mxu0 0.0
    %1892 = vmatpush1.msra.mxu0 0.0
    %1893 = vmatprep.subr.mxu0 0.0
    %1894 = vmatpush1.msra.mxu0 0.0
    %1895 = vmatprep.subr.mxu0 0.0
    %1896 = vmatpush1.msra.mxu0 0.0
    %1897 = vmatprep.subr.mxu0 0.0
    %1898 = vmatpush1.msra.mxu0 0.0
    %1899 = vmatprep.subr.mxu0 0.0
    %1900 = vmatpush1.msra.mxu0 0.0
    %1901 = vmatprep.subr.mxu0 0.0
    %1902 = vmatpush1.msra.mxu0 0.0
    %1903 = vmatprep.subr.mxu0 0.0
    %1904 = vmatpush1.msra.mxu0 0.0
    %1905 = vmatprep.subr.mxu0 0.0
    %1906 = vmatpush1.msra.mxu0 0.0
    %1907 = vmatprep.subr.mxu0 0.0
    %1908 = vmatpush1.msra.mxu0 0.0
    %1909 = vmatprep.subr.mxu0 0.0
    %1910 = vmatpush1.msra.mxu0 0.0
    %1911 = vmatprep.subr.mxu0 0.0
    %v1912 = vand.u32 %v33, 4294901760
    %v1913 = vsub.f32 %v33, %v1912
    %v1914 = vand.u32 %v1913, 4294901760
    %1915 = vmatpush1.msra.mxu0 %v1914
    %1916 = vmatprep.subr.mxu0 0.0
    %v1917 = vand.u32 %v32, 4294901760
    %v1918 = vsub.f32 %v32, %v1917
    %v1919 = vand.u32 %v1918, 4294901760
    %1920 = vmatpush1.msra.mxu0 %v1919
    %1921 = vmatprep.subr.mxu0 0.0
    %v1922 = vand.u32 %v31, 4294901760
    %v1923 = vsub.f32 %v31, %v1922
    %v1924 = vand.u32 %v1923, 4294901760
    %1925 = vmatpush1.msra.mxu0 %v1924
    %1926 = vmatprep.subr.mxu0 0.0
    %v1927 = vand.u32 %v30, 4294901760
    %v1928 = vsub.f32 %v30, %v1927
    %v1929 = vand.u32 %v1928, 4294901760
    %1930 = vmatpush1.msra.mxu0 %v1929
    %1931 = vmatprep.subr.mxu0 0.0
    %1932 = vmatpush2.msra.mxu0 0.0
    %1933 = vmatprep.subr.mxu0 0.0
    %1934 = vmatpush2.msra.mxu0 0.0
    %1935 = vmatprep.subr.mxu0 0.0
    %1936 = vmatpush2.msra.mxu0 0.0
    %1937 = vmatprep.subr.mxu0 0.0
    %1938 = vmatpush2.msra.mxu0 0.0
    %1939 = vmatprep.subr.mxu0 0.0
    %1940 = vmatpush2.msra.mxu0 0.0
    %1941 = vmatprep.subr.mxu0 0.0
    %1942 = vmatpush2.msra.mxu0 0.0
    %1943 = vmatprep.subr.mxu0 0.0
    %1944 = vmatpush2.msra.mxu0 0.0
    %1945 = vmatprep.subr.mxu0 0.0
    %1946 = vmatpush2.msra.mxu0 0.0
    %1947 = vmatprep.subr.mxu0 0.0
    %1948 = vmatpush2.msra.mxu0 0.0
    %1949 = vmatprep.subr.mxu0 0.0
    %1950 = vmatpush2.msra.mxu0 0.0
    %1951 = vmatprep.subr.mxu0 0.0
    %1952 = vmatpush2.msra.mxu0 0.0
    %1953 = vmatprep.subr.mxu0 0.0
    %1954 = vmatpush2.msra.mxu0 0.0
    %1955 = vmatprep.subr.mxu0 0.0
    %1956 = vmatpush2.msra.mxu0 0.0
    %1957 = vmatprep.subr.mxu0 0.0
    %1958 = vmatpush2.msra.mxu0 0.0
    %1959 = vmatprep.subr.mxu0 0.0
    %1960 = vmatpush2.msra.mxu0 0.0
    %1961 = vmatprep.subr.mxu0 0.0
    %1962 = vmatpush2.msra.mxu0 0.0
    %1963 = vmatprep.mubr.f32.mxu0 0.0
    %v1964 = vand.u32 %v1558, 4294901760
    %1965 = vmatmul.mubr.f32.gmra.mxu0 %v1964
    %v1966 = vpop.f32.mrf.mxu0
    %v1967 = vadd.f32 %v1884, %v1966
    %v1968 = vpop.f32.mrf.mxu0
    %1969 = vdwg.mxu0
    %1970 = vmatprep.subr.mxu0 0.0
    %1971 = vmatpush1.msra.mxu0 0.0
    %1972 = vmatprep.subr.mxu0 0.0
    %1973 = vmatpush1.msra.mxu0 0.0
    %1974 = vmatprep.subr.mxu0 0.0
    %1975 = vmatpush1.msra.mxu0 0.0
    %1976 = vmatprep.subr.mxu0 0.0
    %1977 = vmatpush1.msra.mxu0 0.0
    %1978 = vmatprep.subr.mxu0 0.0
    %1979 = vmatpush1.msra.mxu0 0.0
    %1980 = vmatprep.subr.mxu0 0.0
    %1981 = vmatpush1.msra.mxu0 0.0
    %1982 = vmatprep.subr.mxu0 0.0
    %1983 = vmatpush1.msra.mxu0 0.0
    %1984 = vmatprep.subr.mxu0 0.0
    %1985 = vmatpush1.msra.mxu0 0.0
    %1986 = vmatprep.subr.mxu0 0.0
    %1987 = vmatpush1.msra.mxu0 0.0
    %1988 = vmatprep.subr.mxu0 0.0
    %1989 = vmatpush1.msra.mxu0 0.0
    %1990 = vmatprep.subr.mxu0 0.0
    %1991 = vmatpush1.msra.mxu0 0.0
    %1992 = vmatprep.subr.mxu0 0.0
    %1993 = vmatpush1.msra.mxu0 0.0
    %1994 = vmatprep.subr.mxu0 0.0
    %v1995 = vand.u32 %v33, 4294901760
    %1996 = vmatpush1.msra.mxu0 %v1995
    %1997 = vmatprep.subr.mxu0 0.0
    %v1998 = vand.u32 %v32, 4294901760
    %1999 = vmatpush1.msra.mxu0 %v1998
    %2000 = vmatprep.subr.mxu0 0.0
    %v2001 = vand.u32 %v31, 4294901760
    %2002 = vmatpush1.msra.mxu0 %v2001
    %2003 = vmatprep.subr.mxu0 0.0
    %v2004 = vand.u32 %v30, 4294901760
    %2005 = vmatpush1.msra.mxu0 %v2004
    %2006 = vmatprep.subr.mxu0 0.0
    %2007 = vmatpush2.msra.mxu0 0.0
    %2008 = vmatprep.subr.mxu0 0.0
    %2009 = vmatpush2.msra.mxu0 0.0
    %2010 = vmatprep.subr.mxu0 0.0
    %2011 = vmatpush2.msra.mxu0 0.0
    %2012 = vmatprep.subr.mxu0 0.0
    %2013 = vmatpush2.msra.mxu0 0.0
    %2014 = vmatprep.subr.mxu0 0.0
    %2015 = vmatpush2.msra.mxu0 0.0
    %2016 = vmatprep.subr.mxu0 0.0
    %2017 = vmatpush2.msra.mxu0 0.0
    %2018 = vmatprep.subr.mxu0 0.0
    %2019 = vmatpush2.msra.mxu0 0.0
    %2020 = vmatprep.subr.mxu0 0.0
    %2021 = vmatpush2.msra.mxu0 0.0
    %2022 = vmatprep.subr.mxu0 0.0
    %2023 = vmatpush2.msra.mxu0 0.0
    %2024 = vmatprep.subr.mxu0 0.0
    %2025 = vmatpush2.msra.mxu0 0.0
    %2026 = vmatprep.subr.mxu0 0.0
    %2027 = vmatpush2.msra.mxu0 0.0
    %2028 = vmatprep.subr.mxu0 0.0
    %2029 = vmatpush2.msra.mxu0 0.0
    %2030 = vmatprep.subr.mxu0 0.0
    %2031 = vmatpush2.msra.mxu0 0.0
    %2032 = vmatprep.subr.mxu0 0.0
    %2033 = vmatpush2.msra.mxu0 0.0
    %2034 = vmatprep.subr.mxu0 0.0
    %2035 = vmatpush2.msra.mxu0 0.0
    %2036 = vmatprep.subr.mxu0 0.0
    %2037 = vmatpush2.msra.mxu0 0.0
    %2038 = vmatprep.mubr.f32.mxu0 0.0
    %v2039 = vand.u32 %v1558, 4294901760
    %2040 = vmatmul.mubr.f32.gmra.mxu0 %v2039
    %v2041 = vpop.f32.mrf.mxu0
    %v2042 = vadd.f32 %v1967, %v2041
    %v2043 = vpop.f32.mrf.mxu0
    %2044 = vdwg.mxu0
    %v2045 = vlaneseq
    %v2046 = vshrl.u32 %v2045, 7
    %v2047 = vsub.s32 0, %v2046
    %v2048 = vrot.slane %v43, %v2047
    %v2049 = vadd.f32 %v2042, %v2048
    %2051 = vrot.lane.b32.xlu0 %v2048, 96
    %v2052 = vpop.permute.xlu0 %2051
    %v2055 = vsel %vm51, %v2049, 0
    %2057 = vmatprep.subr.mxu0 0.0
    %2058 = vmatpush1.msra.mxu0 0.0
    %2059 = vmatprep.subr.mxu0 0.0
    %2060 = vmatpush1.msra.mxu0 0.0
    %2061 = vmatprep.subr.mxu0 0.0
    %2062 = vmatpush1.msra.mxu0 0.0
    %2063 = vmatprep.subr.mxu0 0.0
    %2064 = vmatpush1.msra.mxu0 0.0
    %2065 = vmatprep.subr.mxu0 0.0
    %2066 = vmatpush1.msra.mxu0 0.0
    %2067 = vmatprep.subr.mxu0 0.0
    %2068 = vmatpush1.msra.mxu0 0.0
    %2069 = vmatprep.subr.mxu0 0.0
    %2070 = vmatpush1.msra.mxu0 0.0
    %2071 = vmatprep.subr.mxu0 0.0
    %2072 = vmatpush1.msra.mxu0 0.0
    %2073 = vmatprep.subr.mxu0 0.0
    %2074 = vmatpush1.msra.mxu0 0.0
    %2075 = vmatprep.subr.mxu0 0.0
    %2076 = vmatpush1.msra.mxu0 0.0
    %2077 = vmatprep.subr.mxu0 0.0
    %2078 = vmatpush1.msra.mxu0 0.0
    %2079 = vmatprep.subr.mxu0 0.0
    %2080 = vmatpush1.msra.mxu0 0.0
    %2081 = vmatprep.subr.mxu0 0.0
    %v2082 = vand.u32 %v37, 4294901760
    %2083 = vmatpush1.msra.mxu0 %v2082
    %2084 = vmatprep.subr.mxu0 0.0
    %v2085 = vand.u32 %v36, 4294901760
    %2086 = vmatpush1.msra.mxu0 %v2085
    %2087 = vmatprep.subr.mxu0 0.0
    %v2088 = vand.u32 %v35, 4294901760
    %2089 = vmatpush1.msra.mxu0 %v2088
    %2090 = vmatprep.subr.mxu0 0.0
    %v2091 = vand.u32 %v34, 4294901760
    %2092 = vmatpush1.msra.mxu0 %v2091
    %2093 = vmatprep.subr.mxu0 0.0
    %2094 = vmatpush2.msra.mxu0 0.0
    %2095 = vmatprep.subr.mxu0 0.0
    %2096 = vmatpush2.msra.mxu0 0.0
    %2097 = vmatprep.subr.mxu0 0.0
    %2098 = vmatpush2.msra.mxu0 0.0
    %2099 = vmatprep.subr.mxu0 0.0
    %2100 = vmatpush2.msra.mxu0 0.0
    %2101 = vmatprep.subr.mxu0 0.0
    %2102 = vmatpush2.msra.mxu0 0.0
    %2103 = vmatprep.subr.mxu0 0.0
    %2104 = vmatpush2.msra.mxu0 0.0
    %2105 = vmatprep.subr.mxu0 0.0
    %2106 = vmatpush2.msra.mxu0 0.0
    %2107 = vmatprep.subr.mxu0 0.0
    %2108 = vmatpush2.msra.mxu0 0.0
    %2109 = vmatprep.subr.mxu0 0.0
    %2110 = vmatpush2.msra.mxu0 0.0
    %2111 = vmatprep.subr.mxu0 0.0
    %2112 = vmatpush2.msra.mxu0 0.0
    %2113 = vmatprep.subr.mxu0 0.0
    %2114 = vmatpush2.msra.mxu0 0.0
    %2115 = vmatprep.subr.mxu0 0.0
    %2116 = vmatpush2.msra.mxu0 0.0
    %2117 = vmatprep.subr.mxu0 0.0
    %2118 = vmatpush2.msra.mxu0 0.0
    %2119 = vmatprep.subr.mxu0 0.0
    %2120 = vmatpush2.msra.mxu0 0.0
    %2121 = vmatprep.subr.mxu0 0.0
    %2122 = vmatpush2.msra.mxu0 0.0
    %2123 = vmatprep.subr.mxu0 0.0
    %2124 = vmatpush2.msra.mxu0 0.0
    %2125 = vmatprep.mubr.f32.mxu0 0.0
    %v2126 = vand.u32 %v2055, 4294901760
    %v2127 = vsub.f32 %v2055, %v2126
    %v2128 = vand.u32 %v2127, 4294901760
    %v2129 = vsub.f32 %v2127, %v2128
    %v2130 = vand.u32 %v2129, 4294901760
    %2131 = vmatmul.mubr.f32.gmra.mxu0 %v2130
    %v2132 = vpop.f32.mrf.mxu0
    %v2133 = vadd.f32 %v2052, %v2132
    %v2134 = vpop.f32.mrf.mxu0
    %2135 = vdwg.mxu0
    %2136 = vmatprep.subr.mxu0 0.0
    %2137 = vmatpush1.msra.mxu0 0.0
    %2138 = vmatprep.subr.mxu0 0.0
    %2139 = vmatpush1.msra.mxu0 0.0
    %2140 = vmatprep.subr.mxu0 0.0
    %2141 = vmatpush1.msra.mxu0 0.0
    %2142 = vmatprep.subr.mxu0 0.0
    %2143 = vmatpush1.msra.mxu0 0.0
    %2144 = vmatprep.subr.mxu0 0.0
    %2145 = vmatpush1.msra.mxu0 0.0
    %2146 = vmatprep.subr.mxu0 0.0
    %2147 = vmatpush1.msra.mxu0 0.0
    %2148 = vmatprep.subr.mxu0 0.0
    %2149 = vmatpush1.msra.mxu0 0.0
    %2150 = vmatprep.subr.mxu0 0.0
    %2151 = vmatpush1.msra.mxu0 0.0
    %2152 = vmatprep.subr.mxu0 0.0
    %2153 = vmatpush1.msra.mxu0 0.0
    %2154 = vmatprep.subr.mxu0 0.0
    %2155 = vmatpush1.msra.mxu0 0.0
    %2156 = vmatprep.subr.mxu0 0.0
    %2157 = vmatpush1.msra.mxu0 0.0
    %2158 = vmatprep.subr.mxu0 0.0
    %2159 = vmatpush1.msra.mxu0 0.0
    %2160 = vmatprep.subr.mxu0 0.0
    %v2161 = vand.u32 %v37, 4294901760
    %v2162 = vsub.f32 %v37, %v2161
    %v2163 = vand.u32 %v2162, 4294901760
    %v2164 = vsub.f32 %v2162, %v2163
    %v2165 = vand.u32 %v2164, 4294901760
    %2166 = vmatpush1.msra.mxu0 %v2165
    %2167 = vmatprep.subr.mxu0 0.0
    %v2168 = vand.u32 %v36, 4294901760
    %v2169 = vsub.f32 %v36, %v2168
    %v2170 = vand.u32 %v2169, 4294901760
    %v2171 = vsub.f32 %v2169, %v2170
    %v2172 = vand.u32 %v2171, 4294901760
    %2173 = vmatpush1.msra.mxu0 %v2172
    %2174 = vmatprep.subr.mxu0 0.0
    %v2175 = vand.u32 %v35, 4294901760
    %v2176 = vsub.f32 %v35, %v2175
    %v2177 = vand.u32 %v2176, 4294901760
    %v2178 = vsub.f32 %v2176, %v2177
    %v2179 = vand.u32 %v2178, 4294901760
    %2180 = vmatpush1.msra.mxu0 %v2179
    %2181 = vmatprep.subr.mxu0 0.0
    %v2182 = vand.u32 %v34, 4294901760
    %v2183 = vsub.f32 %v34, %v2182
    %v2184 = vand.u32 %v2183, 4294901760
    %v2185 = vsub.f32 %v2183, %v2184
    %v2186 = vand.u32 %v2185, 4294901760
    %2187 = vmatpush1.msra.mxu0 %v2186
    %2188 = vmatprep.subr.mxu0 0.0
    %2189 = vmatpush2.msra.mxu0 0.0
    %2190 = vmatprep.subr.mxu0 0.0
    %2191 = vmatpush2.msra.mxu0 0.0
    %2192 = vmatprep.subr.mxu0 0.0
    %2193 = vmatpush2.msra.mxu0 0.0
    %2194 = vmatprep.subr.mxu0 0.0
    %2195 = vmatpush2.msra.mxu0 0.0
    %2196 = vmatprep.subr.mxu0 0.0
    %2197 = vmatpush2.msra.mxu0 0.0
    %2198 = vmatprep.subr.mxu0 0.0
    %2199 = vmatpush2.msra.mxu0 0.0
    %2200 = vmatprep.subr.mxu0 0.0
    %2201 = vmatpush2.msra.mxu0 0.0
    %2202 = vmatprep.subr.mxu0 0.0
    %2203 = vmatpush2.msra.mxu0 0.0
    %2204 = vmatprep.subr.mxu0 0.0
    %2205 = vmatpush2.msra.mxu0 0.0
    %2206 = vmatprep.subr.mxu0 0.0
    %2207 = vmatpush2.msra.mxu0 0.0
    %2208 = vmatprep.subr.mxu0 0.0
    %2209 = vmatpush2.msra.mxu0 0.0
    %2210 = vmatprep.subr.mxu0 0.0
    %2211 = vmatpush2.msra.mxu0 0.0
    %2212 = vmatprep.subr.mxu0 0.0
    %2213 = vmatpush2.msra.mxu0 0.0
    %2214 = vmatprep.subr.mxu0 0.0
    %2215 = vmatpush2.msra.mxu0 0.0
    %2216 = vmatprep.subr.mxu0 0.0
    %2217 = vmatpush2.msra.mxu0 0.0
    %2218 = vmatprep.subr.mxu0 0.0
    %2219 = vmatpush2.msra.mxu0 0.0
    %2220 = vmatprep.mubr.f32.mxu0 0.0
    %v2221 = vand.u32 %v2055, 4294901760
    %2222 = vmatmul.mubr.f32.gmra.mxu0 %v2221
    %v2223 = vpop.f32.mrf.mxu0
    %v2224 = vadd.f32 %v2133, %v2223
    %v2225 = vpop.f32.mrf.mxu0
    %2226 = vdwg.mxu0
    %2227 = vmatprep.subr.mxu0 0.0
    %2228 = vmatpush1.msra.mxu0 0.0
    %2229 = vmatprep.subr.mxu0 0.0
    %2230 = vmatpush1.msra.mxu0 0.0
    %2231 = vmatprep.subr.mxu0 0.0
    %2232 = vmatpush1.msra.mxu0 0.0
    %2233 = vmatprep.subr.mxu0 0.0
    %2234 = vmatpush1.msra.mxu0 0.0
    %2235 = vmatprep.subr.mxu0 0.0
    %2236 = vmatpush1.msra.mxu0 0.0
    %2237 = vmatprep.subr.mxu0 0.0
    %2238 = vmatpush1.msra.mxu0 0.0
    %2239 = vmatprep.subr.mxu0 0.0
    %2240 = vmatpush1.msra.mxu0 0.0
    %2241 = vmatprep.subr.mxu0 0.0
    %2242 = vmatpush1.msra.mxu0 0.0
    %2243 = vmatprep.subr.mxu0 0.0
    %2244 = vmatpush1.msra.mxu0 0.0
    %2245 = vmatprep.subr.mxu0 0.0
    %2246 = vmatpush1.msra.mxu0 0.0
    %2247 = vmatprep.subr.mxu0 0.0
    %2248 = vmatpush1.msra.mxu0 0.0
    %2249 = vmatprep.subr.mxu0 0.0
    %2250 = vmatpush1.msra.mxu0 0.0
    %2251 = vmatprep.subr.mxu0 0.0
    %v2252 = vand.u32 %v37, 4294901760
    %v2253 = vsub.f32 %v37, %v2252
    %2254 = vmatpush1.msra.mxu0 %v2253
    %2255 = vmatprep.subr.mxu0 0.0
    %v2256 = vand.u32 %v36, 4294901760
    %v2257 = vsub.f32 %v36, %v2256
    %2258 = vmatpush1.msra.mxu0 %v2257
    %2259 = vmatprep.subr.mxu0 0.0
    %v2260 = vand.u32 %v35, 4294901760
    %v2261 = vsub.f32 %v35, %v2260
    %2262 = vmatpush1.msra.mxu0 %v2261
    %2263 = vmatprep.subr.mxu0 0.0
    %v2264 = vand.u32 %v34, 4294901760
    %v2265 = vsub.f32 %v34, %v2264
    %2266 = vmatpush1.msra.mxu0 %v2265
    %2267 = vmatprep.subr.mxu0 0.0
    %2268 = vmatpush2.msra.mxu0 0.0
    %2269 = vmatprep.subr.mxu0 0.0
    %2270 = vmatpush2.msra.mxu0 0.0
    %2271 = vmatprep.subr.mxu0 0.0
    %2272 = vmatpush2.msra.mxu0 0.0
    %2273 = vmatprep.subr.mxu0 0.0
    %2274 = vmatpush2.msra.mxu0 0.0
    %2275 = vmatprep.subr.mxu0 0.0
    %2276 = vmatpush2.msra.mxu0 0.0
    %2277 = vmatprep.subr.mxu0 0.0
    %2278 = vmatpush2.msra.mxu0 0.0
    %2279 = vmatprep.subr.mxu0 0.0
    %2280 = vmatpush2.msra.mxu0 0.0
    %2281 = vmatprep.subr.mxu0 0.0
    %2282 = vmatpush2.msra.mxu0 0.0
    %2283 = vmatprep.subr.mxu0 0.0
    %2284 = vmatpush2.msra.mxu0 0.0
    %2285 = vmatprep.subr.mxu0 0.0
    %2286 = vmatpush2.msra.mxu0 0.0
    %2287 = vmatprep.subr.mxu0 0.0
    %2288 = vmatpush2.msra.mxu0 0.0
    %2289 = vmatprep.subr.mxu0 0.0
    %2290 = vmatpush2.msra.mxu0 0.0
    %2291 = vmatprep.subr.mxu0 0.0
    %2292 = vmatpush2.msra.mxu0 0.0
    %2293 = vmatprep.subr.mxu0 0.0
    %2294 = vmatpush2.msra.mxu0 0.0
    %2295 = vmatprep.subr.mxu0 0.0
    %2296 = vmatpush2.msra.mxu0 0.0
    %2297 = vmatprep.subr.mxu0 0.0
    %2298 = vmatpush2.msra.mxu0 0.0
    %2299 = vmatprep.mubr.f32.mxu0 0.0
    %v2300 = vand.u32 %v2055, 4294901760
    %v2301 = vsub.f32 %v2055, %v2300
    %2302 = vmatmul.mubr.f32.gmra.mxu0 %v2301
    %v2303 = vpop.f32.mrf.mxu0
    %v2304 = vadd.f32 %v2224, %v2303
    %v2305 = vpop.f32.mrf.mxu0
    %2306 = vdwg.mxu0
    %2307 = vmatprep.subr.mxu0 0.0
    %2308 = vmatpush1.msra.mxu0 0.0
    %2309 = vmatprep.subr.mxu0 0.0
    %2310 = vmatpush1.msra.mxu0 0.0
    %2311 = vmatprep.subr.mxu0 0.0
    %2312 = vmatpush1.msra.mxu0 0.0
    %2313 = vmatprep.subr.mxu0 0.0
    %2314 = vmatpush1.msra.mxu0 0.0
    %2315 = vmatprep.subr.mxu0 0.0
    %2316 = vmatpush1.msra.mxu0 0.0
    %2317 = vmatprep.subr.mxu0 0.0
    %2318 = vmatpush1.msra.mxu0 0.0
    %2319 = vmatprep.subr.mxu0 0.0
    %2320 = vmatpush1.msra.mxu0 0.0
    %2321 = vmatprep.subr.mxu0 0.0
    %2322 = vmatpush1.msra.mxu0 0.0
    %2323 = vmatprep.subr.mxu0 0.0
    %2324 = vmatpush1.msra.mxu0 0.0
    %2325 = vmatprep.subr.mxu0 0.0
    %2326 = vmatpush1.msra.mxu0 0.0
    %2327 = vmatprep.subr.mxu0 0.0
    %2328 = vmatpush1.msra.mxu0 0.0
    %2329 = vmatprep.subr.mxu0 0.0
    %2330 = vmatpush1.msra.mxu0 0.0
    %2331 = vmatprep.subr.mxu0 0.0
    %v2332 = vand.u32 %v37, 4294901760
    %2333 = vmatpush1.msra.mxu0 %v2332
    %2334 = vmatprep.subr.mxu0 0.0
    %v2335 = vand.u32 %v36, 4294901760
    %2336 = vmatpush1.msra.mxu0 %v2335
    %2337 = vmatprep.subr.mxu0 0.0
    %v2338 = vand.u32 %v35, 4294901760
    %2339 = vmatpush1.msra.mxu0 %v2338
    %2340 = vmatprep.subr.mxu0 0.0
    %v2341 = vand.u32 %v34, 4294901760
    %2342 = vmatpush1.msra.mxu0 %v2341
    %2343 = vmatprep.subr.mxu0 0.0
    %2344 = vmatpush2.msra.mxu0 0.0
    %2345 = vmatprep.subr.mxu0 0.0
    %2346 = vmatpush2.msra.mxu0 0.0
    %2347 = vmatprep.subr.mxu0 0.0
    %2348 = vmatpush2.msra.mxu0 0.0
    %2349 = vmatprep.subr.mxu0 0.0
    %2350 = vmatpush2.msra.mxu0 0.0
    %2351 = vmatprep.subr.mxu0 0.0
    %2352 = vmatpush2.msra.mxu0 0.0
    %2353 = vmatprep.subr.mxu0 0.0
    %2354 = vmatpush2.msra.mxu0 0.0
    %2355 = vmatprep.subr.mxu0 0.0
    %2356 = vmatpush2.msra.mxu0 0.0
    %2357 = vmatprep.subr.mxu0 0.0
    %2358 = vmatpush2.msra.mxu0 0.0
    %2359 = vmatprep.subr.mxu0 0.0
    %2360 = vmatpush2.msra.mxu0 0.0
    %2361 = vmatprep.subr.mxu0 0.0
    %2362 = vmatpush2.msra.mxu0 0.0
    %2363 = vmatprep.subr.mxu0 0.0
    %2364 = vmatpush2.msra.mxu0 0.0
    %2365 = vmatprep.subr.mxu0 0.0
    %2366 = vmatpush2.msra.mxu0 0.0
    %2367 = vmatprep.subr.mxu0 0.0
    %2368 = vmatpush2.msra.mxu0 0.0
    %2369 = vmatprep.subr.mxu0 0.0
    %2370 = vmatpush2.msra.mxu0 0.0
    %2371 = vmatprep.subr.mxu0 0.0
    %2372 = vmatpush2.msra.mxu0 0.0
    %2373 = vmatprep.subr.mxu0 0.0
    %2374 = vmatpush2.msra.mxu0 0.0
    %2375 = vmatprep.mubr.f32.mxu0 0.0
    %v2376 = vand.u32 %v2055, 4294901760
    %v2377 = vsub.f32 %v2055, %v2376
    %v2378 = vand.u32 %v2377, 4294901760
    %2379 = vmatmul.mubr.f32.gmra.mxu0 %v2378
    %v2380 = vpop.f32.mrf.mxu0
    %v2381 = vadd.f32 %v2304, %v2380
    %v2382 = vpop.f32.mrf.mxu0
    %2383 = vdwg.mxu0
    %2384 = vmatprep.subr.mxu0 0.0
    %2385 = vmatpush1.msra.mxu0 0.0
    %2386 = vmatprep.subr.mxu0 0.0
    %2387 = vmatpush1.msra.mxu0 0.0
    %2388 = vmatprep.subr.mxu0 0.0
    %2389 = vmatpush1.msra.mxu0 0.0
    %2390 = vmatprep.subr.mxu0 0.0
    %2391 = vmatpush1.msra.mxu0 0.0
    %2392 = vmatprep.subr.mxu0 0.0
    %2393 = vmatpush1.msra.mxu0 0.0
    %2394 = vmatprep.subr.mxu0 0.0
    %2395 = vmatpush1.msra.mxu0 0.0
    %2396 = vmatprep.subr.mxu0 0.0
    %2397 = vmatpush1.msra.mxu0 0.0
    %2398 = vmatprep.subr.mxu0 0.0
    %2399 = vmatpush1.msra.mxu0 0.0
    %2400 = vmatprep.subr.mxu0 0.0
    %2401 = vmatpush1.msra.mxu0 0.0
    %2402 = vmatprep.subr.mxu0 0.0
    %2403 = vmatpush1.msra.mxu0 0.0
    %2404 = vmatprep.subr.mxu0 0.0
    %2405 = vmatpush1.msra.mxu0 0.0
    %2406 = vmatprep.subr.mxu0 0.0
    %2407 = vmatpush1.msra.mxu0 0.0
    %2408 = vmatprep.subr.mxu0 0.0
    %v2409 = vand.u32 %v37, 4294901760
    %v2410 = vsub.f32 %v37, %v2409
    %v2411 = vand.u32 %v2410, 4294901760
    %2412 = vmatpush1.msra.mxu0 %v2411
    %2413 = vmatprep.subr.mxu0 0.0
    %v2414 = vand.u32 %v36, 4294901760
    %v2415 = vsub.f32 %v36, %v2414
    %v2416 = vand.u32 %v2415, 4294901760
    %2417 = vmatpush1.msra.mxu0 %v2416
    %2418 = vmatprep.subr.mxu0 0.0
    %v2419 = vand.u32 %v35, 4294901760
    %v2420 = vsub.f32 %v35, %v2419
    %v2421 = vand.u32 %v2420, 4294901760
    %2422 = vmatpush1.msra.mxu0 %v2421
    %2423 = vmatprep.subr.mxu0 0.0
    %v2424 = vand.u32 %v34, 4294901760
    %v2425 = vsub.f32 %v34, %v2424
    %v2426 = vand.u32 %v2425, 4294901760
    %2427 = vmatpush1.msra.mxu0 %v2426
    %2428 = vmatprep.subr.mxu0 0.0
    %2429 = vmatpush2.msra.mxu0 0.0
    %2430 = vmatprep.subr.mxu0 0.0
    %2431 = vmatpush2.msra.mxu0 0.0
    %2432 = vmatprep.subr.mxu0 0.0
    %2433 = vmatpush2.msra.mxu0 0.0
    %2434 = vmatprep.subr.mxu0 0.0
    %2435 = vmatpush2.msra.mxu0 0.0
    %2436 = vmatprep.subr.mxu0 0.0
    %2437 = vmatpush2.msra.mxu0 0.0
    %2438 = vmatprep.subr.mxu0 0.0
    %2439 = vmatpush2.msra.mxu0 0.0
    %2440 = vmatprep.subr.mxu0 0.0
    %2441 = vmatpush2.msra.mxu0 0.0
    %2442 = vmatprep.subr.mxu0 0.0
    %2443 = vmatpush2.msra.mxu0 0.0
    %2444 = vmatprep.subr.mxu0 0.0
    %2445 = vmatpush2.msra.mxu0 0.0
    %2446 = vmatprep.subr.mxu0 0.0
    %2447 = vmatpush2.msra.mxu0 0.0
    %2448 = vmatprep.subr.mxu0 0.0
    %2449 = vmatpush2.msra.mxu0 0.0
    %2450 = vmatprep.subr.mxu0 0.0
    %2451 = vmatpush2.msra.mxu0 0.0
    %2452 = vmatprep.subr.mxu0 0.0
    %2453 = vmatpush2.msra.mxu0 0.0
    %2454 = vmatprep.subr.mxu0 0.0
    %2455 = vmatpush2.msra.mxu0 0.0
    %2456 = vmatprep.subr.mxu0 0.0
    %2457 = vmatpush2.msra.mxu0 0.0
    %2458 = vmatprep.subr.mxu0 0.0
    %2459 = vmatpush2.msra.mxu0 0.0
    %2460 = vmatprep.mubr.f32.mxu0 0.0
    %v2461 = vand.u32 %v2055, 4294901760
    %2462 = vmatmul.mubr.f32.gmra.mxu0 %v2461
    %v2463 = vpop.f32.mrf.mxu0
    %v2464 = vadd.f32 %v2381, %v2463
    %v2465 = vpop.f32.mrf.mxu0
    %2466 = vdwg.mxu0
    %2467 = vmatprep.subr.mxu0 0.0
    %2468 = vmatpush1.msra.mxu0 0.0
    %2469 = vmatprep.subr.mxu0 0.0
    %2470 = vmatpush1.msra.mxu0 0.0
    %2471 = vmatprep.subr.mxu0 0.0
    %2472 = vmatpush1.msra.mxu0 0.0
    %2473 = vmatprep.subr.mxu0 0.0
    %2474 = vmatpush1.msra.mxu0 0.0
    %2475 = vmatprep.subr.mxu0 0.0
    %2476 = vmatpush1.msra.mxu0 0.0
    %2477 = vmatprep.subr.mxu0 0.0
    %2478 = vmatpush1.msra.mxu0 0.0
    %2479 = vmatprep.subr.mxu0 0.0
    %2480 = vmatpush1.msra.mxu0 0.0
    %2481 = vmatprep.subr.mxu0 0.0
    %2482 = vmatpush1.msra.mxu0 0.0
    %2483 = vmatprep.subr.mxu0 0.0
    %2484 = vmatpush1.msra.mxu0 0.0
    %2485 = vmatprep.subr.mxu0 0.0
    %2486 = vmatpush1.msra.mxu0 0.0
    %2487 = vmatprep.subr.mxu0 0.0
    %2488 = vmatpush1.msra.mxu0 0.0
    %2489 = vmatprep.subr.mxu0 0.0
    %2490 = vmatpush1.msra.mxu0 0.0
    %2491 = vmatprep.subr.mxu0 0.0
    %v2492 = vand.u32 %v37, 4294901760
    %2493 = vmatpush1.msra.mxu0 %v2492
    %2494 = vmatprep.subr.mxu0 0.0
    %v2495 = vand.u32 %v36, 4294901760
    %2496 = vmatpush1.msra.mxu0 %v2495
    %2497 = vmatprep.subr.mxu0 0.0
    %v2498 = vand.u32 %v35, 4294901760
    %2499 = vmatpush1.msra.mxu0 %v2498
    %2500 = vmatprep.subr.mxu0 0.0
    %v2501 = vand.u32 %v34, 4294901760
    %2502 = vmatpush1.msra.mxu0 %v2501
    %2503 = vmatprep.subr.mxu0 0.0
    %2504 = vmatpush2.msra.mxu0 0.0
    %2505 = vmatprep.subr.mxu0 0.0
    %2506 = vmatpush2.msra.mxu0 0.0
    %2507 = vmatprep.subr.mxu0 0.0
    %2508 = vmatpush2.msra.mxu0 0.0
    %2509 = vmatprep.subr.mxu0 0.0
    %2510 = vmatpush2.msra.mxu0 0.0
    %2511 = vmatprep.subr.mxu0 0.0
    %2512 = vmatpush2.msra.mxu0 0.0
    %2513 = vmatprep.subr.mxu0 0.0
    %2514 = vmatpush2.msra.mxu0 0.0
    %2515 = vmatprep.subr.mxu0 0.0
    %2516 = vmatpush2.msra.mxu0 0.0
    %2517 = vmatprep.subr.mxu0 0.0
    %2518 = vmatpush2.msra.mxu0 0.0
    %2519 = vmatprep.subr.mxu0 0.0
    %2520 = vmatpush2.msra.mxu0 0.0
    %2521 = vmatprep.subr.mxu0 0.0
    %2522 = vmatpush2.msra.mxu0 0.0
    %2523 = vmatprep.subr.mxu0 0.0
    %2524 = vmatpush2.msra.mxu0 0.0
    %2525 = vmatprep.subr.mxu0 0.0
    %2526 = vmatpush2.msra.mxu0 0.0
    %2527 = vmatprep.subr.mxu0 0.0
    %2528 = vmatpush2.msra.mxu0 0.0
    %2529 = vmatprep.subr.mxu0 0.0
    %2530 = vmatpush2.msra.mxu0 0.0
    %2531 = vmatprep.subr.mxu0 0.0
    %2532 = vmatpush2.msra.mxu0 0.0
    %2533 = vmatprep.subr.mxu0 0.0
    %2534 = vmatpush2.msra.mxu0 0.0
    %2535 = vmatprep.mubr.f32.mxu0 0.0
    %v2536 = vand.u32 %v2055, 4294901760
    %2537 = vmatmul.mubr.f32.gmra.mxu0 %v2536
    %v2538 = vpop.f32.mrf.mxu0
    %v2539 = vadd.f32 %v2464, %v2538
    %v2540 = vpop.f32.mrf.mxu0
    %2541 = vdwg.mxu0
    %2543 = vrot.lane.b32.xlu0 %v2539, 32
    %v2544 = vpop.permute.xlu0 %2543
    %v2546 = vadd.f32 %v537, %v2544
    %v2547 = vxor.u32 %v2546, 2147483648
    %v2548 = vmul.f32 %v2547, 1.442695
    %v2549 = vpow.pop %v2548
    %v2550 = vadd.f32 %v2549, 1.0
    %v2551 = vrcp.pop %v2550
    %v2552 = vmul.f32 1.0, %v2551
    %2553 = vrot.lane.b32.xlu0 %v2539, 96
    %v2554 = vpop.permute.xlu0 %2553
    %v2556 = vmul.f32 %v2552, %v2554
    %2558 = vrot.lane.b32.xlu0 %v2556, 64
    %v2559 = vpop.permute.xlu0 %2558
    %v2561 = vadd.f32 %v537, %v2559
    %v2562 = vtanh.pop %v2561
    %v2563 = vsub.f32 1.0, %v2552
    %2565 = vrot.lane.b32.xlu0 %v2562, 96
    %v2566 = vpop.permute.xlu0 %2565
    %v2568 = vmul.f32 %v2563, %v2566
    %2569 = vrot.lane.b32.xlu0 %v2049, 64
    %v2570 = vpop.permute.xlu0 %2569
    %v2572 = vmul.f32 %v2552, %v2570
    %v2573 = vadd.f32 %v2568, %v2572
    %v2574 = vlaneseq
    %v2575 = vshrl.u32 %v2574, 7
    %v2576 = vsub.s32 0, %v2575
    %v2577 = vrot.slane %v44, %v2576
    %2579 = vrot.lane.b32.xlu0 %v2573, 64
    %v2580 = vpop.permute.xlu0 %2579
    %v2581 = vsel %vm51, %v2580, 0
    %2583 = vmatprep.subr.mxu0 0.0
    %2584 = vmatpush1.msra.mxu0 0.0
    %2585 = vmatprep.subr.mxu0 0.0
    %2586 = vmatpush1.msra.mxu0 0.0
    %2587 = vmatprep.subr.mxu0 0.0
    %2588 = vmatpush1.msra.mxu0 0.0
    %2589 = vmatprep.subr.mxu0 0.0
    %2590 = vmatpush1.msra.mxu0 0.0
    %2591 = vmatprep.subr.mxu0 0.0
    %2592 = vmatpush1.msra.mxu0 0.0
    %2593 = vmatprep.subr.mxu0 0.0
    %2594 = vmatpush1.msra.mxu0 0.0
    %2595 = vmatprep.subr.mxu0 0.0
    %2596 = vmatpush1.msra.mxu0 0.0
    %2597 = vmatprep.subr.mxu0 0.0
    %2598 = vmatpush1.msra.mxu0 0.0
    %2599 = vmatprep.subr.mxu0 0.0
    %2600 = vmatpush1.msra.mxu0 0.0
    %2601 = vmatprep.subr.mxu0 0.0
    %2602 = vmatpush1.msra.mxu0 0.0
    %2603 = vmatprep.subr.mxu0 0.0
    %2604 = vmatpush1.msra.mxu0 0.0
    %2605 = vmatprep.subr.mxu0 0.0
    %2606 = vmatpush1.msra.mxu0 0.0
    %2607 = vmatprep.subr.mxu0 0.0
    %v2608 = vand.u32 %v41, 4294901760
    %2609 = vmatpush1.msra.mxu0 %v2608
    %2610 = vmatprep.subr.mxu0 0.0
    %v2611 = vand.u32 %v40, 4294901760
    %2612 = vmatpush1.msra.mxu0 %v2611
    %2613 = vmatprep.subr.mxu0 0.0
    %v2614 = vand.u32 %v39, 4294901760
    %2615 = vmatpush1.msra.mxu0 %v2614
    %2616 = vmatprep.subr.mxu0 0.0
    %v2617 = vand.u32 %v38, 4294901760
    %2618 = vmatpush1.msra.mxu0 %v2617
    %2619 = vmatprep.subr.mxu0 0.0
    %2620 = vmatpush2.msra.mxu0 0.0
    %2621 = vmatprep.subr.mxu0 0.0
    %2622 = vmatpush2.msra.mxu0 0.0
    %2623 = vmatprep.subr.mxu0 0.0
    %2624 = vmatpush2.msra.mxu0 0.0
    %2625 = vmatprep.subr.mxu0 0.0
    %2626 = vmatpush2.msra.mxu0 0.0
    %2627 = vmatprep.subr.mxu0 0.0
    %2628 = vmatpush2.msra.mxu0 0.0
    %2629 = vmatprep.subr.mxu0 0.0
    %2630 = vmatpush2.msra.mxu0 0.0
    %2631 = vmatprep.subr.mxu0 0.0
    %2632 = vmatpush2.msra.mxu0 0.0
    %2633 = vmatprep.subr.mxu0 0.0
    %2634 = vmatpush2.msra.mxu0 0.0
    %2635 = vmatprep.subr.mxu0 0.0
    %2636 = vmatpush2.msra.mxu0 0.0
    %2637 = vmatprep.subr.mxu0 0.0
    %2638 = vmatpush2.msra.mxu0 0.0
    %2639 = vmatprep.subr.mxu0 0.0
    %2640 = vmatpush2.msra.mxu0 0.0
    %2641 = vmatprep.subr.mxu0 0.0
    %2642 = vmatpush2.msra.mxu0 0.0
    %2643 = vmatprep.subr.mxu0 0.0
    %2644 = vmatpush2.msra.mxu0 0.0
    %2645 = vmatprep.subr.mxu0 0.0
    %2646 = vmatpush2.msra.mxu0 0.0
    %2647 = vmatprep.subr.mxu0 0.0
    %2648 = vmatpush2.msra.mxu0 0.0
    %2649 = vmatprep.subr.mxu0 0.0
    %2650 = vmatpush2.msra.mxu0 0.0
    %2651 = vmatprep.mubr.f32.mxu0 0.0
    %v2652 = vand.u32 %v2581, 4294901760
    %v2653 = vsub.f32 %v2581, %v2652
    %v2654 = vand.u32 %v2653, 4294901760
    %v2655 = vsub.f32 %v2653, %v2654
    %v2656 = vand.u32 %v2655, 4294901760
    %2657 = vmatmul.mubr.f32.gmra.mxu0 %v2656
    %v2658 = vpop.f32.mrf.mxu0
    %v2659 = vadd.f32 %v2577, %v2658
    %v2660 = vpop.f32.mrf.mxu0
    %2661 = vdwg.mxu0
    %2662 = vmatprep.subr.mxu0 0.0
    %2663 = vmatpush1.msra.mxu0 0.0
    %2664 = vmatprep.subr.mxu0 0.0
    %2665 = vmatpush1.msra.mxu0 0.0
    %2666 = vmatprep.subr.mxu0 0.0
    %2667 = vmatpush1.msra.mxu0 0.0
    %2668 = vmatprep.subr.mxu0 0.0
    %2669 = vmatpush1.msra.mxu0 0.0
    %2670 = vmatprep.subr.mxu0 0.0
    %2671 = vmatpush1.msra.mxu0 0.0
    %2672 = vmatprep.subr.mxu0 0.0
    %2673 = vmatpush1.msra.mxu0 0.0
    %2674 = vmatprep.subr.mxu0 0.0
    %2675 = vmatpush1.msra.mxu0 0.0
    %2676 = vmatprep.subr.mxu0 0.0
    %2677 = vmatpush1.msra.mxu0 0.0
    %2678 = vmatprep.subr.mxu0 0.0
    %2679 = vmatpush1.msra.mxu0 0.0
    %2680 = vmatprep.subr.mxu0 0.0
    %2681 = vmatpush1.msra.mxu0 0.0
    %2682 = vmatprep.subr.mxu0 0.0
    %2683 = vmatpush1.msra.mxu0 0.0
    %2684 = vmatprep.subr.mxu0 0.0
    %2685 = vmatpush1.msra.mxu0 0.0
    %2686 = vmatprep.subr.mxu0 0.0
    %v2687 = vand.u32 %v41, 4294901760
    %v2688 = vsub.f32 %v41, %v2687
    %v2689 = vand.u32 %v2688, 4294901760
    %v2690 = vsub.f32 %v2688, %v2689
    %v2691 = vand.u32 %v2690, 4294901760
    %2692 = vmatpush1.msra.mxu0 %v2691
    %2693 = vmatprep.subr.mxu0 0.0
    %v2694 = vand.u32 %v40, 4294901760
    %v2695 = vsub.f32 %v40, %v2694
    %v2696 = vand.u32 %v2695, 4294901760
    %v2697 = vsub.f32 %v2695, %v2696
    %v2698 = vand.u32 %v2697, 4294901760
    %2699 = vmatpush1.msra.mxu0 %v2698
    %2700 = vmatprep.subr.mxu0 0.0
    %v2701 = vand.u32 %v39, 4294901760
    %v2702 = vsub.f32 %v39, %v2701
    %v2703 = vand.u32 %v2702, 4294901760
    %v2704 = vsub.f32 %v2702, %v2703
    %v2705 = vand.u32 %v2704, 4294901760
    %2706 = vmatpush1.msra.mxu0 %v2705
    %2707 = vmatprep.subr.mxu0 0.0
    %v2708 = vand.u32 %v38, 4294901760
    %v2709 = vsub.f32 %v38, %v2708
    %v2710 = vand.u32 %v2709, 4294901760
    %v2711 = vsub.f32 %v2709, %v2710
    %v2712 = vand.u32 %v2711, 4294901760
    %2713 = vmatpush1.msra.mxu0 %v2712
    %2714 = vmatprep.subr.mxu0 0.0
    %2715 = vmatpush2.msra.mxu0 0.0
    %2716 = vmatprep.subr.mxu0 0.0
    %2717 = vmatpush2.msra.mxu0 0.0
    %2718 = vmatprep.subr.mxu0 0.0
    %2719 = vmatpush2.msra.mxu0 0.0
    %2720 = vmatprep.subr.mxu0 0.0
    %2721 = vmatpush2.msra.mxu0 0.0
    %2722 = vmatprep.subr.mxu0 0.0
    %2723 = vmatpush2.msra.mxu0 0.0
    %2724 = vmatprep.subr.mxu0 0.0
    %2725 = vmatpush2.msra.mxu0 0.0
    %2726 = vmatprep.subr.mxu0 0.0
    %2727 = vmatpush2.msra.mxu0 0.0
    %2728 = vmatprep.subr.mxu0 0.0
    %2729 = vmatpush2.msra.mxu0 0.0
    %2730 = vmatprep.subr.mxu0 0.0
    %2731 = vmatpush2.msra.mxu0 0.0
    %2732 = vmatprep.subr.mxu0 0.0
    %2733 = vmatpush2.msra.mxu0 0.0
    %2734 = vmatprep.subr.mxu0 0.0
    %2735 = vmatpush2.msra.mxu0 0.0
    %2736 = vmatprep.subr.mxu0 0.0
    %2737 = vmatpush2.msra.mxu0 0.0
    %2738 = vmatprep.subr.mxu0 0.0
    %2739 = vmatpush2.msra.mxu0 0.0
    %2740 = vmatprep.subr.mxu0 0.0
    %2741 = vmatpush2.msra.mxu0 0.0
    %2742 = vmatprep.subr.mxu0 0.0
    %2743 = vmatpush2.msra.mxu0 0.0
    %2744 = vmatprep.subr.mxu0 0.0
    %2745 = vmatpush2.msra.mxu0 0.0
    %2746 = vmatprep.mubr.f32.mxu0 0.0
    %v2747 = vand.u32 %v2581, 4294901760
    %2748 = vmatmul.mubr.f32.gmra.mxu0 %v2747
    %v2749 = vpop.f32.mrf.mxu0
    %v2750 = vadd.f32 %v2659, %v2749
    %v2751 = vpop.f32.mrf.mxu0
    %2752 = vdwg.mxu0
    %2753 = vmatprep.subr.mxu0 0.0
    %2754 = vmatpush1.msra.mxu0 0.0
    %2755 = vmatprep.subr.mxu0 0.0
    %2756 = vmatpush1.msra.mxu0 0.0
    %2757 = vmatprep.subr.mxu0 0.0
    %2758 = vmatpush1.msra.mxu0 0.0
    %2759 = vmatprep.subr.mxu0 0.0
    %2760 = vmatpush1.msra.mxu0 0.0
    %2761 = vmatprep.subr.mxu0 0.0
    %2762 = vmatpush1.msra.mxu0 0.0
    %2763 = vmatprep.subr.mxu0 0.0
    %2764 = vmatpush1.msra.mxu0 0.0
    %2765 = vmatprep.subr.mxu0 0.0
    %2766 = vmatpush1.msra.mxu0 0.0
    %2767 = vmatprep.subr.mxu0 0.0
    %2768 = vmatpush1.msra.mxu0 0.0
    %2769 = vmatprep.subr.mxu0 0.0
    %2770 = vmatpush1.msra.mxu0 0.0
    %2771 = vmatprep.subr.mxu0 0.0
    %2772 = vmatpush1.msra.mxu0 0.0
    %2773 = vmatprep.subr.mxu0 0.0
    %2774 = vmatpush1.msra.mxu0 0.0
    %2775 = vmatprep.subr.mxu0 0.0
    %2776 = vmatpush1.msra.mxu0 0.0
    %2777 = vmatprep.subr.mxu0 0.0
    %v2778 = vand.u32 %v41, 4294901760
    %v2779 = vsub.f32 %v41, %v2778
    %2780 = vmatpush1.msra.mxu0 %v2779
    %2781 = vmatprep.subr.mxu0 0.0
    %v2782 = vand.u32 %v40, 4294901760
    %v2783 = vsub.f32 %v40, %v2782
    %2784 = vmatpush1.msra.mxu0 %v2783
    %2785 = vmatprep.subr.mxu0 0.0
    %v2786 = vand.u32 %v39, 4294901760
    %v2787 = vsub.f32 %v39, %v2786
    %2788 = vmatpush1.msra.mxu0 %v2787
    %2789 = vmatprep.subr.mxu0 0.0
    %v2790 = vand.u32 %v38, 4294901760
    %v2791 = vsub.f32 %v38, %v2790
    %2792 = vmatpush1.msra.mxu0 %v2791
    %2793 = vmatprep.subr.mxu0 0.0
    %2794 = vmatpush2.msra.mxu0 0.0
    %2795 = vmatprep.subr.mxu0 0.0
    %2796 = vmatpush2.msra.mxu0 0.0
    %2797 = vmatprep.subr.mxu0 0.0
    %2798 = vmatpush2.msra.mxu0 0.0
    %2799 = vmatprep.subr.mxu0 0.0
    %2800 = vmatpush2.msra.mxu0 0.0
    %2801 = vmatprep.subr.mxu0 0.0
    %2802 = vmatpush2.msra.mxu0 0.0
    %2803 = vmatprep.subr.mxu0 0.0
    %2804 = vmatpush2.msra.mxu0 0.0
    %2805 = vmatprep.subr.mxu0 0.0
    %2806 = vmatpush2.msra.mxu0 0.0
    %2807 = vmatprep.subr.mxu0 0.0
    %2808 = vmatpush2.msra.mxu0 0.0
    %2809 = vmatprep.subr.mxu0 0.0
    %2810 = vmatpush2.msra.mxu0 0.0
    %2811 = vmatprep.subr.mxu0 0.0
    %2812 = vmatpush2.msra.mxu0 0.0
    %2813 = vmatprep.subr.mxu0 0.0
    %2814 = vmatpush2.msra.mxu0 0.0
    %2815 = vmatprep.subr.mxu0 0.0
    %2816 = vmatpush2.msra.mxu0 0.0
    %2817 = vmatprep.subr.mxu0 0.0
    %2818 = vmatpush2.msra.mxu0 0.0
    %2819 = vmatprep.subr.mxu0 0.0
    %2820 = vmatpush2.msra.mxu0 0.0
    %2821 = vmatprep.subr.mxu0 0.0
    %2822 = vmatpush2.msra.mxu0 0.0
    %2823 = vmatprep.subr.mxu0 0.0
    %2824 = vmatpush2.msra.mxu0 0.0
    %2825 = vmatprep.mubr.f32.mxu0 0.0
    %v2826 = vand.u32 %v2581, 4294901760
    %v2827 = vsub.f32 %v2581, %v2826
    %2828 = vmatmul.mubr.f32.gmra.mxu0 %v2827
    %v2829 = vpop.f32.mrf.mxu0
    %v2830 = vadd.f32 %v2750, %v2829
    %v2831 = vpop.f32.mrf.mxu0
    %2832 = vdwg.mxu0
    %2833 = vmatprep.subr.mxu0 0.0
    %2834 = vmatpush1.msra.mxu0 0.0
    %2835 = vmatprep.subr.mxu0 0.0
    %2836 = vmatpush1.msra.mxu0 0.0
    %2837 = vmatprep.subr.mxu0 0.0
    %2838 = vmatpush1.msra.mxu0 0.0
    %2839 = vmatprep.subr.mxu0 0.0
    %2840 = vmatpush1.msra.mxu0 0.0
    %2841 = vmatprep.subr.mxu0 0.0
    %2842 = vmatpush1.msra.mxu0 0.0
    %2843 = vmatprep.subr.mxu0 0.0
    %2844 = vmatpush1.msra.mxu0 0.0
    %2845 = vmatprep.subr.mxu0 0.0
    %2846 = vmatpush1.msra.mxu0 0.0
    %2847 = vmatprep.subr.mxu0 0.0
    %2848 = vmatpush1.msra.mxu0 0.0
    %2849 = vmatprep.subr.mxu0 0.0
    %2850 = vmatpush1.msra.mxu0 0.0
    %2851 = vmatprep.subr.mxu0 0.0
    %2852 = vmatpush1.msra.mxu0 0.0
    %2853 = vmatprep.subr.mxu0 0.0
    %2854 = vmatpush1.msra.mxu0 0.0
    %2855 = vmatprep.subr.mxu0 0.0
    %2856 = vmatpush1.msra.mxu0 0.0
    %2857 = vmatprep.subr.mxu0 0.0
    %v2858 = vand.u32 %v41, 4294901760
    %2859 = vmatpush1.msra.mxu0 %v2858
    %2860 = vmatprep.subr.mxu0 0.0
    %v2861 = vand.u32 %v40, 4294901760
    %2862 = vmatpush1.msra.mxu0 %v2861
    %2863 = vmatprep.subr.mxu0 0.0
    %v2864 = vand.u32 %v39, 4294901760
    %2865 = vmatpush1.msra.mxu0 %v2864
    %2866 = vmatprep.subr.mxu0 0.0
    %v2867 = vand.u32 %v38, 4294901760
    %2868 = vmatpush1.msra.mxu0 %v2867
    %2869 = vmatprep.subr.mxu0 0.0
    %2870 = vmatpush2.msra.mxu0 0.0
    %2871 = vmatprep.subr.mxu0 0.0
    %2872 = vmatpush2.msra.mxu0 0.0
    %2873 = vmatprep.subr.mxu0 0.0
    %2874 = vmatpush2.msra.mxu0 0.0
    %2875 = vmatprep.subr.mxu0 0.0
    %2876 = vmatpush2.msra.mxu0 0.0
    %2877 = vmatprep.subr.mxu0 0.0
    %2878 = vmatpush2.msra.mxu0 0.0
    %2879 = vmatprep.subr.mxu0 0.0
    %2880 = vmatpush2.msra.mxu0 0.0
    %2881 = vmatprep.subr.mxu0 0.0
    %2882 = vmatpush2.msra.mxu0 0.0
    %2883 = vmatprep.subr.mxu0 0.0
    %2884 = vmatpush2.msra.mxu0 0.0
    %2885 = vmatprep.subr.mxu0 0.0
    %2886 = vmatpush2.msra.mxu0 0.0
    %2887 = vmatprep.subr.mxu0 0.0
    %2888 = vmatpush2.msra.mxu0 0.0
    %2889 = vmatprep.subr.mxu0 0.0
    %2890 = vmatpush2.msra.mxu0 0.0
    %2891 = vmatprep.subr.mxu0 0.0
    %2892 = vmatpush2.msra.mxu0 0.0
    %2893 = vmatprep.subr.mxu0 0.0
    %2894 = vmatpush2.msra.mxu0 0.0
    %2895 = vmatprep.subr.mxu0 0.0
    %2896 = vmatpush2.msra.mxu0 0.0
    %2897 = vmatprep.subr.mxu0 0.0
    %2898 = vmatpush2.msra.mxu0 0.0
    %2899 = vmatprep.subr.mxu0 0.0
    %2900 = vmatpush2.msra.mxu0 0.0
    %2901 = vmatprep.mubr.f32.mxu0 0.0
    %v2902 = vand.u32 %v2581, 4294901760
    %v2903 = vsub.f32 %v2581, %v2902
    %v2904 = vand.u32 %v2903, 4294901760
    %2905 = vmatmul.mubr.f32.gmra.mxu0 %v2904
    %v2906 = vpop.f32.mrf.mxu0
    %v2907 = vadd.f32 %v2830, %v2906
    %v2908 = vpop.f32.mrf.mxu0
    %2909 = vdwg.mxu0
    %2910 = vmatprep.subr.mxu0 0.0
    %2911 = vmatpush1.msra.mxu0 0.0
    %2912 = vmatprep.subr.mxu0 0.0
    %2913 = vmatpush1.msra.mxu0 0.0
    %2914 = vmatprep.subr.mxu0 0.0
    %2915 = vmatpush1.msra.mxu0 0.0
    %2916 = vmatprep.subr.mxu0 0.0
    %2917 = vmatpush1.msra.mxu0 0.0
    %2918 = vmatprep.subr.mxu0 0.0
    %2919 = vmatpush1.msra.mxu0 0.0
    %2920 = vmatprep.subr.mxu0 0.0
    %2921 = vmatpush1.msra.mxu0 0.0
    %2922 = vmatprep.subr.mxu0 0.0
    %2923 = vmatpush1.msra.mxu0 0.0
    %2924 = vmatprep.subr.mxu0 0.0
    %2925 = vmatpush1.msra.mxu0 0.0
    %2926 = vmatprep.subr.mxu0 0.0
    %2927 = vmatpush1.msra.mxu0 0.0
    %2928 = vmatprep.subr.mxu0 0.0
    %2929 = vmatpush1.msra.mxu0 0.0
    %2930 = vmatprep.subr.mxu0 0.0
    %2931 = vmatpush1.msra.mxu0 0.0
    %2932 = vmatprep.subr.mxu0 0.0
    %2933 = vmatpush1.msra.mxu0 0.0
    %2934 = vmatprep.subr.mxu0 0.0
    %v2935 = vand.u32 %v41, 4294901760
    %v2936 = vsub.f32 %v41, %v2935
    %v2937 = vand.u32 %v2936, 4294901760
    %2938 = vmatpush1.msra.mxu0 %v2937
    %2939 = vmatprep.subr.mxu0 0.0
    %v2940 = vand.u32 %v40, 4294901760
    %v2941 = vsub.f32 %v40, %v2940
    %v2942 = vand.u32 %v2941, 4294901760
    %2943 = vmatpush1.msra.mxu0 %v2942
    %2944 = vmatprep.subr.mxu0 0.0
    %v2945 = vand.u32 %v39, 4294901760
    %v2946 = vsub.f32 %v39, %v2945
    %v2947 = vand.u32 %v2946, 4294901760
    %2948 = vmatpush1.msra.mxu0 %v2947
    %2949 = vmatprep.subr.mxu0 0.0
    %v2950 = vand.u32 %v38, 4294901760
    %v2951 = vsub.f32 %v38, %v2950
    %v2952 = vand.u32 %v2951, 4294901760
    %2953 = vmatpush1.msra.mxu0 %v2952
    %2954 = vmatprep.subr.mxu0 0.0
    %2955 = vmatpush2.msra.mxu0 0.0
    %2956 = vmatprep.subr.mxu0 0.0
    %2957 = vmatpush2.msra.mxu0 0.0
    %2958 = vmatprep.subr.mxu0 0.0
    %2959 = vmatpush2.msra.mxu0 0.0
    %2960 = vmatprep.subr.mxu0 0.0
    %2961 = vmatpush2.msra.mxu0 0.0
    %2962 = vmatprep.subr.mxu0 0.0
    %2963 = vmatpush2.msra.mxu0 0.0
    %2964 = vmatprep.subr.mxu0 0.0
    %2965 = vmatpush2.msra.mxu0 0.0
    %2966 = vmatprep.subr.mxu0 0.0
    %2967 = vmatpush2.msra.mxu0 0.0
    %2968 = vmatprep.subr.mxu0 0.0
    %2969 = vmatpush2.msra.mxu0 0.0
    %2970 = vmatprep.subr.mxu0 0.0
    %2971 = vmatpush2.msra.mxu0 0.0
    %2972 = vmatprep.subr.mxu0 0.0
    %2973 = vmatpush2.msra.mxu0 0.0
    %2974 = vmatprep.subr.mxu0 0.0
    %2975 = vmatpush2.msra.mxu0 0.0
    %2976 = vmatprep.subr.mxu0 0.0
    %2977 = vmatpush2.msra.mxu0 0.0
    %2978 = vmatprep.subr.mxu0 0.0
    %2979 = vmatpush2.msra.mxu0 0.0
    %2980 = vmatprep.subr.mxu0 0.0
    %2981 = vmatpush2.msra.mxu0 0.0
    %2982 = vmatprep.subr.mxu0 0.0
    %2983 = vmatpush2.msra.mxu0 0.0
    %2984 = vmatprep.subr.mxu0 0.0
    %2985 = vmatpush2.msra.mxu0 0.0
    %2986 = vmatprep.mubr.f32.mxu0 0.0
    %v2987 = vand.u32 %v2581, 4294901760
    %2988 = vmatmul.mubr.f32.gmra.mxu0 %v2987
    %v2989 = vpop.f32.mrf.mxu0
    %v2990 = vadd.f32 %v2907, %v2989
    %v2991 = vpop.f32.mrf.mxu0
    %2992 = vdwg.mxu0
    %2993 = vmatprep.subr.mxu0 0.0
    %2994 = vmatpush1.msra.mxu0 0.0
    %2995 = vmatprep.subr.mxu0 0.0
    %2996 = vmatpush1.msra.mxu0 0.0
    %2997 = vmatprep.subr.mxu0 0.0
    %2998 = vmatpush1.msra.mxu0 0.0
    %2999 = vmatprep.subr.mxu0 0.0
    %3000 = vmatpush1.msra.mxu0 0.0
    %3001 = vmatprep.subr.mxu0 0.0
    %3002 = vmatpush1.msra.mxu0 0.0
    %3003 = vmatprep.subr.mxu0 0.0
    %3004 = vmatpush1.msra.mxu0 0.0
    %3005 = vmatprep.subr.mxu0 0.0
    %3006 = vmatpush1.msra.mxu0 0.0
    %3007 = vmatprep.subr.mxu0 0.0
    %3008 = vmatpush1.msra.mxu0 0.0
    %3009 = vmatprep.subr.mxu0 0.0
    %3010 = vmatpush1.msra.mxu0 0.0
    %3011 = vmatprep.subr.mxu0 0.0
    %3012 = vmatpush1.msra.mxu0 0.0
    %3013 = vmatprep.subr.mxu0 0.0
    %3014 = vmatpush1.msra.mxu0 0.0
    %3015 = vmatprep.subr.mxu0 0.0
    %3016 = vmatpush1.msra.mxu0 0.0
    %3017 = vmatprep.subr.mxu0 0.0
    %v3018 = vand.u32 %v41, 4294901760
    %3019 = vmatpush1.msra.mxu0 %v3018
    %3020 = vmatprep.subr.mxu0 0.0
    %v3021 = vand.u32 %v40, 4294901760
    %3022 = vmatpush1.msra.mxu0 %v3021
    %3023 = vmatprep.subr.mxu0 0.0
    %v3024 = vand.u32 %v39, 4294901760
    %3025 = vmatpush1.msra.mxu0 %v3024
    %3026 = vmatprep.subr.mxu0 0.0
    %v3027 = vand.u32 %v38, 4294901760
    %3028 = vmatpush1.msra.mxu0 %v3027
    %3029 = vmatprep.subr.mxu0 0.0
    %3030 = vmatpush2.msra.mxu0 0.0
    %3031 = vmatprep.subr.mxu0 0.0
    %3032 = vmatpush2.msra.mxu0 0.0
    %3033 = vmatprep.subr.mxu0 0.0
    %3034 = vmatpush2.msra.mxu0 0.0
    %3035 = vmatprep.subr.mxu0 0.0
    %3036 = vmatpush2.msra.mxu0 0.0
    %3037 = vmatprep.subr.mxu0 0.0
    %3038 = vmatpush2.msra.mxu0 0.0
    %3039 = vmatprep.subr.mxu0 0.0
    %3040 = vmatpush2.msra.mxu0 0.0
    %3041 = vmatprep.subr.mxu0 0.0
    %3042 = vmatpush2.msra.mxu0 0.0
    %3043 = vmatprep.subr.mxu0 0.0
    %3044 = vmatpush2.msra.mxu0 0.0
    %3045 = vmatprep.subr.mxu0 0.0
    %3046 = vmatpush2.msra.mxu0 0.0
    %3047 = vmatprep.subr.mxu0 0.0
    %3048 = vmatpush2.msra.mxu0 0.0
    %3049 = vmatprep.subr.mxu0 0.0
    %3050 = vmatpush2.msra.mxu0 0.0
    %3051 = vmatprep.subr.mxu0 0.0
    %3052 = vmatpush2.msra.mxu0 0.0
    %3053 = vmatprep.subr.mxu0 0.0
    %3054 = vmatpush2.msra.mxu0 0.0
    %3055 = vmatprep.subr.mxu0 0.0
    %3056 = vmatpush2.msra.mxu0 0.0
    %3057 = vmatprep.subr.mxu0 0.0
    %3058 = vmatpush2.msra.mxu0 0.0
    %3059 = vmatprep.subr.mxu0 0.0
    %3060 = vmatpush2.msra.mxu0 0.0
    %3061 = vmatprep.mubr.f32.mxu0 0.0
    %v3062 = vand.u32 %v2581, 4294901760
    %3063 = vmatmul.mubr.f32.gmra.mxu0 %v3062
    %v3064 = vpop.f32.mrf.mxu0
    %v3065 = vadd.f32 %v2990, %v3064
    %v3066 = vpop.f32.mrf.mxu0
    %3067 = vdwg.mxu0
    %3068 = vst [vmem:[%s2] sm:$0xff] %v3065
    %3069 = vrot.lane.b32.xlu0 %v25, 64
    %v3070 = vpop.permute.xlu0 %3069
    %vm3071 = vcmask 31744
    %v3072 = vsel %vm3071, %v3070, 0
    %vm3074 = vcmask 1043456
    %v3076 = vsel %vm3074, %v46, 0
    %3078 = vmatprep.subr.mxu0 0.0
    %3079 = vmatpush1.msra.mxu0 0.0
    %3080 = vmatprep.subr.mxu0 0.0
    %3081 = vmatpush1.msra.mxu0 0.0
    %3082 = vmatprep.subr.mxu0 0.0
    %3083 = vmatpush1.msra.mxu0 0.0
    %3084 = vmatprep.subr.mxu0 0.0
    %3085 = vmatpush1.msra.mxu0 0.0
    %3086 = vmatprep.subr.mxu0 0.0
    %3087 = vmatpush1.msra.mxu0 0.0
    %3088 = vmatprep.subr.mxu0 0.0
    %3089 = vmatpush1.msra.mxu0 0.0
    %3090 = vmatprep.subr.mxu0 0.0
    %3091 = vmatpush1.msra.mxu0 0.0
    %3092 = vmatprep.subr.mxu0 0.0
    %3093 = vmatpush1.msra.mxu0 0.0
    %3094 = vmatprep.subr.mxu0 0.0
    %3095 = vmatpush1.msra.mxu0 0.0
    %3096 = vmatprep.subr.mxu0 0.0
    %3097 = vmatpush1.msra.mxu0 0.0
    %3098 = vmatprep.subr.mxu0 0.0
    %3099 = vmatpush1.msra.mxu0 0.0
    %3100 = vmatprep.subr.mxu0 0.0
    %3101 = vmatpush1.msra.mxu0 0.0
    %3102 = vmatprep.subr.mxu0 0.0
    %3103 = vmatpush1.msra.mxu0 0.0
    %3104 = vmatprep.subr.mxu0 0.0
    %3105 = vmatpush1.msra.mxu0 0.0
    %3106 = vmatprep.subr.mxu0 0.0
    %3107 = vmatpush1.msra.mxu0 0.0
    %3108 = vmatprep.subr.mxu0 0.0
    %v3109 = vand.u32 %v3076, 4294901760
    %3110 = vmatpush1.msra.mxu0 %v3109
    %3111 = vmatprep.subr.mxu0 0.0
    %3112 = vmatpush2.msra.mxu0 0.0
    %3113 = vmatprep.subr.mxu0 0.0
    %3114 = vmatpush2.msra.mxu0 0.0
    %3115 = vmatprep.subr.mxu0 0.0
    %3116 = vmatpush2.msra.mxu0 0.0
    %3117 = vmatprep.subr.mxu0 0.0
    %3118 = vmatpush2.msra.mxu0 0.0
    %3119 = vmatprep.subr.mxu0 0.0
    %3120 = vmatpush2.msra.mxu0 0.0
    %3121 = vmatprep.subr.mxu0 0.0
    %3122 = vmatpush2.msra.mxu0 0.0
    %3123 = vmatprep.subr.mxu0 0.0
    %3124 = vmatpush2.msra.mxu0 0.0
    %3125 = vmatprep.subr.mxu0 0.0
    %3126 = vmatpush2.msra.mxu0 0.0
    %3127 = vmatprep.subr.mxu0 0.0
    %3128 = vmatpush2.msra.mxu0 0.0
    %3129 = vmatprep.subr.mxu0 0.0
    %3130 = vmatpush2.msra.mxu0 0.0
    %3131 = vmatprep.subr.mxu0 0.0
    %3132 = vmatpush2.msra.mxu0 0.0
    %3133 = vmatprep.subr.mxu0 0.0
    %3134 = vmatpush2.msra.mxu0 0.0
    %3135 = vmatprep.subr.mxu0 0.0
    %3136 = vmatpush2.msra.mxu0 0.0
    %3137 = vmatprep.subr.mxu0 0.0
    %3138 = vmatpush2.msra.mxu0 0.0
    %3139 = vmatprep.subr.mxu0 0.0
    %3140 = vmatpush2.msra.mxu0 0.0
    %3141 = vmatprep.subr.mxu0 0.0
    %3142 = vmatpush2.msra.mxu0 0.0
    %3143 = vmatprep.mubr.f32.mxu0 0.0
    %v3144 = vand.u32 %v3072, 4294901760
    %v3145 = vsub.f32 %v3072, %v3144
    %v3146 = vand.u32 %v3145, 4294901760
    %v3147 = vsub.f32 %v3145, %v3146
    %v3148 = vand.u32 %v3147, 4294901760
    %3149 = vmatmul.mubr.f32.gmra.mxu0 %v3148
    %v3150 = vpop.f32.mrf.mxu0
    %v3151 = vadd.f32 0.0, %v3150
    %v3152 = vpop.f32.mrf.mxu0
    %3153 = vdwg.mxu0
    %3154 = vmatprep.subr.mxu0 0.0
    %3155 = vmatpush1.msra.mxu0 0.0
    %3156 = vmatprep.subr.mxu0 0.0
    %3157 = vmatpush1.msra.mxu0 0.0
    %3158 = vmatprep.subr.mxu0 0.0
    %3159 = vmatpush1.msra.mxu0 0.0
    %3160 = vmatprep.subr.mxu0 0.0
    %3161 = vmatpush1.msra.mxu0 0.0
    %3162 = vmatprep.subr.mxu0 0.0
    %3163 = vmatpush1.msra.mxu0 0.0
    %3164 = vmatprep.subr.mxu0 0.0
    %3165 = vmatpush1.msra.mxu0 0.0
    %3166 = vmatprep.subr.mxu0 0.0
    %3167 = vmatpush1.msra.mxu0 0.0
    %3168 = vmatprep.subr.mxu0 0.0
    %3169 = vmatpush1.msra.mxu0 0.0
    %3170 = vmatprep.subr.mxu0 0.0
    %3171 = vmatpush1.msra.mxu0 0.0
    %3172 = vmatprep.subr.mxu0 0.0
    %3173 = vmatpush1.msra.mxu0 0.0
    %3174 = vmatprep.subr.mxu0 0.0
    %3175 = vmatpush1.msra.mxu0 0.0
    %3176 = vmatprep.subr.mxu0 0.0
    %3177 = vmatpush1.msra.mxu0 0.0
    %3178 = vmatprep.subr.mxu0 0.0
    %3179 = vmatpush1.msra.mxu0 0.0
    %3180 = vmatprep.subr.mxu0 0.0
    %3181 = vmatpush1.msra.mxu0 0.0
    %3182 = vmatprep.subr.mxu0 0.0
    %3183 = vmatpush1.msra.mxu0 0.0
    %3184 = vmatprep.subr.mxu0 0.0
    %v3185 = vand.u32 %v3076, 4294901760
    %v3186 = vsub.f32 %v3076, %v3185
    %v3187 = vand.u32 %v3186, 4294901760
    %v3188 = vsub.f32 %v3186, %v3187
    %v3189 = vand.u32 %v3188, 4294901760
    %3190 = vmatpush1.msra.mxu0 %v3189
    %3191 = vmatprep.subr.mxu0 0.0
    %3192 = vmatpush2.msra.mxu0 0.0
    %3193 = vmatprep.subr.mxu0 0.0
    %3194 = vmatpush2.msra.mxu0 0.0
    %3195 = vmatprep.subr.mxu0 0.0
    %3196 = vmatpush2.msra.mxu0 0.0
    %3197 = vmatprep.subr.mxu0 0.0
    %3198 = vmatpush2.msra.mxu0 0.0
    %3199 = vmatprep.subr.mxu0 0.0
    %3200 = vmatpush2.msra.mxu0 0.0
    %3201 = vmatprep.subr.mxu0 0.0
    %3202 = vmatpush2.msra.mxu0 0.0
    %3203 = vmatprep.subr.mxu0 0.0
    %3204 = vmatpush2.msra.mxu0 0.0
    %3205 = vmatprep.subr.mxu0 0.0
    %3206 = vmatpush2.msra.mxu0 0.0
    %3207 = vmatprep.subr.mxu0 0.0
    %3208 = vmatpush2.msra.mxu0 0.0
    %3209 = vmatprep.subr.mxu0 0.0
    %3210 = vmatpush2.msra.mxu0 0.0
    %3211 = vmatprep.subr.mxu0 0.0
    %3212 = vmatpush2.msra.mxu0 0.0
    %3213 = vmatprep.subr.mxu0 0.0
    %3214 = vmatpush2.msra.mxu0 0.0
    %3215 = vmatprep.subr.mxu0 0.0
    %3216 = vmatpush2.msra.mxu0 0.0
    %3217 = vmatprep.subr.mxu0 0.0
    %3218 = vmatpush2.msra.mxu0 0.0
    %3219 = vmatprep.subr.mxu0 0.0
    %3220 = vmatpush2.msra.mxu0 0.0
    %3221 = vmatprep.subr.mxu0 0.0
    %3222 = vmatpush2.msra.mxu0 0.0
    %3223 = vmatprep.mubr.f32.mxu0 0.0
    %v3224 = vand.u32 %v3072, 4294901760
    %3225 = vmatmul.mubr.f32.gmra.mxu0 %v3224
    %v3226 = vpop.f32.mrf.mxu0
    %v3227 = vadd.f32 %v3151, %v3226
    %v3228 = vpop.f32.mrf.mxu0
    %3229 = vdwg.mxu0
    %3230 = vmatprep.subr.mxu0 0.0
    %3231 = vmatpush1.msra.mxu0 0.0
    %3232 = vmatprep.subr.mxu0 0.0
    %3233 = vmatpush1.msra.mxu0 0.0
    %3234 = vmatprep.subr.mxu0 0.0
    %3235 = vmatpush1.msra.mxu0 0.0
    %3236 = vmatprep.subr.mxu0 0.0
    %3237 = vmatpush1.msra.mxu0 0.0
    %3238 = vmatprep.subr.mxu0 0.0
    %3239 = vmatpush1.msra.mxu0 0.0
    %3240 = vmatprep.subr.mxu0 0.0
    %3241 = vmatpush1.msra.mxu0 0.0
    %3242 = vmatprep.subr.mxu0 0.0
    %3243 = vmatpush1.msra.mxu0 0.0
    %3244 = vmatprep.subr.mxu0 0.0
    %3245 = vmatpush1.msra.mxu0 0.0
    %3246 = vmatprep.subr.mxu0 0.0
    %3247 = vmatpush1.msra.mxu0 0.0
    %3248 = vmatprep.subr.mxu0 0.0
    %3249 = vmatpush1.msra.mxu0 0.0
    %3250 = vmatprep.subr.mxu0 0.0
    %3251 = vmatpush1.msra.mxu0 0.0
    %3252 = vmatprep.subr.mxu0 0.0
    %3253 = vmatpush1.msra.mxu0 0.0
    %3254 = vmatprep.subr.mxu0 0.0
    %3255 = vmatpush1.msra.mxu0 0.0
    %3256 = vmatprep.subr.mxu0 0.0
    %3257 = vmatpush1.msra.mxu0 0.0
    %3258 = vmatprep.subr.mxu0 0.0
    %3259 = vmatpush1.msra.mxu0 0.0
    %3260 = vmatprep.subr.mxu0 0.0
    %v3261 = vand.u32 %v3076, 4294901760
    %v3262 = vsub.f32 %v3076, %v3261
    %3263 = vmatpush1.msra.mxu0 %v3262
    %3264 = vmatprep.subr.mxu0 0.0
    %3265 = vmatpush2.msra.mxu0 0.0
    %3266 = vmatprep.subr.mxu0 0.0
    %3267 = vmatpush2.msra.mxu0 0.0
    %3268 = vmatprep.subr.mxu0 0.0
    %3269 = vmatpush2.msra.mxu0 0.0
    %3270 = vmatprep.subr.mxu0 0.0
    %3271 = vmatpush2.msra.mxu0 0.0
    %3272 = vmatprep.subr.mxu0 0.0
    %3273 = vmatpush2.msra.mxu0 0.0
    %3274 = vmatprep.subr.mxu0 0.0
    %3275 = vmatpush2.msra.mxu0 0.0
    %3276 = vmatprep.subr.mxu0 0.0
    %3277 = vmatpush2.msra.mxu0 0.0
    %3278 = vmatprep.subr.mxu0 0.0
    %3279 = vmatpush2.msra.mxu0 0.0
    %3280 = vmatprep.subr.mxu0 0.0
    %3281 = vmatpush2.msra.mxu0 0.0
    %3282 = vmatprep.subr.mxu0 0.0
    %3283 = vmatpush2.msra.mxu0 0.0
    %3284 = vmatprep.subr.mxu0 0.0
    %3285 = vmatpush2.msra.mxu0 0.0
    %3286 = vmatprep.subr.mxu0 0.0
    %3287 = vmatpush2.msra.mxu0 0.0
    %3288 = vmatprep.subr.mxu0 0.0
    %3289 = vmatpush2.msra.mxu0 0.0
    %3290 = vmatprep.subr.mxu0 0.0
    %3291 = vmatpush2.msra.mxu0 0.0
    %3292 = vmatprep.subr.mxu0 0.0
    %3293 = vmatpush2.msra.mxu0 0.0
    %3294 = vmatprep.subr.mxu0 0.0
    %3295 = vmatpush2.msra.mxu0 0.0
    %3296 = vmatprep.mubr.f32.mxu0 0.0
    %v3297 = vand.u32 %v3072, 4294901760
    %v3298 = vsub.f32 %v3072, %v3297
    %3299 = vmatmul.mubr.f32.gmra.mxu0 %v3298
    %v3300 = vpop.f32.mrf.mxu0
    %v3301 = vadd.f32 %v3227, %v3300
    %v3302 = vpop.f32.mrf.mxu0
    %3303 = vdwg.mxu0
    %3304 = vmatprep.subr.mxu0 0.0
    %3305 = vmatpush1.msra.mxu0 0.0
    %3306 = vmatprep.subr.mxu0 0.0
    %3307 = vmatpush1.msra.mxu0 0.0
    %3308 = vmatprep.subr.mxu0 0.0
    %3309 = vmatpush1.msra.mxu0 0.0
    %3310 = vmatprep.subr.mxu0 0.0
    %3311 = vmatpush1.msra.mxu0 0.0
    %3312 = vmatprep.subr.mxu0 0.0
    %3313 = vmatpush1.msra.mxu0 0.0
    %3314 = vmatprep.subr.mxu0 0.0
    %3315 = vmatpush1.msra.mxu0 0.0
    %3316 = vmatprep.subr.mxu0 0.0
    %3317 = vmatpush1.msra.mxu0 0.0
    %3318 = vmatprep.subr.mxu0 0.0
    %3319 = vmatpush1.msra.mxu0 0.0
    %3320 = vmatprep.subr.mxu0 0.0
    %3321 = vmatpush1.msra.mxu0 0.0
    %3322 = vmatprep.subr.mxu0 0.0
    %3323 = vmatpush1.msra.mxu0 0.0
    %3324 = vmatprep.subr.mxu0 0.0
    %3325 = vmatpush1.msra.mxu0 0.0
    %3326 = vmatprep.subr.mxu0 0.0
    %3327 = vmatpush1.msra.mxu0 0.0
    %3328 = vmatprep.subr.mxu0 0.0
    %3329 = vmatpush1.msra.mxu0 0.0
    %3330 = vmatprep.subr.mxu0 0.0
    %3331 = vmatpush1.msra.mxu0 0.0
    %3332 = vmatprep.subr.mxu0 0.0
    %3333 = vmatpush1.msra.mxu0 0.0
    %3334 = vmatprep.subr.mxu0 0.0
    %v3335 = vand.u32 %v3076, 4294901760
    %3336 = vmatpush1.msra.mxu0 %v3335
    %3337 = vmatprep.subr.mxu0 0.0
    %3338 = vmatpush2.msra.mxu0 0.0
    %3339 = vmatprep.subr.mxu0 0.0
    %3340 = vmatpush2.msra.mxu0 0.0
    %3341 = vmatprep.subr.mxu0 0.0
    %3342 = vmatpush2.msra.mxu0 0.0
    %3343 = vmatprep.subr.mxu0 0.0
    %3344 = vmatpush2.msra.mxu0 0.0
    %3345 = vmatprep.subr.mxu0 0.0
    %3346 = vmatpush2.msra.mxu0 0.0
    %3347 = vmatprep.subr.mxu0 0.0
    %3348 = vmatpush2.msra.mxu0 0.0
    %3349 = vmatprep.subr.mxu0 0.0
    %3350 = vmatpush2.msra.mxu0 0.0
    %3351 = vmatprep.subr.mxu0 0.0
    %3352 = vmatpush2.msra.mxu0 0.0
    %3353 = vmatprep.subr.mxu0 0.0
    %3354 = vmatpush2.msra.mxu0 0.0
    %3355 = vmatprep.subr.mxu0 0.0
    %3356 = vmatpush2.msra.mxu0 0.0
    %3357 = vmatprep.subr.mxu0 0.0
    %3358 = vmatpush2.msra.mxu0 0.0
    %3359 = vmatprep.subr.mxu0 0.0
    %3360 = vmatpush2.msra.mxu0 0.0
    %3361 = vmatprep.subr.mxu0 0.0
    %3362 = vmatpush2.msra.mxu0 0.0
    %3363 = vmatprep.subr.mxu0 0.0
    %3364 = vmatpush2.msra.mxu0 0.0
    %3365 = vmatprep.subr.mxu0 0.0
    %3366 = vmatpush2.msra.mxu0 0.0
    %3367 = vmatprep.subr.mxu0 0.0
    %3368 = vmatpush2.msra.mxu0 0.0
    %3369 = vmatprep.mubr.f32.mxu0 0.0
    %v3370 = vand.u32 %v3072, 4294901760
    %v3371 = vsub.f32 %v3072, %v3370
    %v3372 = vand.u32 %v3371, 4294901760
    %3373 = vmatmul.mubr.f32.gmra.mxu0 %v3372
    %v3374 = vpop.f32.mrf.mxu0
    %v3375 = vadd.f32 %v3301, %v3374
    %v3376 = vpop.f32.mrf.mxu0
    %3377 = vdwg.mxu0
    %3378 = vmatprep.subr.mxu0 0.0
    %3379 = vmatpush1.msra.mxu0 0.0
    %3380 = vmatprep.subr.mxu0 0.0
    %3381 = vmatpush1.msra.mxu0 0.0
    %3382 = vmatprep.subr.mxu0 0.0
    %3383 = vmatpush1.msra.mxu0 0.0
    %3384 = vmatprep.subr.mxu0 0.0
    %3385 = vmatpush1.msra.mxu0 0.0
    %3386 = vmatprep.subr.mxu0 0.0
    %3387 = vmatpush1.msra.mxu0 0.0
    %3388 = vmatprep.subr.mxu0 0.0
    %3389 = vmatpush1.msra.mxu0 0.0
    %3390 = vmatprep.subr.mxu0 0.0
    %3391 = vmatpush1.msra.mxu0 0.0
    %3392 = vmatprep.subr.mxu0 0.0
    %3393 = vmatpush1.msra.mxu0 0.0
    %3394 = vmatprep.subr.mxu0 0.0
    %3395 = vmatpush1.msra.mxu0 0.0
    %3396 = vmatprep.subr.mxu0 0.0
    %3397 = vmatpush1.msra.mxu0 0.0
    %3398 = vmatprep.subr.mxu0 0.0
    %3399 = vmatpush1.msra.mxu0 0.0
    %3400 = vmatprep.subr.mxu0 0.0
    %3401 = vmatpush1.msra.mxu0 0.0
    %3402 = vmatprep.subr.mxu0 0.0
    %3403 = vmatpush1.msra.mxu0 0.0
    %3404 = vmatprep.subr.mxu0 0.0
    %3405 = vmatpush1.msra.mxu0 0.0
    %3406 = vmatprep.subr.mxu0 0.0
    %3407 = vmatpush1.msra.mxu0 0.0
    %3408 = vmatprep.subr.mxu0 0.0
    %v3409 = vand.u32 %v3076, 4294901760
    %v3410 = vsub.f32 %v3076, %v3409
    %v3411 = vand.u32 %v3410, 4294901760
    %3412 = vmatpush1.msra.mxu0 %v3411
    %3413 = vmatprep.subr.mxu0 0.0
    %3414 = vmatpush2.msra.mxu0 0.0
    %3415 = vmatprep.subr.mxu0 0.0
    %3416 = vmatpush2.msra.mxu0 0.0
    %3417 = vmatprep.subr.mxu0 0.0
    %3418 = vmatpush2.msra.mxu0 0.0
    %3419 = vmatprep.subr.mxu0 0.0
    %3420 = vmatpush2.msra.mxu0 0.0
    %3421 = vmatprep.subr.mxu0 0.0
    %3422 = vmatpush2.msra.mxu0 0.0
    %3423 = vmatprep.subr.mxu0 0.0
    %3424 = vmatpush2.msra.mxu0 0.0
    %3425 = vmatprep.subr.mxu0 0.0
    %3426 = vmatpush2.msra.mxu0 0.0
    %3427 = vmatprep.subr.mxu0 0.0
    %3428 = vmatpush2.msra.mxu0 0.0
    %3429 = vmatprep.subr.mxu0 0.0
    %3430 = vmatpush2.msra.mxu0 0.0
    %3431 = vmatprep.subr.mxu0 0.0
    %3432 = vmatpush2.msra.mxu0 0.0
    %3433 = vmatprep.subr.mxu0 0.0
    %3434 = vmatpush2.msra.mxu0 0.0
    %3435 = vmatprep.subr.mxu0 0.0
    %3436 = vmatpush2.msra.mxu0 0.0
    %3437 = vmatprep.subr.mxu0 0.0
    %3438 = vmatpush2.msra.mxu0 0.0
    %3439 = vmatprep.subr.mxu0 0.0
    %3440 = vmatpush2.msra.mxu0 0.0
    %3441 = vmatprep.subr.mxu0 0.0
    %3442 = vmatpush2.msra.mxu0 0.0
    %3443 = vmatprep.subr.mxu0 0.0
    %3444 = vmatpush2.msra.mxu0 0.0
    %3445 = vmatprep.mubr.f32.mxu0 0.0
    %v3446 = vand.u32 %v3072, 4294901760
    %3447 = vmatmul.mubr.f32.gmra.mxu0 %v3446
    %v3448 = vpop.f32.mrf.mxu0
    %v3449 = vadd.f32 %v3375, %v3448
    %v3450 = vpop.f32.mrf.mxu0
    %3451 = vdwg.mxu0
    %3452 = vmatprep.subr.mxu0 0.0
    %3453 = vmatpush1.msra.mxu0 0.0
    %3454 = vmatprep.subr.mxu0 0.0
    %3455 = vmatpush1.msra.mxu0 0.0
    %3456 = vmatprep.subr.mxu0 0.0
    %3457 = vmatpush1.msra.mxu0 0.0
    %3458 = vmatprep.subr.mxu0 0.0
    %3459 = vmatpush1.msra.mxu0 0.0
    %3460 = vmatprep.subr.mxu0 0.0
    %3461 = vmatpush1.msra.mxu0 0.0
    %3462 = vmatprep.subr.mxu0 0.0
    %3463 = vmatpush1.msra.mxu0 0.0
    %3464 = vmatprep.subr.mxu0 0.0
    %3465 = vmatpush1.msra.mxu0 0.0
    %3466 = vmatprep.subr.mxu0 0.0
    %3467 = vmatpush1.msra.mxu0 0.0
    %3468 = vmatprep.subr.mxu0 0.0
    %3469 = vmatpush1.msra.mxu0 0.0
    %3470 = vmatprep.subr.mxu0 0.0
    %3471 = vmatpush1.msra.mxu0 0.0
    %3472 = vmatprep.subr.mxu0 0.0
    %3473 = vmatpush1.msra.mxu0 0.0
    %3474 = vmatprep.subr.mxu0 0.0
    %3475 = vmatpush1.msra.mxu0 0.0
    %3476 = vmatprep.subr.mxu0 0.0
    %3477 = vmatpush1.msra.mxu0 0.0
    %3478 = vmatprep.subr.mxu0 0.0
    %3479 = vmatpush1.msra.mxu0 0.0
    %3480 = vmatprep.subr.mxu0 0.0
    %3481 = vmatpush1.msra.mxu0 0.0
    %3482 = vmatprep.subr.mxu0 0.0
    %v3483 = vand.u32 %v3076, 4294901760
    %3484 = vmatpush1.msra.mxu0 %v3483
    %3485 = vmatprep.subr.mxu0 0.0
    %3486 = vmatpush2.msra.mxu0 0.0
    %3487 = vmatprep.subr.mxu0 0.0
    %3488 = vmatpush2.msra.mxu0 0.0
    %3489 = vmatprep.subr.mxu0 0.0
    %3490 = vmatpush2.msra.mxu0 0.0
    %3491 = vmatprep.subr.mxu0 0.0
    %3492 = vmatpush2.msra.mxu0 0.0
    %3493 = vmatprep.subr.mxu0 0.0
    %3494 = vmatpush2.msra.mxu0 0.0
    %3495 = vmatprep.subr.mxu0 0.0
    %3496 = vmatpush2.msra.mxu0 0.0
    %3497 = vmatprep.subr.mxu0 0.0
    %3498 = vmatpush2.msra.mxu0 0.0
    %3499 = vmatprep.subr.mxu0 0.0
    %3500 = vmatpush2.msra.mxu0 0.0
    %3501 = vmatprep.subr.mxu0 0.0
    %3502 = vmatpush2.msra.mxu0 0.0
    %3503 = vmatprep.subr.mxu0 0.0
    %3504 = vmatpush2.msra.mxu0 0.0
    %3505 = vmatprep.subr.mxu0 0.0
    %3506 = vmatpush2.msra.mxu0 0.0
    %3507 = vmatprep.subr.mxu0 0.0
    %3508 = vmatpush2.msra.mxu0 0.0
    %3509 = vmatprep.subr.mxu0 0.0
    %3510 = vmatpush2.msra.mxu0 0.0
    %3511 = vmatprep.subr.mxu0 0.0
    %3512 = vmatpush2.msra.mxu0 0.0
    %3513 = vmatprep.subr.mxu0 0.0
    %3514 = vmatpush2.msra.mxu0 0.0
    %3515 = vmatprep.subr.mxu0 0.0
    %3516 = vmatpush2.msra.mxu0 0.0
    %3517 = vmatprep.mubr.f32.mxu0 0.0
    %v3518 = vand.u32 %v3072, 4294901760
    %3519 = vmatmul.mubr.f32.gmra.mxu0 %v3518
    %v3520 = vpop.f32.mrf.mxu0
    %v3521 = vadd.f32 %v3449, %v3520
    %v3522 = vpop.f32.mrf.mxu0
    %3523 = vdwg.mxu0
    %v3524 = vlaneseq
    %v3525 = vshrl.u32 %v3524, 7
    %v3526 = vsub.s32 0, %v3525
    %v3527 = vrot.slane %v45, %v3526
    %v3528 = vsub.f32 %v3527, %v3521
    %v3529 = vand.u32 2147483647, %v3528
    %vm3530 = vcmp.lt.f32.partialorder %v3529, 0.5
    %v3531 = vsel %vm3530, 1, 0
    %v3532 = vcvt.s32.f32 %v3531
    %vm3533 = vcmask 523520
    %v3534 = vsel %vm3533, %v3065, -inf
    %3535 = vmax.xlane.f32.xlu0 %v3534
    %v3536 = vpop.xlane.xlu0 %3535
    %v3537 = vsub.f32 %v3065, %v3536
    %v3538 = vmul.f32 %v3537, 1.442695
    %v3539 = vpow.pop %v3538
    %3541 = vrot.lane.b32.xlu0 %v3539, 96
    %v3542 = vpop.permute.xlu0 %3541
    %3543 = vrot.lane.b32.xlu0 %v30, 64
    %v3544 = vpop.permute.xlu0 %3543
    %3545 = vrot.lane.b32.xlu0 %v31, 64
    %v3546 = vpop.permute.xlu0 %3545
    %3547 = vrot.lane.b32.xlu0 %v32, 64
    %v3548 = vpop.permute.xlu0 %3547
    %3549 = vrot.lane.b32.xlu0 %v33, 64
    %v3550 = vpop.permute.xlu0 %3549
    %v3555 = vsel %vm51, %v3542, 0
    %3557 = vmatprep.subr.mxu0 0.0
    %3558 = vmatpush1.msra.mxu0 0.0
    %3559 = vmatprep.subr.mxu0 0.0
    %3560 = vmatpush1.msra.mxu0 0.0
    %3561 = vmatprep.subr.mxu0 0.0
    %3562 = vmatpush1.msra.mxu0 0.0
    %3563 = vmatprep.subr.mxu0 0.0
    %3564 = vmatpush1.msra.mxu0 0.0
    %3565 = vmatprep.subr.mxu0 0.0
    %3566 = vmatpush1.msra.mxu0 0.0
    %3567 = vmatprep.subr.mxu0 0.0
    %3568 = vmatpush1.msra.mxu0 0.0
    %3569 = vmatprep.subr.mxu0 0.0
    %3570 = vmatpush1.msra.mxu0 0.0
    %3571 = vmatprep.subr.mxu0 0.0
    %3572 = vmatpush1.msra.mxu0 0.0
    %3573 = vmatprep.subr.mxu0 0.0
    %3574 = vmatpush1.msra.mxu0 0.0
    %3575 = vmatprep.subr.mxu0 0.0
    %3576 = vmatpush1.msra.mxu0 0.0
    %3577 = vmatprep.subr.mxu0 0.0
    %3578 = vmatpush1.msra.mxu0 0.0
    %3579 = vmatprep.subr.mxu0 0.0
    %3580 = vmatpush1.msra.mxu0 0.0
    %3581 = vmatprep.subr.mxu0 0.0
    %v3582 = vand.u32 %v3550, 4294901760
    %3583 = vmatpush1.msra.mxu0 %v3582
    %3584 = vmatprep.subr.mxu0 0.0
    %v3585 = vand.u32 %v3548, 4294901760
    %3586 = vmatpush1.msra.mxu0 %v3585
    %3587 = vmatprep.subr.mxu0 0.0
    %v3588 = vand.u32 %v3546, 4294901760
    %3589 = vmatpush1.msra.mxu0 %v3588
    %3590 = vmatprep.subr.mxu0 0.0
    %v3591 = vand.u32 %v3544, 4294901760
    %3592 = vmatpush1.msra.mxu0 %v3591
    %3593 = vmatprep.subr.mxu0 0.0
    %3594 = vmatpush2.msra.mxu0 0.0
    %3595 = vmatprep.subr.mxu0 0.0
    %3596 = vmatpush2.msra.mxu0 0.0
    %3597 = vmatprep.subr.mxu0 0.0
    %3598 = vmatpush2.msra.mxu0 0.0
    %3599 = vmatprep.subr.mxu0 0.0
    %3600 = vmatpush2.msra.mxu0 0.0
    %3601 = vmatprep.subr.mxu0 0.0
    %3602 = vmatpush2.msra.mxu0 0.0
    %3603 = vmatprep.subr.mxu0 0.0
    %3604 = vmatpush2.msra.mxu0 0.0
    %3605 = vmatprep.subr.mxu0 0.0
    %3606 = vmatpush2.msra.mxu0 0.0
    %3607 = vmatprep.subr.mxu0 0.0
    %3608 = vmatpush2.msra.mxu0 0.0
    %3609 = vmatprep.subr.mxu0 0.0
    %3610 = vmatpush2.msra.mxu0 0.0
    %3611 = vmatprep.subr.mxu0 0.0
    %3612 = vmatpush2.msra.mxu0 0.0
    %3613 = vmatprep.subr.mxu0 0.0
    %3614 = vmatpush2.msra.mxu0 0.0
    %3615 = vmatprep.subr.mxu0 0.0
    %3616 = vmatpush2.msra.mxu0 0.0
    %3617 = vmatprep.subr.mxu0 0.0
    %3618 = vmatpush2.msra.mxu0 0.0
    %3619 = vmatprep.subr.mxu0 0.0
    %3620 = vmatpush2.msra.mxu0 0.0
    %3621 = vmatprep.subr.mxu0 0.0
    %3622 = vmatpush2.msra.mxu0 0.0
    %3623 = vmatprep.subr.mxu0 0.0
    %3624 = vmatpush2.msra.mxu0 0.0
    %3625 = vmatprep.mubr.f32.mxu0 0.0
    %v3626 = vand.u32 %v3555, 4294901760
    %v3627 = vsub.f32 %v3555, %v3626
    %v3628 = vand.u32 %v3627, 4294901760
    %v3629 = vsub.f32 %v3627, %v3628
    %v3630 = vand.u32 %v3629, 4294901760
    %3631 = vmatmul.mubr.f32.gmra.mxu0 %v3630
    %v3632 = vpop.f32.mrf.mxu0
    %v3633 = vadd.f32 0.0, %v3632
    %v3634 = vpop.f32.mrf.mxu0
    %3635 = vdwg.mxu0
    %3636 = vmatprep.subr.mxu0 0.0
    %3637 = vmatpush1.msra.mxu0 0.0
    %3638 = vmatprep.subr.mxu0 0.0
    %3639 = vmatpush1.msra.mxu0 0.0
    %3640 = vmatprep.subr.mxu0 0.0
    %3641 = vmatpush1.msra.mxu0 0.0
    %3642 = vmatprep.subr.mxu0 0.0
    %3643 = vmatpush1.msra.mxu0 0.0
    %3644 = vmatprep.subr.mxu0 0.0
    %3645 = vmatpush1.msra.mxu0 0.0
    %3646 = vmatprep.subr.mxu0 0.0
    %3647 = vmatpush1.msra.mxu0 0.0
    %3648 = vmatprep.subr.mxu0 0.0
    %3649 = vmatpush1.msra.mxu0 0.0
    %3650 = vmatprep.subr.mxu0 0.0
    %3651 = vmatpush1.msra.mxu0 0.0
    %3652 = vmatprep.subr.mxu0 0.0
    %3653 = vmatpush1.msra.mxu0 0.0
    %3654 = vmatprep.subr.mxu0 0.0
    %3655 = vmatpush1.msra.mxu0 0.0
    %3656 = vmatprep.subr.mxu0 0.0
    %3657 = vmatpush1.msra.mxu0 0.0
    %3658 = vmatprep.subr.mxu0 0.0
    %3659 = vmatpush1.msra.mxu0 0.0
    %3660 = vmatprep.subr.mxu0 0.0
    %v3661 = vand.u32 %v3550, 4294901760
    %v3662 = vsub.f32 %v3550, %v3661
    %v3663 = vand.u32 %v3662, 4294901760
    %v3664 = vsub.f32 %v3662, %v3663
    %v3665 = vand.u32 %v3664, 4294901760
    %3666 = vmatpush1.msra.mxu0 %v3665
    %3667 = vmatprep.subr.mxu0 0.0
    %v3668 = vand.u32 %v3548, 4294901760
    %v3669 = vsub.f32 %v3548, %v3668
    %v3670 = vand.u32 %v3669, 4294901760
    %v3671 = vsub.f32 %v3669, %v3670
    %v3672 = vand.u32 %v3671, 4294901760
    %3673 = vmatpush1.msra.mxu0 %v3672
    %3674 = vmatprep.subr.mxu0 0.0
    %v3675 = vand.u32 %v3546, 4294901760
    %v3676 = vsub.f32 %v3546, %v3675
    %v3677 = vand.u32 %v3676, 4294901760
    %v3678 = vsub.f32 %v3676, %v3677
    %v3679 = vand.u32 %v3678, 4294901760
    %3680 = vmatpush1.msra.mxu0 %v3679
    %3681 = vmatprep.subr.mxu0 0.0
    %v3682 = vand.u32 %v3544, 4294901760
    %v3683 = vsub.f32 %v3544, %v3682
    %v3684 = vand.u32 %v3683, 4294901760
    %v3685 = vsub.f32 %v3683, %v3684
    %v3686 = vand.u32 %v3685, 4294901760
    %3687 = vmatpush1.msra.mxu0 %v3686
    %3688 = vmatprep.subr.mxu0 0.0
    %3689 = vmatpush2.msra.mxu0 0.0
    %3690 = vmatprep.subr.mxu0 0.0
    %3691 = vmatpush2.msra.mxu0 0.0
    %3692 = vmatprep.subr.mxu0 0.0
    %3693 = vmatpush2.msra.mxu0 0.0
    %3694 = vmatprep.subr.mxu0 0.0
    %3695 = vmatpush2.msra.mxu0 0.0
    %3696 = vmatprep.subr.mxu0 0.0
    %3697 = vmatpush2.msra.mxu0 0.0
    %3698 = vmatprep.subr.mxu0 0.0
    %3699 = vmatpush2.msra.mxu0 0.0
    %3700 = vmatprep.subr.mxu0 0.0
    %3701 = vmatpush2.msra.mxu0 0.0
    %3702 = vmatprep.subr.mxu0 0.0
    %3703 = vmatpush2.msra.mxu0 0.0
    %3704 = vmatprep.subr.mxu0 0.0
    %3705 = vmatpush2.msra.mxu0 0.0
    %3706 = vmatprep.subr.mxu0 0.0
    %3707 = vmatpush2.msra.mxu0 0.0
    %3708 = vmatprep.subr.mxu0 0.0
    %3709 = vmatpush2.msra.mxu0 0.0
    %3710 = vmatprep.subr.mxu0 0.0
    %3711 = vmatpush2.msra.mxu0 0.0
    %3712 = vmatprep.subr.mxu0 0.0
    %3713 = vmatpush2.msra.mxu0 0.0
    %3714 = vmatprep.subr.mxu0 0.0
    %3715 = vmatpush2.msra.mxu0 0.0
    %3716 = vmatprep.subr.mxu0 0.0
    %3717 = vmatpush2.msra.mxu0 0.0
    %3718 = vmatprep.subr.mxu0 0.0
    %3719 = vmatpush2.msra.mxu0 0.0
    %3720 = vmatprep.mubr.f32.mxu0 0.0
    %v3721 = vand.u32 %v3555, 4294901760
    %3722 = vmatmul.mubr.f32.gmra.mxu0 %v3721
    %v3723 = vpop.f32.mrf.mxu0
    %v3724 = vadd.f32 %v3633, %v3723
    %v3725 = vpop.f32.mrf.mxu0
    %3726 = vdwg.mxu0
    %3727 = vmatprep.subr.mxu0 0.0
    %3728 = vmatpush1.msra.mxu0 0.0
    %3729 = vmatprep.subr.mxu0 0.0
    %3730 = vmatpush1.msra.mxu0 0.0
    %3731 = vmatprep.subr.mxu0 0.0
    %3732 = vmatpush1.msra.mxu0 0.0
    %3733 = vmatprep.subr.mxu0 0.0
    %3734 = vmatpush1.msra.mxu0 0.0
    %3735 = vmatprep.subr.mxu0 0.0
    %3736 = vmatpush1.msra.mxu0 0.0
    %3737 = vmatprep.subr.mxu0 0.0
    %3738 = vmatpush1.msra.mxu0 0.0
    %3739 = vmatprep.subr.mxu0 0.0
    %3740 = vmatpush1.msra.mxu0 0.0
    %3741 = vmatprep.subr.mxu0 0.0
    %3742 = vmatpush1.msra.mxu0 0.0
    %3743 = vmatprep.subr.mxu0 0.0
    %3744 = vmatpush1.msra.mxu0 0.0
    %3745 = vmatprep.subr.mxu0 0.0
    %3746 = vmatpush1.msra.mxu0 0.0
    %3747 = vmatprep.subr.mxu0 0.0
    %3748 = vmatpush1.msra.mxu0 0.0
    %3749 = vmatprep.subr.mxu0 0.0
    %3750 = vmatpush1.msra.mxu0 0.0
    %3751 = vmatprep.subr.mxu0 0.0
    %v3752 = vand.u32 %v3550, 4294901760
    %v3753 = vsub.f32 %v3550, %v3752
    %3754 = vmatpush1.msra.mxu0 %v3753
    %3755 = vmatprep.subr.mxu0 0.0
    %v3756 = vand.u32 %v3548, 4294901760
    %v3757 = vsub.f32 %v3548, %v3756
    %3758 = vmatpush1.msra.mxu0 %v3757
    %3759 = vmatprep.subr.mxu0 0.0
    %v3760 = vand.u32 %v3546, 4294901760
    %v3761 = vsub.f32 %v3546, %v3760
    %3762 = vmatpush1.msra.mxu0 %v3761
    %3763 = vmatprep.subr.mxu0 0.0
    %v3764 = vand.u32 %v3544, 4294901760
    %v3765 = vsub.f32 %v3544, %v3764
    %3766 = vmatpush1.msra.mxu0 %v3765
    %3767 = vmatprep.subr.mxu0 0.0
    %3768 = vmatpush2.msra.mxu0 0.0
    %3769 = vmatprep.subr.mxu0 0.0
    %3770 = vmatpush2.msra.mxu0 0.0
    %3771 = vmatprep.subr.mxu0 0.0
    %3772 = vmatpush2.msra.mxu0 0.0
    %3773 = vmatprep.subr.mxu0 0.0
    %3774 = vmatpush2.msra.mxu0 0.0
    %3775 = vmatprep.subr.mxu0 0.0
    %3776 = vmatpush2.msra.mxu0 0.0
    %3777 = vmatprep.subr.mxu0 0.0
    %3778 = vmatpush2.msra.mxu0 0.0
    %3779 = vmatprep.subr.mxu0 0.0
    %3780 = vmatpush2.msra.mxu0 0.0
    %3781 = vmatprep.subr.mxu0 0.0
    %3782 = vmatpush2.msra.mxu0 0.0
    %3783 = vmatprep.subr.mxu0 0.0
    %3784 = vmatpush2.msra.mxu0 0.0
    %3785 = vmatprep.subr.mxu0 0.0
    %3786 = vmatpush2.msra.mxu0 0.0
    %3787 = vmatprep.subr.mxu0 0.0
    %3788 = vmatpush2.msra.mxu0 0.0
    %3789 = vmatprep.subr.mxu0 0.0
    %3790 = vmatpush2.msra.mxu0 0.0
    %3791 = vmatprep.subr.mxu0 0.0
    %3792 = vmatpush2.msra.mxu0 0.0
    %3793 = vmatprep.subr.mxu0 0.0
    %3794 = vmatpush2.msra.mxu0 0.0
    %3795 = vmatprep.subr.mxu0 0.0
    %3796 = vmatpush2.msra.mxu0 0.0
    %3797 = vmatprep.subr.mxu0 0.0
    %3798 = vmatpush2.msra.mxu0 0.0
    %3799 = vmatprep.mubr.f32.mxu0 0.0
    %v3800 = vand.u32 %v3555, 4294901760
    %v3801 = vsub.f32 %v3555, %v3800
    %3802 = vmatmul.mubr.f32.gmra.mxu0 %v3801
    %v3803 = vpop.f32.mrf.mxu0
    %v3804 = vadd.f32 %v3724, %v3803
    %v3805 = vpop.f32.mrf.mxu0
    %3806 = vdwg.mxu0
    %3807 = vmatprep.subr.mxu0 0.0
    %3808 = vmatpush1.msra.mxu0 0.0
    %3809 = vmatprep.subr.mxu0 0.0
    %3810 = vmatpush1.msra.mxu0 0.0
    %3811 = vmatprep.subr.mxu0 0.0
    %3812 = vmatpush1.msra.mxu0 0.0
    %3813 = vmatprep.subr.mxu0 0.0
    %3814 = vmatpush1.msra.mxu0 0.0
    %3815 = vmatprep.subr.mxu0 0.0
    %3816 = vmatpush1.msra.mxu0 0.0
    %3817 = vmatprep.subr.mxu0 0.0
    %3818 = vmatpush1.msra.mxu0 0.0
    %3819 = vmatprep.subr.mxu0 0.0
    %3820 = vmatpush1.msra.mxu0 0.0
    %3821 = vmatprep.subr.mxu0 0.0
    %3822 = vmatpush1.msra.mxu0 0.0
    %3823 = vmatprep.subr.mxu0 0.0
    %3824 = vmatpush1.msra.mxu0 0.0
    %3825 = vmatprep.subr.mxu0 0.0
    %3826 = vmatpush1.msra.mxu0 0.0
    %3827 = vmatprep.subr.mxu0 0.0
    %3828 = vmatpush1.msra.mxu0 0.0
    %3829 = vmatprep.subr.mxu0 0.0
    %3830 = vmatpush1.msra.mxu0 0.0
    %3831 = vmatprep.subr.mxu0 0.0
    %v3832 = vand.u32 %v3550, 4294901760
    %3833 = vmatpush1.msra.mxu0 %v3832
    %3834 = vmatprep.subr.mxu0 0.0
    %v3835 = vand.u32 %v3548, 4294901760
    %3836 = vmatpush1.msra.mxu0 %v3835
    %3837 = vmatprep.subr.mxu0 0.0
    %v3838 = vand.u32 %v3546, 4294901760
    %3839 = vmatpush1.msra.mxu0 %v3838
    %3840 = vmatprep.subr.mxu0 0.0
    %v3841 = vand.u32 %v3544, 4294901760
    %3842 = vmatpush1.msra.mxu0 %v3841
    %3843 = vmatprep.subr.mxu0 0.0
    %3844 = vmatpush2.msra.mxu0 0.0
    %3845 = vmatprep.subr.mxu0 0.0
    %3846 = vmatpush2.msra.mxu0 0.0
    %3847 = vmatprep.subr.mxu0 0.0
    %3848 = vmatpush2.msra.mxu0 0.0
    %3849 = vmatprep.subr.mxu0 0.0
    %3850 = vmatpush2.msra.mxu0 0.0
    %3851 = vmatprep.subr.mxu0 0.0
    %3852 = vmatpush2.msra.mxu0 0.0
    %3853 = vmatprep.subr.mxu0 0.0
    %3854 = vmatpush2.msra.mxu0 0.0
    %3855 = vmatprep.subr.mxu0 0.0
    %3856 = vmatpush2.msra.mxu0 0.0
    %3857 = vmatprep.subr.mxu0 0.0
    %3858 = vmatpush2.msra.mxu0 0.0
    %3859 = vmatprep.subr.mxu0 0.0
    %3860 = vmatpush2.msra.mxu0 0.0
    %3861 = vmatprep.subr.mxu0 0.0
    %3862 = vmatpush2.msra.mxu0 0.0
    %3863 = vmatprep.subr.mxu0 0.0
    %3864 = vmatpush2.msra.mxu0 0.0
    %3865 = vmatprep.subr.mxu0 0.0
    %3866 = vmatpush2.msra.mxu0 0.0
    %3867 = vmatprep.subr.mxu0 0.0
    %3868 = vmatpush2.msra.mxu0 0.0
    %3869 = vmatprep.subr.mxu0 0.0
    %3870 = vmatpush2.msra.mxu0 0.0
    %3871 = vmatprep.subr.mxu0 0.0
    %3872 = vmatpush2.msra.mxu0 0.0
    %3873 = vmatprep.subr.mxu0 0.0
    %3874 = vmatpush2.msra.mxu0 0.0
    %3875 = vmatprep.mubr.f32.mxu0 0.0
    %v3876 = vand.u32 %v3555, 4294901760
    %v3877 = vsub.f32 %v3555, %v3876
    %v3878 = vand.u32 %v3877, 4294901760
    %3879 = vmatmul.mubr.f32.gmra.mxu0 %v3878
    %v3880 = vpop.f32.mrf.mxu0
    %v3881 = vadd.f32 %v3804, %v3880
    %v3882 = vpop.f32.mrf.mxu0
    %3883 = vdwg.mxu0
    %3884 = vmatprep.subr.mxu0 0.0
    %3885 = vmatpush1.msra.mxu0 0.0
    %3886 = vmatprep.subr.mxu0 0.0
    %3887 = vmatpush1.msra.mxu0 0.0
    %3888 = vmatprep.subr.mxu0 0.0
    %3889 = vmatpush1.msra.mxu0 0.0
    %3890 = vmatprep.subr.mxu0 0.0
    %3891 = vmatpush1.msra.mxu0 0.0
    %3892 = vmatprep.subr.mxu0 0.0
    %3893 = vmatpush1.msra.mxu0 0.0
    %3894 = vmatprep.subr.mxu0 0.0
    %3895 = vmatpush1.msra.mxu0 0.0
    %3896 = vmatprep.subr.mxu0 0.0
    %3897 = vmatpush1.msra.mxu0 0.0
    %3898 = vmatprep.subr.mxu0 0.0
    %3899 = vmatpush1.msra.mxu0 0.0
    %3900 = vmatprep.subr.mxu0 0.0
    %3901 = vmatpush1.msra.mxu0 0.0
    %3902 = vmatprep.subr.mxu0 0.0
    %3903 = vmatpush1.msra.mxu0 0.0
    %3904 = vmatprep.subr.mxu0 0.0
    %3905 = vmatpush1.msra.mxu0 0.0
    %3906 = vmatprep.subr.mxu0 0.0
    %3907 = vmatpush1.msra.mxu0 0.0
    %3908 = vmatprep.subr.mxu0 0.0
    %v3909 = vand.u32 %v3550, 4294901760
    %v3910 = vsub.f32 %v3550, %v3909
    %v3911 = vand.u32 %v3910, 4294901760
    %3912 = vmatpush1.msra.mxu0 %v3911
    %3913 = vmatprep.subr.mxu0 0.0
    %v3914 = vand.u32 %v3548, 4294901760
    %v3915 = vsub.f32 %v3548, %v3914
    %v3916 = vand.u32 %v3915, 4294901760
    %3917 = vmatpush1.msra.mxu0 %v3916
    %3918 = vmatprep.subr.mxu0 0.0
    %v3919 = vand.u32 %v3546, 4294901760
    %v3920 = vsub.f32 %v3546, %v3919
    %v3921 = vand.u32 %v3920, 4294901760
    %3922 = vmatpush1.msra.mxu0 %v3921
    %3923 = vmatprep.subr.mxu0 0.0
    %v3924 = vand.u32 %v3544, 4294901760
    %v3925 = vsub.f32 %v3544, %v3924
    %v3926 = vand.u32 %v3925, 4294901760
    %3927 = vmatpush1.msra.mxu0 %v3926
    %3928 = vmatprep.subr.mxu0 0.0
    %3929 = vmatpush2.msra.mxu0 0.0
    %3930 = vmatprep.subr.mxu0 0.0
    %3931 = vmatpush2.msra.mxu0 0.0
    %3932 = vmatprep.subr.mxu0 0.0
    %3933 = vmatpush2.msra.mxu0 0.0
    %3934 = vmatprep.subr.mxu0 0.0
    %3935 = vmatpush2.msra.mxu0 0.0
    %3936 = vmatprep.subr.mxu0 0.0
    %3937 = vmatpush2.msra.mxu0 0.0
    %3938 = vmatprep.subr.mxu0 0.0
    %3939 = vmatpush2.msra.mxu0 0.0
    %3940 = vmatprep.subr.mxu0 0.0
    %3941 = vmatpush2.msra.mxu0 0.0
    %3942 = vmatprep.subr.mxu0 0.0
    %3943 = vmatpush2.msra.mxu0 0.0
    %3944 = vmatprep.subr.mxu0 0.0
    %3945 = vmatpush2.msra.mxu0 0.0
    %3946 = vmatprep.subr.mxu0 0.0
    %3947 = vmatpush2.msra.mxu0 0.0
    %3948 = vmatprep.subr.mxu0 0.0
    %3949 = vmatpush2.msra.mxu0 0.0
    %3950 = vmatprep.subr.mxu0 0.0
    %3951 = vmatpush2.msra.mxu0 0.0
    %3952 = vmatprep.subr.mxu0 0.0
    %3953 = vmatpush2.msra.mxu0 0.0
    %3954 = vmatprep.subr.mxu0 0.0
    %3955 = vmatpush2.msra.mxu0 0.0
    %3956 = vmatprep.subr.mxu0 0.0
    %3957 = vmatpush2.msra.mxu0 0.0
    %3958 = vmatprep.subr.mxu0 0.0
    %3959 = vmatpush2.msra.mxu0 0.0
    %3960 = vmatprep.mubr.f32.mxu0 0.0
    %v3961 = vand.u32 %v3555, 4294901760
    %3962 = vmatmul.mubr.f32.gmra.mxu0 %v3961
    %v3963 = vpop.f32.mrf.mxu0
    %v3964 = vadd.f32 %v3881, %v3963
    %v3965 = vpop.f32.mrf.mxu0
    %3966 = vdwg.mxu0
    %3967 = vmatprep.subr.mxu0 0.0
    %3968 = vmatpush1.msra.mxu0 0.0
    %3969 = vmatprep.subr.mxu0 0.0
    %3970 = vmatpush1.msra.mxu0 0.0
    %3971 = vmatprep.subr.mxu0 0.0
    %3972 = vmatpush1.msra.mxu0 0.0
    %3973 = vmatprep.subr.mxu0 0.0
    %3974 = vmatpush1.msra.mxu0 0.0
    %3975 = vmatprep.subr.mxu0 0.0
    %3976 = vmatpush1.msra.mxu0 0.0
    %3977 = vmatprep.subr.mxu0 0.0
    %3978 = vmatpush1.msra.mxu0 0.0
    %3979 = vmatprep.subr.mxu0 0.0
    %3980 = vmatpush1.msra.mxu0 0.0
    %3981 = vmatprep.subr.mxu0 0.0
    %3982 = vmatpush1.msra.mxu0 0.0
    %3983 = vmatprep.subr.mxu0 0.0
    %3984 = vmatpush1.msra.mxu0 0.0
    %3985 = vmatprep.subr.mxu0 0.0
    %3986 = vmatpush1.msra.mxu0 0.0
    %3987 = vmatprep.subr.mxu0 0.0
    %3988 = vmatpush1.msra.mxu0 0.0
    %3989 = vmatprep.subr.mxu0 0.0
    %3990 = vmatpush1.msra.mxu0 0.0
    %3991 = vmatprep.subr.mxu0 0.0
    %v3992 = vand.u32 %v3550, 4294901760
    %3993 = vmatpush1.msra.mxu0 %v3992
    %3994 = vmatprep.subr.mxu0 0.0
    %v3995 = vand.u32 %v3548, 4294901760
    %3996 = vmatpush1.msra.mxu0 %v3995
    %3997 = vmatprep.subr.mxu0 0.0
    %v3998 = vand.u32 %v3546, 4294901760
    %3999 = vmatpush1.msra.mxu0 %v3998
    %4000 = vmatprep.subr.mxu0 0.0
    %v4001 = vand.u32 %v3544, 4294901760
    %4002 = vmatpush1.msra.mxu0 %v4001
    %4003 = vmatprep.subr.mxu0 0.0
    %4004 = vmatpush2.msra.mxu0 0.0
    %4005 = vmatprep.subr.mxu0 0.0
    %4006 = vmatpush2.msra.mxu0 0.0
    %4007 = vmatprep.subr.mxu0 0.0
    %4008 = vmatpush2.msra.mxu0 0.0
    %4009 = vmatprep.subr.mxu0 0.0
    %4010 = vmatpush2.msra.mxu0 0.0
    %4011 = vmatprep.subr.mxu0 0.0
    %4012 = vmatpush2.msra.mxu0 0.0
    %4013 = vmatprep.subr.mxu0 0.0
    %4014 = vmatpush2.msra.mxu0 0.0
    %4015 = vmatprep.subr.mxu0 0.0
    %4016 = vmatpush2.msra.mxu0 0.0
    %4017 = vmatprep.subr.mxu0 0.0
    %4018 = vmatpush2.msra.mxu0 0.0
    %4019 = vmatprep.subr.mxu0 0.0
    %4020 = vmatpush2.msra.mxu0 0.0
    %4021 = vmatprep.subr.mxu0 0.0
    %4022 = vmatpush2.msra.mxu0 0.0
    %4023 = vmatprep.subr.mxu0 0.0
    %4024 = vmatpush2.msra.mxu0 0.0
    %4025 = vmatprep.subr.mxu0 0.0
    %4026 = vmatpush2.msra.mxu0 0.0
    %4027 = vmatprep.subr.mxu0 0.0
    %4028 = vmatpush2.msra.mxu0 0.0
    %4029 = vmatprep.subr.mxu0 0.0
    %4030 = vmatpush2.msra.mxu0 0.0
    %4031 = vmatprep.subr.mxu0 0.0
    %4032 = vmatpush2.msra.mxu0 0.0
    %4033 = vmatprep.subr.mxu0 0.0
    %4034 = vmatpush2.msra.mxu0 0.0
    %4035 = vmatprep.mubr.f32.mxu0 0.0
    %v4036 = vand.u32 %v3555, 4294901760
    %4037 = vmatmul.mubr.f32.gmra.mxu0 %v4036
    %v4038 = vpop.f32.mrf.mxu0
    %v4039 = vadd.f32 %v3964, %v4038
    %v4040 = vpop.f32.mrf.mxu0
    %4041 = vdwg.mxu0
    %v4042 = vlog2.pop %v4039
    %v4043 = vmul.f32 %v4042, 0.6931472
    %v4044 = vadd.f32 %v3536, %v4043
    %4046 = vrot.lane.b32.xlu0 %v3532, 32
    %v4047 = vpop.permute.xlu0 %4046
    %v4049 = vmul.f32 %v3065, %v4047
    %4051 = vrot.lane.b32.xlu0 %v4049, 96
    %v4052 = vpop.permute.xlu0 %4051
    %v4053 = vsel %vm51, %v4052, 0
    %4055 = vmatprep.subr.mxu0 0.0
    %4056 = vmatpush1.msra.mxu0 0.0
    %4057 = vmatprep.subr.mxu0 0.0
    %4058 = vmatpush1.msra.mxu0 0.0
    %4059 = vmatprep.subr.mxu0 0.0
    %4060 = vmatpush1.msra.mxu0 0.0
    %4061 = vmatprep.subr.mxu0 0.0
    %4062 = vmatpush1.msra.mxu0 0.0
    %4063 = vmatprep.subr.mxu0 0.0
    %4064 = vmatpush1.msra.mxu0 0.0
    %4065 = vmatprep.subr.mxu0 0.0
    %4066 = vmatpush1.msra.mxu0 0.0
    %4067 = vmatprep.subr.mxu0 0.0
    %4068 = vmatpush1.msra.mxu0 0.0
    %4069 = vmatprep.subr.mxu0 0.0
    %4070 = vmatpush1.msra.mxu0 0.0
    %4071 = vmatprep.subr.mxu0 0.0
    %4072 = vmatpush1.msra.mxu0 0.0
    %4073 = vmatprep.subr.mxu0 0.0
    %4074 = vmatpush1.msra.mxu0 0.0
    %4075 = vmatprep.subr.mxu0 0.0
    %4076 = vmatpush1.msra.mxu0 0.0
    %4077 = vmatprep.subr.mxu0 0.0
    %4078 = vmatpush1.msra.mxu0 0.0
    %4079 = vmatprep.subr.mxu0 0.0
    %v4080 = vand.u32 %v3550, 4294901760
    %4081 = vmatpush1.msra.mxu0 %v4080
    %4082 = vmatprep.subr.mxu0 0.0
    %v4083 = vand.u32 %v3548, 4294901760
    %4084 = vmatpush1.msra.mxu0 %v4083
    %4085 = vmatprep.subr.mxu0 0.0
    %v4086 = vand.u32 %v3546, 4294901760
    %4087 = vmatpush1.msra.mxu0 %v4086
    %4088 = vmatprep.subr.mxu0 0.0
    %v4089 = vand.u32 %v3544, 4294901760
    %4090 = vmatpush1.msra.mxu0 %v4089
    %4091 = vmatprep.subr.mxu0 0.0
    %4092 = vmatpush2.msra.mxu0 0.0
    %4093 = vmatprep.subr.mxu0 0.0
    %4094 = vmatpush2.msra.mxu0 0.0
    %4095 = vmatprep.subr.mxu0 0.0
    %4096 = vmatpush2.msra.mxu0 0.0
    %4097 = vmatprep.subr.mxu0 0.0
    %4098 = vmatpush2.msra.mxu0 0.0
    %4099 = vmatprep.subr.mxu0 0.0
    %4100 = vmatpush2.msra.mxu0 0.0
    %4101 = vmatprep.subr.mxu0 0.0
    %4102 = vmatpush2.msra.mxu0 0.0
    %4103 = vmatprep.subr.mxu0 0.0
    %4104 = vmatpush2.msra.mxu0 0.0
    %4105 = vmatprep.subr.mxu0 0.0
    %4106 = vmatpush2.msra.mxu0 0.0
    %4107 = vmatprep.subr.mxu0 0.0
    %4108 = vmatpush2.msra.mxu0 0.0
    %4109 = vmatprep.subr.mxu0 0.0
    %4110 = vmatpush2.msra.mxu0 0.0
    %4111 = vmatprep.subr.mxu0 0.0
    %4112 = vmatpush2.msra.mxu0 0.0
    %4113 = vmatprep.subr.mxu0 0.0
    %4114 = vmatpush2.msra.mxu0 0.0
    %4115 = vmatprep.subr.mxu0 0.0
    %4116 = vmatpush2.msra.mxu0 0.0
    %4117 = vmatprep.subr.mxu0 0.0
    %4118 = vmatpush2.msra.mxu0 0.0
    %4119 = vmatprep.subr.mxu0 0.0
    %4120 = vmatpush2.msra.mxu0 0.0
    %4121 = vmatprep.subr.mxu0 0.0
    %4122 = vmatpush2.msra.mxu0 0.0
    %4123 = vmatprep.mubr.f32.mxu0 0.0
    %v4124 = vand.u32 %v4053, 4294901760
    %v4125 = vsub.f32 %v4053, %v4124
    %v4126 = vand.u32 %v4125, 4294901760
    %v4127 = vsub.f32 %v4125, %v4126
    %v4128 = vand.u32 %v4127, 4294901760
    %4129 = vmatmul.mubr.f32.gmra.mxu0 %v4128
    %v4130 = vpop.f32.mrf.mxu0
    %v4131 = vadd.f32 0.0, %v4130
    %v4132 = vpop.f32.mrf.mxu0
    %4133 = vdwg.mxu0
    %4134 = vmatprep.subr.mxu0 0.0
    %4135 = vmatpush1.msra.mxu0 0.0
    %4136 = vmatprep.subr.mxu0 0.0
    %4137 = vmatpush1.msra.mxu0 0.0
    %4138 = vmatprep.subr.mxu0 0.0
    %4139 = vmatpush1.msra.mxu0 0.0
    %4140 = vmatprep.subr.mxu0 0.0
    %4141 = vmatpush1.msra.mxu0 0.0
    %4142 = vmatprep.subr.mxu0 0.0
    %4143 = vmatpush1.msra.mxu0 0.0
    %4144 = vmatprep.subr.mxu0 0.0
    %4145 = vmatpush1.msra.mxu0 0.0
    %4146 = vmatprep.subr.mxu0 0.0
    %4147 = vmatpush1.msra.mxu0 0.0
    %4148 = vmatprep.subr.mxu0 0.0
    %4149 = vmatpush1.msra.mxu0 0.0
    %4150 = vmatprep.subr.mxu0 0.0
    %4151 = vmatpush1.msra.mxu0 0.0
    %4152 = vmatprep.subr.mxu0 0.0
    %4153 = vmatpush1.msra.mxu0 0.0
    %4154 = vmatprep.subr.mxu0 0.0
    %4155 = vmatpush1.msra.mxu0 0.0
    %4156 = vmatprep.subr.mxu0 0.0
    %4157 = vmatpush1.msra.mxu0 0.0
    %4158 = vmatprep.subr.mxu0 0.0
    %v4159 = vand.u32 %v3550, 4294901760
    %v4160 = vsub.f32 %v3550, %v4159
    %v4161 = vand.u32 %v4160, 4294901760
    %v4162 = vsub.f32 %v4160, %v4161
    %v4163 = vand.u32 %v4162, 4294901760
    %4164 = vmatpush1.msra.mxu0 %v4163
    %4165 = vmatprep.subr.mxu0 0.0
    %v4166 = vand.u32 %v3548, 4294901760
    %v4167 = vsub.f32 %v3548, %v4166
    %v4168 = vand.u32 %v4167, 4294901760
    %v4169 = vsub.f32 %v4167, %v4168
    %v4170 = vand.u32 %v4169, 4294901760
    %4171 = vmatpush1.msra.mxu0 %v4170
    %4172 = vmatprep.subr.mxu0 0.0
    %v4173 = vand.u32 %v3546, 4294901760
    %v4174 = vsub.f32 %v3546, %v4173
    %v4175 = vand.u32 %v4174, 4294901760
    %v4176 = vsub.f32 %v4174, %v4175
    %v4177 = vand.u32 %v4176, 4294901760
    %4178 = vmatpush1.msra.mxu0 %v4177
    %4179 = vmatprep.subr.mxu0 0.0
    %v4180 = vand.u32 %v3544, 4294901760
    %v4181 = vsub.f32 %v3544, %v4180
    %v4182 = vand.u32 %v4181, 4294901760
    %v4183 = vsub.f32 %v4181, %v4182
    %v4184 = vand.u32 %v4183, 4294901760
    %4185 = vmatpush1.msra.mxu0 %v4184
    %4186 = vmatprep.subr.mxu0 0.0
    %4187 = vmatpush2.msra.mxu0 0.0
    %4188 = vmatprep.subr.mxu0 0.0
    %4189 = vmatpush2.msra.mxu0 0.0
    %4190 = vmatprep.subr.mxu0 0.0
    %4191 = vmatpush2.msra.mxu0 0.0
    %4192 = vmatprep.subr.mxu0 0.0
    %4193 = vmatpush2.msra.mxu0 0.0
    %4194 = vmatprep.subr.mxu0 0.0
    %4195 = vmatpush2.msra.mxu0 0.0
    %4196 = vmatprep.subr.mxu0 0.0
    %4197 = vmatpush2.msra.mxu0 0.0
    %4198 = vmatprep.subr.mxu0 0.0
    %4199 = vmatpush2.msra.mxu0 0.0
    %4200 = vmatprep.subr.mxu0 0.0
    %4201 = vmatpush2.msra.mxu0 0.0
    %4202 = vmatprep.subr.mxu0 0.0
    %4203 = vmatpush2.msra.mxu0 0.0
    %4204 = vmatprep.subr.mxu0 0.0
    %4205 = vmatpush2.msra.mxu0 0.0
    %4206 = vmatprep.subr.mxu0 0.0
    %4207 = vmatpush2.msra.mxu0 0.0
    %4208 = vmatprep.subr.mxu0 0.0
    %4209 = vmatpush2.msra.mxu0 0.0
    %4210 = vmatprep.subr.mxu0 0.0
    %4211 = vmatpush2.msra.mxu0 0.0
    %4212 = vmatprep.subr.mxu0 0.0
    %4213 = vmatpush2.msra.mxu0 0.0
    %4214 = vmatprep.subr.mxu0 0.0
    %4215 = vmatpush2.msra.mxu0 0.0
    %4216 = vmatprep.subr.mxu0 0.0
    %4217 = vmatpush2.msra.mxu0 0.0
    %4218 = vmatprep.mubr.f32.mxu0 0.0
    %v4219 = vand.u32 %v4053, 4294901760
    %4220 = vmatmul.mubr.f32.gmra.mxu0 %v4219
    %v4221 = vpop.f32.mrf.mxu0
    %v4222 = vadd.f32 %v4131, %v4221
    %v4223 = vpop.f32.mrf.mxu0
    %4224 = vdwg.mxu0
    %4225 = vmatprep.subr.mxu0 0.0
    %4226 = vmatpush1.msra.mxu0 0.0
    %4227 = vmatprep.subr.mxu0 0.0
    %4228 = vmatpush1.msra.mxu0 0.0
    %4229 = vmatprep.subr.mxu0 0.0
    %4230 = vmatpush1.msra.mxu0 0.0
    %4231 = vmatprep.subr.mxu0 0.0
    %4232 = vmatpush1.msra.mxu0 0.0
    %4233 = vmatprep.subr.mxu0 0.0
    %4234 = vmatpush1.msra.mxu0 0.0
    %4235 = vmatprep.subr.mxu0 0.0
    %4236 = vmatpush1.msra.mxu0 0.0
    %4237 = vmatprep.subr.mxu0 0.0
    %4238 = vmatpush1.msra.mxu0 0.0
    %4239 = vmatprep.subr.mxu0 0.0
    %4240 = vmatpush1.msra.mxu0 0.0
    %4241 = vmatprep.subr.mxu0 0.0
    %4242 = vmatpush1.msra.mxu0 0.0
    %4243 = vmatprep.subr.mxu0 0.0
    %4244 = vmatpush1.msra.mxu0 0.0
    %4245 = vmatprep.subr.mxu0 0.0
    %4246 = vmatpush1.msra.mxu0 0.0
    %4247 = vmatprep.subr.mxu0 0.0
    %4248 = vmatpush1.msra.mxu0 0.0
    %4249 = vmatprep.subr.mxu0 0.0
    %v4250 = vand.u32 %v3550, 4294901760
    %v4251 = vsub.f32 %v3550, %v4250
    %4252 = vmatpush1.msra.mxu0 %v4251
    %4253 = vmatprep.subr.mxu0 0.0
    %v4254 = vand.u32 %v3548, 4294901760
    %v4255 = vsub.f32 %v3548, %v4254
    %4256 = vmatpush1.msra.mxu0 %v4255
    %4257 = vmatprep.subr.mxu0 0.0
    %v4258 = vand.u32 %v3546, 4294901760
    %v4259 = vsub.f32 %v3546, %v4258
    %4260 = vmatpush1.msra.mxu0 %v4259
    %4261 = vmatprep.subr.mxu0 0.0
    %v4262 = vand.u32 %v3544, 4294901760
    %v4263 = vsub.f32 %v3544, %v4262
    %4264 = vmatpush1.msra.mxu0 %v4263
    %4265 = vmatprep.subr.mxu0 0.0
    %4266 = vmatpush2.msra.mxu0 0.0
    %4267 = vmatprep.subr.mxu0 0.0
    %4268 = vmatpush2.msra.mxu0 0.0
    %4269 = vmatprep.subr.mxu0 0.0
    %4270 = vmatpush2.msra.mxu0 0.0
    %4271 = vmatprep.subr.mxu0 0.0
    %4272 = vmatpush2.msra.mxu0 0.0
    %4273 = vmatprep.subr.mxu0 0.0
    %4274 = vmatpush2.msra.mxu0 0.0
    %4275 = vmatprep.subr.mxu0 0.0
    %4276 = vmatpush2.msra.mxu0 0.0
    %4277 = vmatprep.subr.mxu0 0.0
    %4278 = vmatpush2.msra.mxu0 0.0
    %4279 = vmatprep.subr.mxu0 0.0
    %4280 = vmatpush2.msra.mxu0 0.0
    %4281 = vmatprep.subr.mxu0 0.0
    %4282 = vmatpush2.msra.mxu0 0.0
    %4283 = vmatprep.subr.mxu0 0.0
    %4284 = vmatpush2.msra.mxu0 0.0
    %4285 = vmatprep.subr.mxu0 0.0
    %4286 = vmatpush2.msra.mxu0 0.0
    %4287 = vmatprep.subr.mxu0 0.0
    %4288 = vmatpush2.msra.mxu0 0.0
    %4289 = vmatprep.subr.mxu0 0.0
    %4290 = vmatpush2.msra.mxu0 0.0
    %4291 = vmatprep.subr.mxu0 0.0
    %4292 = vmatpush2.msra.mxu0 0.0
    %4293 = vmatprep.subr.mxu0 0.0
    %4294 = vmatpush2.msra.mxu0 0.0
    %4295 = vmatprep.subr.mxu0 0.0
    %4296 = vmatpush2.msra.mxu0 0.0
    %4297 = vmatprep.mubr.f32.mxu0 0.0
    %v4298 = vand.u32 %v4053, 4294901760
    %v4299 = vsub.f32 %v4053, %v4298
    %4300 = vmatmul.mubr.f32.gmra.mxu0 %v4299
    %v4301 = vpop.f32.mrf.mxu0
    %v4302 = vadd.f32 %v4222, %v4301
    %v4303 = vpop.f32.mrf.mxu0
    %4304 = vdwg.mxu0
    %4305 = vmatprep.subr.mxu0 0.0
    %4306 = vmatpush1.msra.mxu0 0.0
    %4307 = vmatprep.subr.mxu0 0.0
    %4308 = vmatpush1.msra.mxu0 0.0
    %4309 = vmatprep.subr.mxu0 0.0
    %4310 = vmatpush1.msra.mxu0 0.0
    %4311 = vmatprep.subr.mxu0 0.0
    %4312 = vmatpush1.msra.mxu0 0.0
    %4313 = vmatprep.subr.mxu0 0.0
    %4314 = vmatpush1.msra.mxu0 0.0
    %4315 = vmatprep.subr.mxu0 0.0
    %4316 = vmatpush1.msra.mxu0 0.0
    %4317 = vmatprep.subr.mxu0 0.0
    %4318 = vmatpush1.msra.mxu0 0.0
    %4319 = vmatprep.subr.mxu0 0.0
    %4320 = vmatpush1.msra.mxu0 0.0
    %4321 = vmatprep.subr.mxu0 0.0
    %4322 = vmatpush1.msra.mxu0 0.0
    %4323 = vmatprep.subr.mxu0 0.0
    %4324 = vmatpush1.msra.mxu0 0.0
    %4325 = vmatprep.subr.mxu0 0.0
    %4326 = vmatpush1.msra.mxu0 0.0
    %4327 = vmatprep.subr.mxu0 0.0
    %4328 = vmatpush1.msra.mxu0 0.0
    %4329 = vmatprep.subr.mxu0 0.0
    %v4330 = vand.u32 %v3550, 4294901760
    %4331 = vmatpush1.msra.mxu0 %v4330
    %4332 = vmatprep.subr.mxu0 0.0
    %v4333 = vand.u32 %v3548, 4294901760
    %4334 = vmatpush1.msra.mxu0 %v4333
    %4335 = vmatprep.subr.mxu0 0.0
    %v4336 = vand.u32 %v3546, 4294901760
    %4337 = vmatpush1.msra.mxu0 %v4336
    %4338 = vmatprep.subr.mxu0 0.0
    %v4339 = vand.u32 %v3544, 4294901760
    %4340 = vmatpush1.msra.mxu0 %v4339
    %4341 = vmatprep.subr.mxu0 0.0
    %4342 = vmatpush2.msra.mxu0 0.0
    %4343 = vmatprep.subr.mxu0 0.0
    %4344 = vmatpush2.msra.mxu0 0.0
    %4345 = vmatprep.subr.mxu0 0.0
    %4346 = vmatpush2.msra.mxu0 0.0
    %4347 = vmatprep.subr.mxu0 0.0
    %4348 = vmatpush2.msra.mxu0 0.0
    %4349 = vmatprep.subr.mxu0 0.0
    %4350 = vmatpush2.msra.mxu0 0.0
    %4351 = vmatprep.subr.mxu0 0.0
    %4352 = vmatpush2.msra.mxu0 0.0
    %4353 = vmatprep.subr.mxu0 0.0
    %4354 = vmatpush2.msra.mxu0 0.0
    %4355 = vmatprep.subr.mxu0 0.0
    %4356 = vmatpush2.msra.mxu0 0.0
    %4357 = vmatprep.subr.mxu0 0.0
    %4358 = vmatpush2.msra.mxu0 0.0
    %4359 = vmatprep.subr.mxu0 0.0
    %4360 = vmatpush2.msra.mxu0 0.0
    %4361 = vmatprep.subr.mxu0 0.0
    %4362 = vmatpush2.msra.mxu0 0.0
    %4363 = vmatprep.subr.mxu0 0.0
    %4364 = vmatpush2.msra.mxu0 0.0
    %4365 = vmatprep.subr.mxu0 0.0
    %4366 = vmatpush2.msra.mxu0 0.0
    %4367 = vmatprep.subr.mxu0 0.0
    %4368 = vmatpush2.msra.mxu0 0.0
    %4369 = vmatprep.subr.mxu0 0.0
    %4370 = vmatpush2.msra.mxu0 0.0
    %4371 = vmatprep.subr.mxu0 0.0
    %4372 = vmatpush2.msra.mxu0 0.0
    %4373 = vmatprep.mubr.f32.mxu0 0.0
    %v4374 = vand.u32 %v4053, 4294901760
    %v4375 = vsub.f32 %v4053, %v4374
    %v4376 = vand.u32 %v4375, 4294901760
    %4377 = vmatmul.mubr.f32.gmra.mxu0 %v4376
    %v4378 = vpop.f32.mrf.mxu0
    %v4379 = vadd.f32 %v4302, %v4378
    %v4380 = vpop.f32.mrf.mxu0
    %4381 = vdwg.mxu0
    %4382 = vmatprep.subr.mxu0 0.0
    %4383 = vmatpush1.msra.mxu0 0.0
    %4384 = vmatprep.subr.mxu0 0.0
    %4385 = vmatpush1.msra.mxu0 0.0
    %4386 = vmatprep.subr.mxu0 0.0
    %4387 = vmatpush1.msra.mxu0 0.0
    %4388 = vmatprep.subr.mxu0 0.0
    %4389 = vmatpush1.msra.mxu0 0.0
    %4390 = vmatprep.subr.mxu0 0.0
    %4391 = vmatpush1.msra.mxu0 0.0
    %4392 = vmatprep.subr.mxu0 0.0
    %4393 = vmatpush1.msra.mxu0 0.0
    %4394 = vmatprep.subr.mxu0 0.0
    %4395 = vmatpush1.msra.mxu0 0.0
    %4396 = vmatprep.subr.mxu0 0.0
    %4397 = vmatpush1.msra.mxu0 0.0
    %4398 = vmatprep.subr.mxu0 0.0
    %4399 = vmatpush1.msra.mxu0 0.0
    %4400 = vmatprep.subr.mxu0 0.0
    %4401 = vmatpush1.msra.mxu0 0.0
    %4402 = vmatprep.subr.mxu0 0.0
    %4403 = vmatpush1.msra.mxu0 0.0
    %4404 = vmatprep.subr.mxu0 0.0
    %4405 = vmatpush1.msra.mxu0 0.0
    %4406 = vmatprep.subr.mxu0 0.0
    %v4407 = vand.u32 %v3550, 4294901760
    %v4408 = vsub.f32 %v3550, %v4407
    %v4409 = vand.u32 %v4408, 4294901760
    %4410 = vmatpush1.msra.mxu0 %v4409
    %4411 = vmatprep.subr.mxu0 0.0
    %v4412 = vand.u32 %v3548, 4294901760
    %v4413 = vsub.f32 %v3548, %v4412
    %v4414 = vand.u32 %v4413, 4294901760
    %4415 = vmatpush1.msra.mxu0 %v4414
    %4416 = vmatprep.subr.mxu0 0.0
    %v4417 = vand.u32 %v3546, 4294901760
    %v4418 = vsub.f32 %v3546, %v4417
    %v4419 = vand.u32 %v4418, 4294901760
    %4420 = vmatpush1.msra.mxu0 %v4419
    %4421 = vmatprep.subr.mxu0 0.0
    %v4422 = vand.u32 %v3544, 4294901760
    %v4423 = vsub.f32 %v3544, %v4422
    %v4424 = vand.u32 %v4423, 4294901760
    %4425 = vmatpush1.msra.mxu0 %v4424
    %4426 = vmatprep.subr.mxu0 0.0
    %4427 = vmatpush2.msra.mxu0 0.0
    %4428 = vmatprep.subr.mxu0 0.0
    %4429 = vmatpush2.msra.mxu0 0.0
    %4430 = vmatprep.subr.mxu0 0.0
    %4431 = vmatpush2.msra.mxu0 0.0
    %4432 = vmatprep.subr.mxu0 0.0
    %4433 = vmatpush2.msra.mxu0 0.0
    %4434 = vmatprep.subr.mxu0 0.0
    %4435 = vmatpush2.msra.mxu0 0.0
    %4436 = vmatprep.subr.mxu0 0.0
    %4437 = vmatpush2.msra.mxu0 0.0
    %4438 = vmatprep.subr.mxu0 0.0
    %4439 = vmatpush2.msra.mxu0 0.0
    %4440 = vmatprep.subr.mxu0 0.0
    %4441 = vmatpush2.msra.mxu0 0.0
    %4442 = vmatprep.subr.mxu0 0.0
    %4443 = vmatpush2.msra.mxu0 0.0
    %4444 = vmatprep.subr.mxu0 0.0
    %4445 = vmatpush2.msra.mxu0 0.0
    %4446 = vmatprep.subr.mxu0 0.0
    %4447 = vmatpush2.msra.mxu0 0.0
    %4448 = vmatprep.subr.mxu0 0.0
    %4449 = vmatpush2.msra.mxu0 0.0
    %4450 = vmatprep.subr.mxu0 0.0
    %4451 = vmatpush2.msra.mxu0 0.0
    %4452 = vmatprep.subr.mxu0 0.0
    %4453 = vmatpush2.msra.mxu0 0.0
    %4454 = vmatprep.subr.mxu0 0.0
    %4455 = vmatpush2.msra.mxu0 0.0
    %4456 = vmatprep.subr.mxu0 0.0
    %4457 = vmatpush2.msra.mxu0 0.0
    %4458 = vmatprep.mubr.f32.mxu0 0.0
    %v4459 = vand.u32 %v4053, 4294901760
    %4460 = vmatmul.mubr.f32.gmra.mxu0 %v4459
    %v4461 = vpop.f32.mrf.mxu0
    %v4462 = vadd.f32 %v4379, %v4461
    %v4463 = vpop.f32.mrf.mxu0
    %4464 = vdwg.mxu0
    %4465 = vmatprep.subr.mxu0 0.0
    %4466 = vmatpush1.msra.mxu0 0.0
    %4467 = vmatprep.subr.mxu0 0.0
    %4468 = vmatpush1.msra.mxu0 0.0
    %4469 = vmatprep.subr.mxu0 0.0
    %4470 = vmatpush1.msra.mxu0 0.0
    %4471 = vmatprep.subr.mxu0 0.0
    %4472 = vmatpush1.msra.mxu0 0.0
    %4473 = vmatprep.subr.mxu0 0.0
    %4474 = vmatpush1.msra.mxu0 0.0
    %4475 = vmatprep.subr.mxu0 0.0
    %4476 = vmatpush1.msra.mxu0 0.0
    %4477 = vmatprep.subr.mxu0 0.0
    %4478 = vmatpush1.msra.mxu0 0.0
    %4479 = vmatprep.subr.mxu0 0.0
    %4480 = vmatpush1.msra.mxu0 0.0
    %4481 = vmatprep.subr.mxu0 0.0
    %4482 = vmatpush1.msra.mxu0 0.0
    %4483 = vmatprep.subr.mxu0 0.0
    %4484 = vmatpush1.msra.mxu0 0.0
    %4485 = vmatprep.subr.mxu0 0.0
    %4486 = vmatpush1.msra.mxu0 0.0
    %4487 = vmatprep.subr.mxu0 0.0
    %4488 = vmatpush1.msra.mxu0 0.0
    %4489 = vmatprep.subr.mxu0 0.0
    %v4490 = vand.u32 %v3550, 4294901760
    %4491 = vmatpush1.msra.mxu0 %v4490
    %4492 = vmatprep.subr.mxu0 0.0
    %v4493 = vand.u32 %v3548, 4294901760
    %4494 = vmatpush1.msra.mxu0 %v4493
    %4495 = vmatprep.subr.mxu0 0.0
    %v4496 = vand.u32 %v3546, 4294901760
    %4497 = vmatpush1.msra.mxu0 %v4496
    %4498 = vmatprep.subr.mxu0 0.0
    %v4499 = vand.u32 %v3544, 4294901760
    %4500 = vmatpush1.msra.mxu0 %v4499
    %4501 = vmatprep.subr.mxu0 0.0
    %4502 = vmatpush2.msra.mxu0 0.0
    %4503 = vmatprep.subr.mxu0 0.0
    %4504 = vmatpush2.msra.mxu0 0.0
    %4505 = vmatprep.subr.mxu0 0.0
    %4506 = vmatpush2.msra.mxu0 0.0
    %4507 = vmatprep.subr.mxu0 0.0
    %4508 = vmatpush2.msra.mxu0 0.0
    %4509 = vmatprep.subr.mxu0 0.0
    %4510 = vmatpush2.msra.mxu0 0.0
    %4511 = vmatprep.subr.mxu0 0.0
    %4512 = vmatpush2.msra.mxu0 0.0
    %4513 = vmatprep.subr.mxu0 0.0
    %4514 = vmatpush2.msra.mxu0 0.0
    %4515 = vmatprep.subr.mxu0 0.0
    %4516 = vmatpush2.msra.mxu0 0.0
    %4517 = vmatprep.subr.mxu0 0.0
    %4518 = vmatpush2.msra.mxu0 0.0
    %4519 = vmatprep.subr.mxu0 0.0
    %4520 = vmatpush2.msra.mxu0 0.0
    %4521 = vmatprep.subr.mxu0 0.0
    %4522 = vmatpush2.msra.mxu0 0.0
    %4523 = vmatprep.subr.mxu0 0.0
    %4524 = vmatpush2.msra.mxu0 0.0
    %4525 = vmatprep.subr.mxu0 0.0
    %4526 = vmatpush2.msra.mxu0 0.0
    %4527 = vmatprep.subr.mxu0 0.0
    %4528 = vmatpush2.msra.mxu0 0.0
    %4529 = vmatprep.subr.mxu0 0.0
    %4530 = vmatpush2.msra.mxu0 0.0
    %4531 = vmatprep.subr.mxu0 0.0
    %4532 = vmatpush2.msra.mxu0 0.0
    %4533 = vmatprep.mubr.f32.mxu0 0.0
    %v4534 = vand.u32 %v4053, 4294901760
    %4535 = vmatmul.mubr.f32.gmra.mxu0 %v4534
    %v4536 = vpop.f32.mrf.mxu0
    %v4537 = vadd.f32 %v4462, %v4536
    %v4538 = vpop.f32.mrf.mxu0
    %4539 = vdwg.mxu0
    %v4540 = vsub.f32 %v4044, %v4537
    %v4541 = vsel %vm3071, %v4540, 0.0
    %v4542 = vrot.slane %v4541, 4
    %v4543 = vadd.f32 %v4541, %v4542
    %v4544 = vrot.slane %v4543, 2
    %v4545 = vadd.f32 %v4543, %v4544
    %v4546 = vrot.slane %v4545, 1
    %v4547 = vadd.f32 %v4545, %v4546
    %v4548 = vrcp.pop 8.0
    %v4549 = vmul.f32 %v4547, %v4548
    %4551 = vrot.lane.b32.xlu0 %v4549, 64
    %v4552 = vpop.permute.xlu0 %4551
    %vm4554 = vcmask 556544
    %4555 = vst.msk [vmem:[%s2] sm:$0xff] %vm4554, %v4552
    // Predicated region
    $region14: #{_rnndst_core.1} parent=1 // pred_check
      _
    $region15: #{_rnndst_core.1} parent=1 // pred_check_branch
      %4557 = sbr.rel (0) target = $region17
    $region16: #{_rnndst_core.1} parent=1 // pred_region
      _
    $region17: #{_rnndst_core.1} parent=1 // pred_fallthru
      _
    // Predicated region
    $region18: #{_rnndst_core.1} parent=1 // pred_check
      _
    $region19: #{_rnndst_core.1} parent=1 // pred_check_branch
      %4559 = sbr.rel (0) target = $region21
    $region20: #{_rnndst_core.1} parent=1 // pred_region
      _
    $region21: #{_rnndst_core.1} parent=1 // pred_fallthru
      _
    %4560 = vsyncpa [#allocation3], 1

</llo_original>
